<compile_context>
chip_gen: v5e
topology: v5e:2x2
jax: 0.10.0
libtpu: 0.0.40
codegen_flags: <defaults>
</compile_context>

<pallas_src>
import jax
import jax.numpy as jnp
import numpy as np
from jax import lax
from jax.experimental import pallas as pl
from jax.experimental.pallas import tpu as pltpu


def _round_up(x, m):
    return ((x + m - 1) // m) * m


# --------------------------------- Pallas kernel ---------------------------------
def bilstm_kernel(emb_ref,            # (T, BB, E)   f32  time-major embedded inputs (batch block)
                  wihf_ref,           # (E, 4Hp)     bf16 forward input weights
                  wihb_ref,           # (E, 4Hp)     bf16 backward input weights
                  bf_ref,             # (1, 4Hp)     f32  b_ih + b_hh forward
                  bb_ref,             # (1, 4Hp)     f32  b_ih + b_hh backward
                  whh_ref,            # (2Hp, 8Hp) bf16 block-diag  OR  (2, Hp, 4Hp) bf16
                  w1f_ref, w1b_ref,   # (Hp, Hp)     bf16 l1 weight split into fwd / bwd halves
                  b1_ref,             # (1, Hp)      f32
                  w2_ref,             # (Hp, Op)     bf16
                  b2_ref,             # (1, Op)      f32
                  y_ref,              # (BB, T*Op)   f32  batch-major, lane-dense output
                  gxf_ref, gxb_ref,   # scratch (TC, BB, 4Hp) f32: per-chunk input-gate terms
                  hf_ref, hb_ref):    # scratch (T, BB, Hp)   f32: per-timestep hidden states
    f32, bf16 = jnp.float32, jnp.bfloat16
    T, BB, E = emb_ref.shape
    TC = gxf_ref.shape[0]
    NC = T // TC
    Hp = hf_ref.shape[2]
    G = 4 * Hp
    Op = b2_ref.shape[1]
    fused = (len(whh_ref.shape) == 2)

    wih_f = wihf_ref[...]
    wih_b = wihb_ref[...]
    b_f = bf_ref[...]
    b_b = bb_ref[...]
    whh = whh_ref[...]

    def sigmoid(z):                      # EUP tanh + VPU fma (cheaper than exp + divide)
        return 0.5 * jnp.tanh(0.5 * z) + 0.5

    def cell(gates, c):                  # PyTorch gate order (i, f, g, o); Hp lane-aligned slices
        i = sigmoid(gates[:, 0:Hp])
        f = sigmoid(gates[:, Hp:2 * Hp])
        g = jnp.tanh(gates[:, 2 * Hp:3 * Hp])
        o = sigmoid(gates[:, 3 * Hp:4 * Hp])
        c_new = f * c + i * g
        return o * jnp.tanh(c_new), c_new

    def chunk_body(ci, carry):
        """TC forward steps (ascending t) + TC backward steps (descending t), interleaved."""
        hc, cf, cb = carry               # hc: (BB, 2Hp) bf16 = [h_fwd | h_bwd]
        t0 = ci * TC                     # first forward time of this chunk
        tb0 = T - t0 - TC                # lowest backward time of this chunk
        if not isinstance(ci, int):
            t0 = pl.multiple_of(t0, TC)
            tb0 = pl.multiple_of(tb0, TC)

        # Hoisted input-to-hidden projection for this chunk: two bf16 MXU matmuls with the
        # biases folded in, written straight to per-direction scratch (no combined slab).
        fwd_x = emb_ref[pl.ds(t0, TC)].reshape(TC * BB, E).astype(bf16)
        bwd_x = emb_ref[pl.ds(tb0, TC)].reshape(TC * BB, E).astype(bf16)
        gxf_ref[...] = (jnp.dot(fwd_x, wih_f, preferred_element_type=f32)
                        + b_f).reshape(TC, BB, G)
        gxb_ref[...] = (jnp.dot(bwd_x, wih_b, preferred_element_type=f32)
                        + b_b).reshape(TC, BB, G)

        def step(j, c2):
            hc, cf, cb = c2
            t = t0 + j                   # forward time
            tb = T - 1 - t               # backward time
            if fused:                    # one full-depth (K = 2Hp) MXU push per step
                ghh = jnp.dot(hc, whh, preferred_element_type=f32)        # (BB, 8Hp)
                ghh_f = ghh[:, 0:G]
                ghh_b = ghh[:, G:2 * G]
            else:                        # Hp > 128: two half matmuls, no zero-block waste
                ghh_f = jnp.dot(hc[:, 0:Hp], whh[0], preferred_element_type=f32)
                ghh_b = jnp.dot(hc[:, Hp:2 * Hp], whh[1], preferred_element_type=f32)
            hf, cf = cell(gxf_ref[j] + ghh_f, cf)
            hb, cb = cell(gxb_ref[TC - 1 - j] + ghh_b, cb)
            hf_ref[t] = hf
            hb_ref[tb] = hb
            hc = jnp.concatenate([hf, hb], axis=1).astype(bf16)
            return (hc, cf, cb)

        return lax.fori_loop(0, TC, step, (hc, cf, cb), unroll=min(TC, 8))

    zeros = jnp.zeros((BB, Hp), f32)
    carry0 = (jnp.zeros((BB, 2 * Hp), bf16), zeros, zeros)
    if NC == 1:
        chunk_body(0, carry0)            # fully static path (also the shipped test config)
    else:
        lax.fori_loop(0, NC, chunk_body, carry0)

    # ---- MLP head on flat (T*BB, Hp) slabs: l1 (split-concat) -> ReLU -> l2, all bf16 MXU. ----
    TB = T * BB
    hf2 = hf_ref[...].reshape(TB, Hp).astype(bf16)
    hb2 = hb_ref[...].reshape(TB, Hp).astype(bf16)
    h1 = (jnp.dot(hf2, w1f_ref[...], preferred_element_type=f32)
          + jnp.dot(hb2, w1b_ref[...], preferred_element_type=f32)
          + b1_ref[...])
    h1 = jnp.maximum(h1, 0.0).astype(bf16)                                      # ReLU
    y = jnp.dot(h1, w2_ref[...], preferred_element_type=f32) + b2_ref[...]      # (TB, Op) f32

    # Batch-major, lane-dense output: T static 128-aligned column stores (wrapper only does a
    # free reshape instead of an HBM transpose pass over the padded output).
    for t in range(T):
        y_ref[:, t * Op:(t + 1) * Op] = y[t * BB:(t + 1) * BB, :].astype(y_ref.dtype)


# --------------------------------- wrapper ---------------------------------
def _pad_gate_cols(w, H, Hp):
    """(..., 4*H) -> (..., 4*Hp): zero-pad each of the 4 gate blocks separately."""
    lead = w.shape[:-1]
    w4 = jnp.reshape(w, lead + (4, H))
    w4 = jnp.pad(w4, [(0, 0)] * len(lead) + [(0, 0), (0, Hp - H)])
    return jnp.reshape(w4, lead + (4 * Hp,))


def _vmem_limit_bytes(T, TC, BB, E, Hp, Op, fused):
    """Scoped-VMEM budget from the actual buffer sizes (pipelined operands double-buffered),
    plus headroom for in-kernel temporaries / spills."""
    f32, bf16 = 4, 2
    emb = T * BB * E * f32 * 2
    out = BB * T * Op * f32 * 2
    weights = 2 * (2 * E * 4 * Hp * bf16
                   + (2 * Hp * 8 * Hp if fused else 2 * Hp * 4 * Hp) * bf16
                   + 2 * Hp * Hp * bf16 + Hp * Op * bf16
                   + (8 * Hp + Hp + Op) * f32)
    scratch = 2 * TC * BB * 4 * Hp * f32 + 2 * T * BB * Hp * f32
    temps = T * BB * (2 * Hp * bf16 + Hp * f32 + Op * f32) + TC * BB * 8 * Hp * f32
    need = emb + out + weights + scratch + temps
    return int(min(max(2 * need, 32 * 2**20), 96 * 2**20))


def bilstm_forward(x_tokens, params):
    """x_tokens: (B, T) int32 token ids. Returns (B, T, O) float32 (batch_first like PyTorch)."""
    B, T = x_tokens.shape
    E = params['emb'].shape[1]
    H = params['whh_f'].shape[0]
    O = params['b2'].shape[-1]
    f32, bf16 = jnp.float32, jnp.bfloat16

    # TPU-friendly padded sizes: hidden / output lane-dense (x128), batch sublane-aligned (x8).
    # TODO(synk): for H < 128 a masked-lane gate layout would avoid the (128/H)^2 recurrence blowup.
    Hp = _round_up(H, 128)
    Op = _round_up(O, 128)
    dH, dO = Hp - H, Op - O

    # Batch blocking: >= 2 blocks when B >= 16 so both v7x TensorCores get a grid step.
    BB = min(_round_up(B, 8), 128)
    if B >= 16 and _round_up(B, BB) // BB < 2:
        BB = _round_up((B + 1) // 2, 8)
    Bp = _round_up(B, BB)

    # Time chunk for the input-gate precompute (largest divisor of T that is <= 16).
    TC = next(c for c in range(min(T, 16), 0, -1) if T % c == 0)

    # Embedding gather straight into time-major (T, B, E); pad batch with zero rows.
    # TODO(synk): gather embedding rows inside the kernel (scalar-prefetched ids + DMA from the
    # (vocab, E) table in pl.ANY) to avoid this HBM materialization.
    emb = jnp.take(params['emb'], x_tokens.T, axis=0).astype(f32)               # (T, B, E)
    emb = jnp.pad(emb, ((0, 0), (0, Bp - B), (0, 0)))                           # (T, Bp, E)

    # Zero-pad parameters so every gate / hidden / output block lands on 128-lane boundaries;
    # cast MXU operands to bf16 (biases stay f32 -- they are added into f32 accumulators).
    # Padded hidden units provably stay exactly 0 through the recurrence and the MLP head.
    wih_f = _pad_gate_cols(params['wih_f'], H, Hp).astype(bf16)                 # (E, 4Hp)
    wih_b = _pad_gate_cols(params['wih_b'], H, Hp).astype(bf16)
    b_f = _pad_gate_cols(params['b_f'], H, Hp)                                  # (1, 4Hp) f32
    b_b = _pad_gate_cols(params['b_b'], H, Hp)
    whh_f = _pad_gate_cols(jnp.pad(params['whh_f'], ((0, dH), (0, 0))), H, Hp)  # (Hp, 4Hp)
    whh_b = _pad_gate_cols(jnp.pad(params['whh_b'], ((0, dH), (0, 0))), H, Hp)
    fused = (Hp == 128)     # block-diag fusion fills the 256-deep MXU; skip for larger Hp
    if fused:
        z = jnp.zeros((Hp, 4 * Hp), f32)
        whh = jnp.concatenate([jnp.concatenate([whh_f, z], axis=1),
                               jnp.concatenate([z, whh_b], axis=1)], axis=0).astype(bf16)
        whh_spec = pl.BlockSpec((2 * Hp, 8 * Hp), lambda bi: (0, 0))
    else:
        whh = jnp.stack([whh_f, whh_b], axis=0).astype(bf16)                    # (2, Hp, 4Hp)
        whh_spec = pl.BlockSpec((2, Hp, 4 * Hp), lambda bi: (0, 0, 0))
    w1f = jnp.pad(params['w1f'], ((0, dH), (0, dH))).astype(bf16)               # (Hp, Hp)
    w1b = jnp.pad(params['w1b'], ((0, dH), (0, dH))).astype(bf16)
    b1 = jnp.pad(params['b1'], ((0, 0), (0, dH)))                               # (1, Hp)  f32
    w2 = jnp.pad(params['w2'], ((0, dH), (0, dO))).astype(bf16)                 # (Hp, Op)
    b2 = jnp.pad(params['b2'], ((0, 0), (0, dO)))                               # (1, Op)  f32

    c2 = lambda bi: (0, 0)
    # TODO(synk): single-buffer the constant weight operands (pipeline_mode=pl.Buffered(1)) and
    # keep hf/hb scratch in bf16 once large-H configs start pressing the v7x 64 MiB VMEM budget.
    grid_spec = pltpu.PrefetchScalarGridSpec(
        num_scalar_prefetch=0,
        grid=(Bp // BB,),
        in_specs=[
            pl.BlockSpec((T, BB, E), lambda bi: (0, bi, 0)),   # emb: streamed per batch block
            pl.BlockSpec((E, 4 * Hp), c2),                     # wih_f (bf16)
            pl.BlockSpec((E, 4 * Hp), c2),                     # wih_b (bf16)
            pl.BlockSpec((1, 4 * Hp), c2),                     # b_f
            pl.BlockSpec((1, 4 * Hp), c2),                     # b_b
            whh_spec,                                          # whh (fused block-diag / stacked)
            pl.BlockSpec((Hp, Hp), c2),                        # w1f
            pl.BlockSpec((Hp, Hp), c2),                        # w1b
            pl.BlockSpec((1, Hp), c2),                         # b1
            pl.BlockSpec((Hp, Op), c2),                        # w2
            pl.BlockSpec((1, Op), c2),                         # b2
        ],
        out_specs=pl.BlockSpec((BB, T * Op), lambda bi: (bi, 0)),
        scratch_shapes=[
            pltpu.VMEM((TC, BB, 4 * Hp), f32),                 # gx forward  (one time chunk)
            pltpu.VMEM((TC, BB, 4 * Hp), f32),                 # gx backward (one time chunk)
            pltpu.VMEM((T, BB, Hp), f32),                      # h forward
            pltpu.VMEM((T, BB, Hp), f32),                      # h backward
        ],
    )

    y2d = pl.pallas_call(
        bilstm_kernel,
        out_shape=jax.ShapeDtypeStruct((Bp, T * Op), f32),
        grid_spec=grid_spec,
        compiler_params=pltpu.CompilerParams(
            dimension_semantics=("parallel",),                 # batch blocks are independent
            vmem_limit_bytes=_vmem_limit_bytes(T, TC, BB, E, Hp, Op, fused)),
    )(emb, wih_f, wih_b, b_f, b_b, whh, w1f, w1b, b1, w2, b2)

    # Free reshape (identical row-major layout) + slice; no HBM transpose pass.
    return y2d.reshape(Bp, T, Op)[:B, :, :O]                   # (B, T, O)


# ------------------------- pure-JAX reference (sanity check) -------------------------
def _hdot(a, b):
    return jnp.dot(a, b, precision=lax.Precision.HIGHEST)


def _lstm_dir_ref(emb, wih, whh, b, reverse, H):
    B = emb.shape[0]
    xs = jnp.transpose(emb, (1, 0, 2))
    if reverse:
        xs = xs[::-1]
    h0 = jnp.zeros((B, H), jnp.float32)
    c0 = jnp.zeros((B, H), jnp.float32)

    def step(carry, x_t):
        h, c = carry
        gates = _hdot(x_t, wih) + _hdot(h, whh) + b
        i = jax.nn.sigmoid(gates[:, 0:H])
        f = jax.nn.sigmoid(gates[:, H:2 * H])
        g = jnp.tanh(gates[:, 2 * H:3 * H])
        o = jax.nn.sigmoid(gates[:, 3 * H:4 * H])
        c = f * c + i * g
        h = o * jnp.tanh(c)
        return (h, c), h

    _, hs = lax.scan(step, (h0, c0), xs)
    if reverse:
        hs = hs[::-1]
    return jnp.transpose(hs, (1, 0, 2))                        # (B, T, H)


def bilstm_reference(x_tokens, params):
    emb = jnp.take(params['emb'], x_tokens, axis=0).astype(jnp.float32)
    H = params['whh_f'].shape[0]
    hf = _lstm_dir_ref(emb, params['wih_f'], params['whh_f'], params['b_f'], False, H)
    hb = _lstm_dir_ref(emb, params['wih_b'], params['whh_b'], params['b_b'], True, H)
    h1 = jnp.maximum(_hdot(hf, params['w1f']) + _hdot(hb, params['w1b']) + params['b1'], 0.0)
    return _hdot(h1, params['w2']) + params['b2']


def make_params(key, vocab_size, embd_dim, hidden_dim, output_dim):
    ks = jax.random.split(key, 16)
    s_lstm = 1.0 / np.sqrt(hidden_dim)
    s_l1 = 1.0 / np.sqrt(2 * hidden_dim)
    s_l2 = 1.0 / np.sqrt(hidden_dim)
    u = lambda k, shape, s: jax.random.uniform(k, shape, jnp.float32, -s, s)
    H, E, O = hidden_dim, embd_dim, output_dim
    return {
        'emb':   jax.random.normal(ks[0], (vocab_size, E), jnp.float32),
        # LSTM weights stored pre-transposed: W_ih^T (E,4H), W_hh^T (H,4H); bias = b_ih + b_hh
        'wih_f': u(ks[1], (E, 4 * H), s_lstm),
        'whh_f': u(ks[2], (H, 4 * H), s_lstm),
        'b_f':   u(ks[3], (1, 4 * H), s_lstm) + u(ks[4], (1, 4 * H), s_lstm),
        'wih_b': u(ks[5], (E, 4 * H), s_lstm),
        'whh_b': u(ks[6], (H, 4 * H), s_lstm),
        'b_b':   u(ks[7], (1, 4 * H), s_lstm) + u(ks[8], (1, 4 * H), s_lstm),
        # l1: Linear(2H, H) -> W1^T is (2H, H), split into forward/backward halves
        'w1f':   u(ks[9], (H, H), s_l1),
        'w1b':   u(ks[10], (H, H), s_l1),
        'b1':    u(ks[11], (1, H), s_l1),
        # l2: Linear(H, O) -> W2^T is (H, O)
        'w2':    u(ks[12], (H, O), s_l2),
        'b2':    u(ks[13], (1, O), s_l2),
    }


if __name__ == "__main__":
    VOCAB, EMBD, HIDDEN, OUT = 50, 16, 32, 8
    B, T = 2, 8

    key = jax.random.PRNGKey(0)
    k_param, k_tok = jax.random.split(key)
    params = make_params(k_param, VOCAB, EMBD, HIDDEN, OUT)
    x = jax.random.randint(k_tok, (B, T), 0, VOCAB, dtype=jnp.int32)

    y = jax.block_until_ready(bilstm_forward(x, params))
    assert y.shape == (B, T, OUT), y.shape

    y_ref = jax.block_until_ready(bilstm_reference(x, params))
    # bf16 MXU operands in the kernel vs f32-HIGHEST reference -> relaxed tolerance.
    np.testing.assert_allclose(np.asarray(y), np.asarray(y_ref), rtol=3e-2, atol=3e-2)

    print("KERNEL_OK")
</pallas_src>

<mosaic_0001>
module attributes {stable_mosaic.version = 11 : i64} {
  func.func @bilstm_kernel(%arg0: i32, %arg1: memref<8x8x16xf32, #tpu.memory_space<vmem>>, %arg2: memref<16x512xbf16, #tpu.memory_space<vmem>>, %arg3: memref<16x512xbf16, #tpu.memory_space<vmem>>, %arg4: memref<1x512xf32, #tpu.memory_space<vmem>>, %arg5: memref<1x512xf32, #tpu.memory_space<vmem>>, %arg6: memref<256x1024xbf16, #tpu.memory_space<vmem>>, %arg7: memref<128x128xbf16, #tpu.memory_space<vmem>>, %arg8: memref<128x128xbf16, #tpu.memory_space<vmem>>, %arg9: memref<1x128xf32, #tpu.memory_space<vmem>>, %arg10: memref<128x128xbf16, #tpu.memory_space<vmem>>, %arg11: memref<1x128xf32, #tpu.memory_space<vmem>>, %arg12: memref<8x1024xf32, #tpu.memory_space<vmem>>, %arg13: memref<8x8x512xf32, #tpu.memory_space<vmem>>, %arg14: memref<8x8x512xf32, #tpu.memory_space<vmem>>, %arg15: memref<8x8x128xf32, #tpu.memory_space<vmem>>, %arg16: memref<8x8x128xf32, #tpu.memory_space<vmem>>) attributes {dimension_semantics = [#tpu.dimension_semantics<parallel>], iteration_bounds = array<i64: 1>, scalar_prefetch = 0 : i64, scratch_operands = 4 : i64, tpu.core_type = #tpu.core_type<tc>, window_params = [{transform_indices = @transform_0, window_bounds = array<i64: 8, 8, 16>}, {pipeline_mode = #tpu.pipeline_mode<synchronous>, transform_indices = @transform_1, window_bounds = array<i64: 16, 512>}, {pipeline_mode = #tpu.pipeline_mode<synchronous>, transform_indices = @transform_2, window_bounds = array<i64: 16, 512>}, {pipeline_mode = #tpu.pipeline_mode<synchronous>, transform_indices = @transform_3, window_bounds = array<i64: 1, 512>}, {pipeline_mode = #tpu.pipeline_mode<synchronous>, transform_indices = @transform_4, window_bounds = array<i64: 1, 512>}, {pipeline_mode = #tpu.pipeline_mode<synchronous>, transform_indices = @transform_5, window_bounds = array<i64: 256, 1024>}, {pipeline_mode = #tpu.pipeline_mode<synchronous>, transform_indices = @transform_6, window_bounds = array<i64: 128, 128>}, {pipeline_mode = #tpu.pipeline_mode<synchronous>, transform_indices = @transform_7, window_bounds = array<i64: 128, 128>}, {pipeline_mode = #tpu.pipeline_mode<synchronous>, transform_indices = @transform_8, window_bounds = array<i64: 1, 128>}, {pipeline_mode = #tpu.pipeline_mode<synchronous>, transform_indices = @transform_9, window_bounds = array<i64: 128, 128>}, {pipeline_mode = #tpu.pipeline_mode<synchronous>, transform_indices = @transform_10, window_bounds = array<i64: 1, 128>}, {transform_indices = @transform_11, window_bounds = array<i64: 8, 1024>}]} {
    %c0 = arith.constant 0 : index
    %c0_0 = arith.constant 0 : index
    %0 = vector.load %arg2[%c0, %c0_0] : memref<16x512xbf16, #tpu.memory_space<vmem>>, vector<16x512xbf16>
    %c0_1 = arith.constant 0 : index
    %c0_2 = arith.constant 0 : index
    %1 = vector.load %arg3[%c0_1, %c0_2] : memref<16x512xbf16, #tpu.memory_space<vmem>>, vector<16x512xbf16>
    %c0_3 = arith.constant 0 : index
    %c0_4 = arith.constant 0 : index
    %2 = vector.load %arg4[%c0_3, %c0_4] : memref<1x512xf32, #tpu.memory_space<vmem>>, vector<1x512xf32>
    %c0_5 = arith.constant 0 : index
    %c0_6 = arith.constant 0 : index
    %3 = vector.load %arg5[%c0_5, %c0_6] : memref<1x512xf32, #tpu.memory_space<vmem>>, vector<1x512xf32>
    %c0_7 = arith.constant 0 : index
    %c0_8 = arith.constant 0 : index
    %4 = vector.load %arg6[%c0_7, %c0_8] : memref<256x1024xbf16, #tpu.memory_space<vmem>>, vector<256x1024xbf16>
    %cst = arith.constant 0.000000e+00 : f32
    %5 = vector.broadcast %cst : f32 to vector<8x128xf32>
    %cst_9 = arith.constant 0.000000e+00 : bf16
    %6 = vector.broadcast %cst_9 : bf16 to vector<8x256xbf16>
    %c0_10 = arith.constant 0 : index
    %c0_11 = arith.constant 0 : index
    %c0_12 = arith.constant 0 : index
    %7 = vector.load %arg1[%c0_10, %c0_11, %c0_12] : memref<8x8x16xf32, #tpu.memory_space<vmem>>, vector<8x8x16xf32>
    %8 = vector.shape_cast %7 : vector<8x8x16xf32> to vector<64x16xf32>
    %9 = arith.truncf %8 : vector<64x16xf32> to vector<64x16xbf16>
    %c0_13 = arith.constant 0 : index
    %c0_14 = arith.constant 0 : index
    %c0_15 = arith.constant 0 : index
    %10 = vector.load %arg1[%c0_13, %c0_14, %c0_15] : memref<8x8x16xf32, #tpu.memory_space<vmem>>, vector<8x8x16xf32>
    %11 = vector.shape_cast %10 : vector<8x8x16xf32> to vector<64x16xf32>
    %12 = arith.truncf %11 : vector<64x16xf32> to vector<64x16xbf16>
    %cst_16 = arith.constant dense<0.000000e+00> : vector<64x512xf32>
    %13 = tpu.matmul %9, %0, %cst_16 {dimension_numbers = #tpu.dot_dimension_numbers<[1], [0], [0], [1], [0, 0, 1, 1], [], []>} : vector<64x16xbf16>, vector<16x512xbf16>, vector<64x512xf32> -> vector<64x512xf32>
    %14 = vector.broadcast %2 : vector<1x512xf32> to vector<64x512xf32>
    %15 = arith.addf %13, %14 : vector<64x512xf32>
    %16 = vector.shape_cast %15 : vector<64x512xf32> to vector<8x8x512xf32>
    %c0_17 = arith.constant 0 : index
    %c0_18 = arith.constant 0 : index
    %c0_19 = arith.constant 0 : index
    %17 = vector.load %arg13[%c0_17, %c0_18, %c0_19] : memref<8x8x512xf32, #tpu.memory_space<vmem>>, vector<8x8x512xf32>
    tpu.vector_store %arg13[%c0_17, %c0_18, %c0_19], %16 {strides = array<i32>} : memref<8x8x512xf32, #tpu.memory_space<vmem>>, vector<8x8x512xf32>,
    %cst_20 = arith.constant dense<0.000000e+00> : vector<64x512xf32>
    %18 = tpu.matmul %12, %1, %cst_20 {dimension_numbers = #tpu.dot_dimension_numbers<[1], [0], [0], [1], [0, 0, 1, 1], [], []>} : vector<64x16xbf16>, vector<16x512xbf16>, vector<64x512xf32> -> vector<64x512xf32>
    %19 = vector.broadcast %3 : vector<1x512xf32> to vector<64x512xf32>
    %20 = arith.addf %18, %19 : vector<64x512xf32>
    %21 = vector.shape_cast %20 : vector<64x512xf32> to vector<8x8x512xf32>
    %c0_21 = arith.constant 0 : index
    %c0_22 = arith.constant 0 : index
    %c0_23 = arith.constant 0 : index
    %22 = vector.load %arg14[%c0_21, %c0_22, %c0_23] : memref<8x8x512xf32, #tpu.memory_space<vmem>>, vector<8x8x512xf32>
    tpu.vector_store %arg14[%c0_21, %c0_22, %c0_23], %21 {strides = array<i32>} : memref<8x8x512xf32, #tpu.memory_space<vmem>>, vector<8x8x512xf32>,
    %c0_i32 = arith.constant 0 : i32
    %c0_i32_24 = arith.constant 0 : i32
    %23 = arith.addi %c0_i32_24, %c0_i32 : i32
    %c7_i32 = arith.constant 7 : i32
    %24 = arith.subi %c7_i32, %23 : i32
    %cst_25 = arith.constant dense<0.000000e+00> : vector<8x1024xf32>
    %25 = tpu.matmul %6, %4, %cst_25 {dimension_numbers = #tpu.dot_dimension_numbers<[1], [0], [0], [1], [0, 0, 1, 1], [], []>} : vector<8x256xbf16>, vector<256x1024xbf16>, vector<8x1024xf32> -> vector<8x1024xf32>
    %26 = vector.extract_strided_slice %25 {offsets = [0, 0], sizes = [8, 512], strides = [1, 1]} : vector<8x1024xf32> to vector<8x512xf32>
    %27 = vector.extract_strided_slice %25 {offsets = [0, 512], sizes = [8, 512], strides = [1, 1]} : vector<8x1024xf32> to vector<8x512xf32>
    %28 = arith.index_cast %c0_i32 : i32 to index
    %c0_26 = arith.constant 0 : index
    %c0_27 = arith.constant 0 : index
    %29 = vector.load %arg13[%28, %c0_26, %c0_27] : memref<8x8x512xf32, #tpu.memory_space<vmem>>, vector<1x8x512xf32>
    %30 = vector.shape_cast %29 : vector<1x8x512xf32> to vector<8x512xf32>
    %31 = arith.addf %30, %26 : vector<8x512xf32>
    %32 = vector.extract_strided_slice %31 {offsets = [0, 0], sizes = [8, 128], strides = [1, 1]} : vector<8x512xf32> to vector<8x128xf32>
    %cst_28 = arith.constant 5.000000e-01 : f32
    %33 = vector.broadcast %cst_28 : f32 to vector<8x128xf32>
    %34 = arith.mulf %33, %32 : vector<8x128xf32>
    %35 = math.tanh %34 : vector<8x128xf32>
    %cst_29 = arith.constant 5.000000e-01 : f32
    %36 = vector.broadcast %cst_29 : f32 to vector<8x128xf32>
    %37 = arith.mulf %36, %35 : vector<8x128xf32>
    %cst_30 = arith.constant 5.000000e-01 : f32
    %38 = vector.broadcast %cst_30 : f32 to vector<8x128xf32>
    %39 = arith.addf %37, %38 : vector<8x128xf32>
    %40 = vector.extract_strided_slice %31 {offsets = [0, 128], sizes = [8, 128], strides = [1, 1]} : vector<8x512xf32> to vector<8x128xf32>
    %cst_31 = arith.constant 5.000000e-01 : f32
    %41 = vector.broadcast %cst_31 : f32 to vector<8x128xf32>
    %42 = arith.mulf %41, %40 : vector<8x128xf32>
    %43 = math.tanh %42 : vector<8x128xf32>
    %cst_32 = arith.constant 5.000000e-01 : f32
    %44 = vector.broadcast %cst_32 : f32 to vector<8x128xf32>
    %45 = arith.mulf %44, %43 : vector<8x128xf32>
    %cst_33 = arith.constant 5.000000e-01 : f32
    %46 = vector.broadcast %cst_33 : f32 to vector<8x128xf32>
    %47 = arith.addf %45, %46 : vector<8x128xf32>
    %48 = vector.extract_strided_slice %31 {offsets = [0, 256], sizes = [8, 128], strides = [1, 1]} : vector<8x512xf32> to vector<8x128xf32>
    %49 = math.tanh %48 : vector<8x128xf32>
    %50 = vector.extract_strided_slice %31 {offsets = [0, 384], sizes = [8, 128], strides = [1, 1]} : vector<8x512xf32> to vector<8x128xf32>
    %cst_34 = arith.constant 5.000000e-01 : f32
    %51 = vector.broadcast %cst_34 : f32 to vector<8x128xf32>
    %52 = arith.mulf %51, %50 : vector<8x128xf32>
    %53 = math.tanh %52 : vector<8x128xf32>
    %cst_35 = arith.constant 5.000000e-01 : f32
    %54 = vector.broadcast %cst_35 : f32 to vector<8x128xf32>
    %55 = arith.mulf %54, %53 : vector<8x128xf32>
    %cst_36 = arith.constant 5.000000e-01 : f32
    %56 = vector.broadcast %cst_36 : f32 to vector<8x128xf32>
    %57 = arith.addf %55, %56 : vector<8x128xf32>
    %58 = arith.mulf %47, %5 : vector<8x128xf32>
    %59 = arith.mulf %39, %49 : vector<8x128xf32>
    %60 = arith.addf %58, %59 : vector<8x128xf32>
    %61 = math.tanh %60 : vector<8x128xf32>
    %62 = arith.mulf %57, %61 : vector<8x128xf32>
    %c7_i32_37 = arith.constant 7 : i32
    %63 = arith.subi %c7_i32_37, %c0_i32 : i32
    %64 = arith.index_cast %63 : i32 to index
    %c0_38 = arith.constant 0 : index
    %c0_39 = arith.constant 0 : index
    %65 = vector.load %arg14[%64, %c0_38, %c0_39] : memref<8x8x512xf32, #tpu.memory_space<vmem>>, vector<1x8x512xf32>
    %66 = vector.shape_cast %65 : vector<1x8x512xf32> to vector<8x512xf32>
    %67 = arith.addf %66, %27 : vector<8x512xf32>
    %68 = vector.extract_strided_slice %67 {offsets = [0, 0], sizes = [8, 128], strides = [1, 1]} : vector<8x512xf32> to vector<8x128xf32>
    %cst_40 = arith.constant 5.000000e-01 : f32
    %69 = vector.broadcast %cst_40 : f32 to vector<8x128xf32>
    %70 = arith.mulf %69, %68 : vector<8x128xf32>
    %71 = math.tanh %70 : vector<8x128xf32>
    %cst_41 = arith.constant 5.000000e-01 : f32
    %72 = vector.broadcast %cst_41 : f32 to vector<8x128xf32>
    %73 = arith.mulf %72, %71 : vector<8x128xf32>
    %cst_42 = arith.constant 5.000000e-01 : f32
    %74 = vector.broadcast %cst_42 : f32 to vector<8x128xf32>
    %75 = arith.addf %73, %74 : vector<8x128xf32>
    %76 = vector.extract_strided_slice %67 {offsets = [0, 128], sizes = [8, 128], strides = [1, 1]} : vector<8x512xf32> to vector<8x128xf32>
    %cst_43 = arith.constant 5.000000e-01 : f32
    %77 = vector.broadcast %cst_43 : f32 to vector<8x128xf32>
    %78 = arith.mulf %77, %76 : vector<8x128xf32>
    %79 = math.tanh %78 : vector<8x128xf32>
    %cst_44 = arith.constant 5.000000e-01 : f32
    %80 = vector.broadcast %cst_44 : f32 to vector<8x128xf32>
    %81 = arith.mulf %80, %79 : vector<8x128xf32>
    %cst_45 = arith.constant 5.000000e-01 : f32
    %82 = vector.broadcast %cst_45 : f32 to vector<8x128xf32>
    %83 = arith.addf %81, %82 : vector<8x128xf32>
    %84 = vector.extract_strided_slice %67 {offsets = [0, 256], sizes = [8, 128], strides = [1, 1]} : vector<8x512xf32> to vector<8x128xf32>
    %85 = math.tanh %84 : vector<8x128xf32>
    %86 = vector.extract_strided_slice %67 {offsets = [0, 384], sizes = [8, 128], strides = [1, 1]} : vector<8x512xf32> to vector<8x128xf32>
    %cst_46 = arith.constant 5.000000e-01 : f32
    %87 = vector.broadcast %cst_46 : f32 to vector<8x128xf32>
    %88 = arith.mulf %87, %86 : vector<8x128xf32>
    %89 = math.tanh %88 : vector<8x128xf32>
    %cst_47 = arith.constant 5.000000e-01 : f32
    %90 = vector.broadcast %cst_47 : f32 to vector<8x128xf32>
    %91 = arith.mulf %90, %89 : vector<8x128xf32>
    %cst_48 = arith.constant 5.000000e-01 : f32
    %92 = vector.broadcast %cst_48 : f32 to vector<8x128xf32>
    %93 = arith.addf %91, %92 : vector<8x128xf32>
    %94 = arith.mulf %83, %5 : vector<8x128xf32>
    %95 = arith.mulf %75, %85 : vector<8x128xf32>
    %96 = arith.addf %94, %95 : vector<8x128xf32>
    %97 = math.tanh %96 : vector<8x128xf32>
    %98 = arith.mulf %93, %97 : vector<8x128xf32>
    %99 = arith.index_cast %23 : i32 to index
    %c0_49 = arith.constant 0 : index
    %c0_50 = arith.constant 0 : index
    %100 = vector.load %arg15[%99, %c0_49, %c0_50] : memref<8x8x128xf32, #tpu.memory_space<vmem>>, vector<1x8x128xf32>
    %101 = vector.shape_cast %100 : vector<1x8x128xf32> to vector<8x128xf32>
    %102 = vector.shape_cast %62 : vector<8x128xf32> to vector<1x8x128xf32>
    tpu.vector_store %arg15[%99, %c0_49, %c0_50], %102 {strides = array<i32>} : memref<8x8x128xf32, #tpu.memory_space<vmem>>, vector<1x8x128xf32>,
    %103 = arith.index_cast %24 : i32 to index
    %c0_51 = arith.constant 0 : index
    %c0_52 = arith.constant 0 : index
    %104 = vector.load %arg16[%103, %c0_51, %c0_52] : memref<8x8x128xf32, #tpu.memory_space<vmem>>, vector<1x8x128xf32>
    %105 = vector.shape_cast %104 : vector<1x8x128xf32> to vector<8x128xf32>
    %106 = vector.shape_cast %98 : vector<8x128xf32> to vector<1x8x128xf32>
    tpu.vector_store %arg16[%103, %c0_51, %c0_52], %106 {strides = array<i32>} : memref<8x8x128xf32, #tpu.memory_space<vmem>>, vector<1x8x128xf32>,
    %107 = tpu.concatenate %62, %98 in 1 : vector<8x128xf32>, vector<8x128xf32> -> vector<8x256xf32>
    %108 = arith.truncf %107 : vector<8x256xf32> to vector<8x256xbf16>
    %c1_i32 = arith.constant 1 : i32
    %c0_i32_53 = arith.constant 0 : i32
    %109 = arith.addi %c0_i32_53, %c1_i32 : i32
    %c7_i32_54 = arith.constant 7 : i32
    %110 = arith.subi %c7_i32_54, %109 : i32
    %cst_55 = arith.constant dense<0.000000e+00> : vector<8x1024xf32>
    %111 = tpu.matmul %108, %4, %cst_55 {dimension_numbers = #tpu.dot_dimension_numbers<[1], [0], [0], [1], [0, 0, 1, 1], [], []>} : vector<8x256xbf16>, vector<256x1024xbf16>, vector<8x1024xf32> -> vector<8x1024xf32>
    %112 = vector.extract_strided_slice %111 {offsets = [0, 0], sizes = [8, 512], strides = [1, 1]} : vector<8x1024xf32> to vector<8x512xf32>
    %113 = vector.extract_strided_slice %111 {offsets = [0, 512], sizes = [8, 512], strides = [1, 1]} : vector<8x1024xf32> to vector<8x512xf32>
    %114 = arith.index_cast %c1_i32 : i32 to index
    %c0_56 = arith.constant 0 : index
    %c0_57 = arith.constant 0 : index
    %115 = vector.load %arg13[%114, %c0_56, %c0_57] : memref<8x8x512xf32, #tpu.memory_space<vmem>>, vector<1x8x512xf32>
    %116 = vector.shape_cast %115 : vector<1x8x512xf32> to vector<8x512xf32>
    %117 = arith.addf %116, %112 : vector<8x512xf32>
    %118 = vector.extract_strided_slice %117 {offsets = [0, 0], sizes = [8, 128], strides = [1, 1]} : vector<8x512xf32> to vector<8x128xf32>
    %cst_58 = arith.constant 5.000000e-01 : f32
    %119 = vector.broadcast %cst_58 : f32 to vector<8x128xf32>
    %120 = arith.mulf %119, %118 : vector<8x128xf32>
    %121 = math.tanh %120 : vector<8x128xf32>
    %cst_59 = arith.constant 5.000000e-01 : f32
    %122 = vector.broadcast %cst_59 : f32 to vector<8x128xf32>
    %123 = arith.mulf %122, %121 : vector<8x128xf32>
    %cst_60 = arith.constant 5.000000e-01 : f32
    %124 = vector.broadcast %cst_60 : f32 to vector<8x128xf32>
    %125 = arith.addf %123, %124 : vector<8x128xf32>
    %126 = vector.extract_strided_slice %117 {offsets = [0, 128], sizes = [8, 128], strides = [1, 1]} : vector<8x512xf32> to vector<8x128xf32>
    %cst_61 = arith.constant 5.000000e-01 : f32
    %127 = vector.broadcast %cst_61 : f32 to vector<8x128xf32>
    %128 = arith.mulf %127, %126 : vector<8x128xf32>
    %129 = math.tanh %128 : vector<8x128xf32>
    %cst_62 = arith.constant 5.000000e-01 : f32
    %130 = vector.broadcast %cst_62 : f32 to vector<8x128xf32>
    %131 = arith.mulf %130, %129 : vector<8x128xf32>
    %cst_63 = arith.constant 5.000000e-01 : f32
    %132 = vector.broadcast %cst_63 : f32 to vector<8x128xf32>
    %133 = arith.addf %131, %132 : vector<8x128xf32>
    %134 = vector.extract_strided_slice %117 {offsets = [0, 256], sizes = [8, 128], strides = [1, 1]} : vector<8x512xf32> to vector<8x128xf32>
    %135 = math.tanh %134 : vector<8x128xf32>
    %136 = vector.extract_strided_slice %117 {offsets = [0, 384], sizes = [8, 128], strides = [1, 1]} : vector<8x512xf32> to vector<8x128xf32>
    %cst_64 = arith.constant 5.000000e-01 : f32
    %137 = vector.broadcast %cst_64 : f32 to vector<8x128xf32>
    %138 = arith.mulf %137, %136 : vector<8x128xf32>
    %139 = math.tanh %138 : vector<8x128xf32>
    %cst_65 = arith.constant 5.000000e-01 : f32
    %140 = vector.broadcast %cst_65 : f32 to vector<8x128xf32>
    %141 = arith.mulf %140, %139 : vector<8x128xf32>
    %cst_66 = arith.constant 5.000000e-01 : f32
    %142 = vector.broadcast %cst_66 : f32 to vector<8x128xf32>
    %143 = arith.addf %141, %142 : vector<8x128xf32>
    %144 = arith.mulf %133, %60 : vector<8x128xf32>
    %145 = arith.mulf %125, %135 : vector<8x128xf32>
    %146 = arith.addf %144, %145 : vector<8x128xf32>
    %147 = math.tanh %146 : vector<8x128xf32>
    %148 = arith.mulf %143, %147 : vector<8x128xf32>
    %c7_i32_67 = arith.constant 7 : i32
    %149 = arith.subi %c7_i32_67, %c1_i32 : i32
    %150 = arith.index_cast %149 : i32 to index
    %c0_68 = arith.constant 0 : index
    %c0_69 = arith.constant 0 : index
    %151 = vector.load %arg14[%150, %c0_68, %c0_69] : memref<8x8x512xf32, #tpu.memory_space<vmem>>, vector<1x8x512xf32>
    %152 = vector.shape_cast %151 : vector<1x8x512xf32> to vector<8x512xf32>
    %153 = arith.addf %152, %113 : vector<8x512xf32>
    %154 = vector.extract_strided_slice %153 {offsets = [0, 0], sizes = [8, 128], strides = [1, 1]} : vector<8x512xf32> to vector<8x128xf32>
    %cst_70 = arith.constant 5.000000e-01 : f32
    %155 = vector.broadcast %cst_70 : f32 to vector<8x128xf32>
    %156 = arith.mulf %155, %154 : vector<8x128xf32>
    %157 = math.tanh %156 : vector<8x128xf32>
    %cst_71 = arith.constant 5.000000e-01 : f32
    %158 = vector.broadcast %cst_71 : f32 to vector<8x128xf32>
    %159 = arith.mulf %158, %157 : vector<8x128xf32>
    %cst_72 = arith.constant 5.000000e-01 : f32
    %160 = vector.broadcast %cst_72 : f32 to vector<8x128xf32>
    %161 = arith.addf %159, %160 : vector<8x128xf32>
    %162 = vector.extract_strided_slice %153 {offsets = [0, 128], sizes = [8, 128], strides = [1, 1]} : vector<8x512xf32> to vector<8x128xf32>
    %cst_73 = arith.constant 5.000000e-01 : f32
    %163 = vector.broadcast %cst_73 : f32 to vector<8x128xf32>
    %164 = arith.mulf %163, %162 : vector<8x128xf32>
    %165 = math.tanh %164 : vector<8x128xf32>
    %cst_74 = arith.constant 5.000000e-01 : f32
    %166 = vector.broadcast %cst_74 : f32 to vector<8x128xf32>
    %167 = arith.mulf %166, %165 : vector<8x128xf32>
    %cst_75 = arith.constant 5.000000e-01 : f32
    %168 = vector.broadcast %cst_75 : f32 to vector<8x128xf32>
    %169 = arith.addf %167, %168 : vector<8x128xf32>
    %170 = vector.extract_strided_slice %153 {offsets = [0, 256], sizes = [8, 128], strides = [1, 1]} : vector<8x512xf32> to vector<8x128xf32>
    %171 = math.tanh %170 : vector<8x128xf32>
    %172 = vector.extract_strided_slice %153 {offsets = [0, 384], sizes = [8, 128], strides = [1, 1]} : vector<8x512xf32> to vector<8x128xf32>
    %cst_76 = arith.constant 5.000000e-01 : f32
    %173 = vector.broadcast %cst_76 : f32 to vector<8x128xf32>
    %174 = arith.mulf %173, %172 : vector<8x128xf32>
    %175 = math.tanh %174 : vector<8x128xf32>
    %cst_77 = arith.constant 5.000000e-01 : f32
    %176 = vector.broadcast %cst_77 : f32 to vector<8x128xf32>
    %177 = arith.mulf %176, %175 : vector<8x128xf32>
    %cst_78 = arith.constant 5.000000e-01 : f32
    %178 = vector.broadcast %cst_78 : f32 to vector<8x128xf32>
    %179 = arith.addf %177, %178 : vector<8x128xf32>
    %180 = arith.mulf %169, %96 : vector<8x128xf32>
    %181 = arith.mulf %161, %171 : vector<8x128xf32>
    %182 = arith.addf %180, %181 : vector<8x128xf32>
    %183 = math.tanh %182 : vector<8x128xf32>
    %184 = arith.mulf %179, %183 : vector<8x128xf32>
    %185 = arith.index_cast %109 : i32 to index
    %c0_79 = arith.constant 0 : index
    %c0_80 = arith.constant 0 : index
    %186 = vector.load %arg15[%185, %c0_79, %c0_80] : memref<8x8x128xf32, #tpu.memory_space<vmem>>, vector<1x8x128xf32>
    %187 = vector.shape_cast %186 : vector<1x8x128xf32> to vector<8x128xf32>
    %188 = vector.shape_cast %148 : vector<8x128xf32> to vector<1x8x128xf32>
    tpu.vector_store %arg15[%185, %c0_79, %c0_80], %188 {strides = array<i32>} : memref<8x8x128xf32, #tpu.memory_space<vmem>>, vector<1x8x128xf32>,
    %189 = arith.index_cast %110 : i32 to index
    %c0_81 = arith.constant 0 : index
    %c0_82 = arith.constant 0 : index
    %190 = vector.load %arg16[%189, %c0_81, %c0_82] : memref<8x8x128xf32, #tpu.memory_space<vmem>>, vector<1x8x128xf32>
    %191 = vector.shape_cast %190 : vector<1x8x128xf32> to vector<8x128xf32>
    %192 = vector.shape_cast %184 : vector<8x128xf32> to vector<1x8x128xf32>
    tpu.vector_store %arg16[%189, %c0_81, %c0_82], %192 {strides = array<i32>} : memref<8x8x128xf32, #tpu.memory_space<vmem>>, vector<1x8x128xf32>,
    %193 = tpu.concatenate %148, %184 in 1 : vector<8x128xf32>, vector<8x128xf32> -> vector<8x256xf32>
    %194 = arith.truncf %193 : vector<8x256xf32> to vector<8x256xbf16>
    %c2_i32 = arith.constant 2 : i32
    %c0_i32_83 = arith.constant 0 : i32
    %195 = arith.addi %c0_i32_83, %c2_i32 : i32
    %c7_i32_84 = arith.constant 7 : i32
    %196 = arith.subi %c7_i32_84, %195 : i32
    %cst_85 = arith.constant dense<0.000000e+00> : vector<8x1024xf32>
    %197 = tpu.matmul %194, %4, %cst_85 {dimension_numbers = #tpu.dot_dimension_numbers<[1], [0], [0], [1], [0, 0, 1, 1], [], []>} : vector<8x256xbf16>, vector<256x1024xbf16>, vector<8x1024xf32> -> vector<8x1024xf32>
    %198 = vector.extract_strided_slice %197 {offsets = [0, 0], sizes = [8, 512], strides = [1, 1]} : vector<8x1024xf32> to vector<8x512xf32>
    %199 = vector.extract_strided_slice %197 {offsets = [0, 512], sizes = [8, 512], strides = [1, 1]} : vector<8x1024xf32> to vector<8x512xf32>
    %200 = arith.index_cast %c2_i32 : i32 to index
    %c0_86 = arith.constant 0 : index
    %c0_87 = arith.constant 0 : index
    %201 = vector.load %arg13[%200, %c0_86, %c0_87] : memref<8x8x512xf32, #tpu.memory_space<vmem>>, vector<1x8x512xf32>
    %202 = vector.shape_cast %201 : vector<1x8x512xf32> to vector<8x512xf32>
    %203 = arith.addf %202, %198 : vector<8x512xf32>
    %204 = vector.extract_strided_slice %203 {offsets = [0, 0], sizes = [8, 128], strides = [1, 1]} : vector<8x512xf32> to vector<8x128xf32>
    %cst_88 = arith.constant 5.000000e-01 : f32
    %205 = vector.broadcast %cst_88 : f32 to vector<8x128xf32>
    %206 = arith.mulf %205, %204 : vector<8x128xf32>
    %207 = math.tanh %206 : vector<8x128xf32>
    %cst_89 = arith.constant 5.000000e-01 : f32
    %208 = vector.broadcast %cst_89 : f32 to vector<8x128xf32>
    %209 = arith.mulf %208, %207 : vector<8x128xf32>
    %cst_90 = arith.constant 5.000000e-01 : f32
    %210 = vector.broadcast %cst_90 : f32 to vector<8x128xf32>
    %211 = arith.addf %209, %210 : vector<8x128xf32>
    %212 = vector.extract_strided_slice %203 {offsets = [0, 128], sizes = [8, 128], strides = [1, 1]} : vector<8x512xf32> to vector<8x128xf32>
    %cst_91 = arith.constant 5.000000e-01 : f32
    %213 = vector.broadcast %cst_91 : f32 to vector<8x128xf32>
    %214 = arith.mulf %213, %212 : vector<8x128xf32>
    %215 = math.tanh %214 : vector<8x128xf32>
    %cst_92 = arith.constant 5.000000e-01 : f32
    %216 = vector.broadcast %cst_92 : f32 to vector<8x128xf32>
    %217 = arith.mulf %216, %215 : vector<8x128xf32>
    %cst_93 = arith.constant 5.000000e-01 : f32
    %218 = vector.broadcast %cst_93 : f32 to vector<8x128xf32>
    %219 = arith.addf %217, %218 : vector<8x128xf32>
    %220 = vector.extract_strided_slice %203 {offsets = [0, 256], sizes = [8, 128], strides = [1, 1]} : vector<8x512xf32> to vector<8x128xf32>
    %221 = math.tanh %220 : vector<8x128xf32>
    %222 = vector.extract_strided_slice %203 {offsets = [0, 384], sizes = [8, 128], strides = [1, 1]} : vector<8x512xf32> to vector<8x128xf32>
    %cst_94 = arith.constant 5.000000e-01 : f32
    %223 = vector.broadcast %cst_94 : f32 to vector<8x128xf32>
    %224 = arith.mulf %223, %222 : vector<8x128xf32>
    %225 = math.tanh %224 : vector<8x128xf32>
    %cst_95 = arith.constant 5.000000e-01 : f32
    %226 = vector.broadcast %cst_95 : f32 to vector<8x128xf32>
    %227 = arith.mulf %226, %225 : vector<8x128xf32>
    %cst_96 = arith.constant 5.000000e-01 : f32
    %228 = vector.broadcast %cst_96 : f32 to vector<8x128xf32>
    %229 = arith.addf %227, %228 : vector<8x128xf32>
    %230 = arith.mulf %219, %146 : vector<8x128xf32>
    %231 = arith.mulf %211, %221 : vector<8x128xf32>
    %232 = arith.addf %230, %231 : vector<8x128xf32>
    %233 = math.tanh %232 : vector<8x128xf32>
    %234 = arith.mulf %229, %233 : vector<8x128xf32>
    %c7_i32_97 = arith.constant 7 : i32
    %235 = arith.subi %c7_i32_97, %c2_i32 : i32
    %236 = arith.index_cast %235 : i32 to index
    %c0_98 = arith.constant 0 : index
    %c0_99 = arith.constant 0 : index
    %237 = vector.load %arg14[%236, %c0_98, %c0_99] : memref<8x8x512xf32, #tpu.memory_space<vmem>>, vector<1x8x512xf32>
    %238 = vector.shape_cast %237 : vector<1x8x512xf32> to vector<8x512xf32>
    %239 = arith.addf %238, %199 : vector<8x512xf32>
    %240 = vector.extract_strided_slice %239 {offsets = [0, 0], sizes = [8, 128], strides = [1, 1]} : vector<8x512xf32> to vector<8x128xf32>
    %cst_100 = arith.constant 5.000000e-01 : f32
    %241 = vector.broadcast %cst_100 : f32 to vector<8x128xf32>
    %242 = arith.mulf %241, %240 : vector<8x128xf32>
    %243 = math.tanh %242 : vector<8x128xf32>
    %cst_101 = arith.constant 5.000000e-01 : f32
    %244 = vector.broadcast %cst_101 : f32 to vector<8x128xf32>
    %245 = arith.mulf %244, %243 : vector<8x128xf32>
    %cst_102 = arith.constant 5.000000e-01 : f32
    %246 = vector.broadcast %cst_102 : f32 to vector<8x128xf32>
    %247 = arith.addf %245, %246 : vector<8x128xf32>
    %248 = vector.extract_strided_slice %239 {offsets = [0, 128], sizes = [8, 128], strides = [1, 1]} : vector<8x512xf32> to vector<8x128xf32>
    %cst_103 = arith.constant 5.000000e-01 : f32
    %249 = vector.broadcast %cst_103 : f32 to vector<8x128xf32>
    %250 = arith.mulf %249, %248 : vector<8x128xf32>
    %251 = math.tanh %250 : vector<8x128xf32>
    %cst_104 = arith.constant 5.000000e-01 : f32
    %252 = vector.broadcast %cst_104 : f32 to vector<8x128xf32>
    %253 = arith.mulf %252, %251 : vector<8x128xf32>
    %cst_105 = arith.constant 5.000000e-01 : f32
    %254 = vector.broadcast %cst_105 : f32 to vector<8x128xf32>
    %255 = arith.addf %253, %254 : vector<8x128xf32>
    %256 = vector.extract_strided_slice %239 {offsets = [0, 256], sizes = [8, 128], strides = [1, 1]} : vector<8x512xf32> to vector<8x128xf32>
    %257 = math.tanh %256 : vector<8x128xf32>
    %258 = vector.extract_strided_slice %239 {offsets = [0, 384], sizes = [8, 128], strides = [1, 1]} : vector<8x512xf32> to vector<8x128xf32>
    %cst_106 = arith.constant 5.000000e-01 : f32
    %259 = vector.broadcast %cst_106 : f32 to vector<8x128xf32>
    %260 = arith.mulf %259, %258 : vector<8x128xf32>
    %261 = math.tanh %260 : vector<8x128xf32>
    %cst_107 = arith.constant 5.000000e-01 : f32
    %262 = vector.broadcast %cst_107 : f32 to vector<8x128xf32>
    %263 = arith.mulf %262, %261 : vector<8x128xf32>
    %cst_108 = arith.constant 5.000000e-01 : f32
    %264 = vector.broadcast %cst_108 : f32 to vector<8x128xf32>
    %265 = arith.addf %263, %264 : vector<8x128xf32>
    %266 = arith.mulf %255, %182 : vector<8x128xf32>
    %267 = arith.mulf %247, %257 : vector<8x128xf32>
    %268 = arith.addf %266, %267 : vector<8x128xf32>
    %269 = math.tanh %268 : vector<8x128xf32>
    %270 = arith.mulf %265, %269 : vector<8x128xf32>
    %271 = arith.index_cast %195 : i32 to index
    %c0_109 = arith.constant 0 : index
    %c0_110 = arith.constant 0 : index
    %272 = vector.load %arg15[%271, %c0_109, %c0_110] : memref<8x8x128xf32, #tpu.memory_space<vmem>>, vector<1x8x128xf32>
    %273 = vector.shape_cast %272 : vector<1x8x128xf32> to vector<8x128xf32>
    %274 = vector.shape_cast %234 : vector<8x128xf32> to vector<1x8x128xf32>
    tpu.vector_store %arg15[%271, %c0_109, %c0_110], %274 {strides = array<i32>} : memref<8x8x128xf32, #tpu.memory_space<vmem>>, vector<1x8x128xf32>,
    %275 = arith.index_cast %196 : i32 to index
    %c0_111 = arith.constant 0 : index
    %c0_112 = arith.constant 0 : index
    %276 = vector.load %arg16[%275, %c0_111, %c0_112] : memref<8x8x128xf32, #tpu.memory_space<vmem>>, vector<1x8x128xf32>
    %277 = vector.shape_cast %276 : vector<1x8x128xf32> to vector<8x128xf32>
    %278 = vector.shape_cast %270 : vector<8x128xf32> to vector<1x8x128xf32>
    tpu.vector_store %arg16[%275, %c0_111, %c0_112], %278 {strides = array<i32>} : memref<8x8x128xf32, #tpu.memory_space<vmem>>, vector<1x8x128xf32>,
    %279 = tpu.concatenate %234, %270 in 1 : vector<8x128xf32>, vector<8x128xf32> -> vector<8x256xf32>
    %280 = arith.truncf %279 : vector<8x256xf32> to vector<8x256xbf16>
    %c3_i32 = arith.constant 3 : i32
    %c0_i32_113 = arith.constant 0 : i32
    %281 = arith.addi %c0_i32_113, %c3_i32 : i32
    %c7_i32_114 = arith.constant 7 : i32
    %282 = arith.subi %c7_i32_114, %281 : i32
    %cst_115 = arith.constant dense<0.000000e+00> : vector<8x1024xf32>
    %283 = tpu.matmul %280, %4, %cst_115 {dimension_numbers = #tpu.dot_dimension_numbers<[1], [0], [0], [1], [0, 0, 1, 1], [], []>} : vector<8x256xbf16>, vector<256x1024xbf16>, vector<8x1024xf32> -> vector<8x1024xf32>
    %284 = vector.extract_strided_slice %283 {offsets = [0, 0], sizes = [8, 512], strides = [1, 1]} : vector<8x1024xf32> to vector<8x512xf32>
    %285 = vector.extract_strided_slice %283 {offsets = [0, 512], sizes = [8, 512], strides = [1, 1]} : vector<8x1024xf32> to vector<8x512xf32>
    %286 = arith.index_cast %c3_i32 : i32 to index
    %c0_116 = arith.constant 0 : index
    %c0_117 = arith.constant 0 : index
    %287 = vector.load %arg13[%286, %c0_116, %c0_117] : memref<8x8x512xf32, #tpu.memory_space<vmem>>, vector<1x8x512xf32>
    %288 = vector.shape_cast %287 : vector<1x8x512xf32> to vector<8x512xf32>
    %289 = arith.addf %288, %284 : vector<8x512xf32>
    %290 = vector.extract_strided_slice %289 {offsets = [0, 0], sizes = [8, 128], strides = [1, 1]} : vector<8x512xf32> to vector<8x128xf32>
    %cst_118 = arith.constant 5.000000e-01 : f32
    %291 = vector.broadcast %cst_118 : f32 to vector<8x128xf32>
    %292 = arith.mulf %291, %290 : vector<8x128xf32>
    %293 = math.tanh %292 : vector<8x128xf32>
    %cst_119 = arith.constant 5.000000e-01 : f32
    %294 = vector.broadcast %cst_119 : f32 to vector<8x128xf32>
    %295 = arith.mulf %294, %293 : vector<8x128xf32>
    %cst_120 = arith.constant 5.000000e-01 : f32
    %296 = vector.broadcast %cst_120 : f32 to vector<8x128xf32>
    %297 = arith.addf %295, %296 : vector<8x128xf32>
    %298 = vector.extract_strided_slice %289 {offsets = [0, 128], sizes = [8, 128], strides = [1, 1]} : vector<8x512xf32> to vector<8x128xf32>
    %cst_121 = arith.constant 5.000000e-01 : f32
    %299 = vector.broadcast %cst_121 : f32 to vector<8x128xf32>
    %300 = arith.mulf %299, %298 : vector<8x128xf32>
    %301 = math.tanh %300 : vector<8x128xf32>
    %cst_122 = arith.constant 5.000000e-01 : f32
    %302 = vector.broadcast %cst_122 : f32 to vector<8x128xf32>
    %303 = arith.mulf %302, %301 : vector<8x128xf32>
    %cst_123 = arith.constant 5.000000e-01 : f32
    %304 = vector.broadcast %cst_123 : f32 to vector<8x128xf32>
    %305 = arith.addf %303, %304 : vector<8x128xf32>
    %306 = vector.extract_strided_slice %289 {offsets = [0, 256], sizes = [8, 128], strides = [1, 1]} : vector<8x512xf32> to vector<8x128xf32>
    %307 = math.tanh %306 : vector<8x128xf32>
    %308 = vector.extract_strided_slice %289 {offsets = [0, 384], sizes = [8, 128], strides = [1, 1]} : vector<8x512xf32> to vector<8x128xf32>
    %cst_124 = arith.constant 5.000000e-01 : f32
    %309 = vector.broadcast %cst_124 : f32 to vector<8x128xf32>
    %310 = arith.mulf %309, %308 : vector<8x128xf32>
    %311 = math.tanh %310 : vector<8x128xf32>
    %cst_125 = arith.constant 5.000000e-01 : f32
    %312 = vector.broadcast %cst_125 : f32 to vector<8x128xf32>
    %313 = arith.mulf %312, %311 : vector<8x128xf32>
    %cst_126 = arith.constant 5.000000e-01 : f32
    %314 = vector.broadcast %cst_126 : f32 to vector<8x128xf32>
    %315 = arith.addf %313, %314 : vector<8x128xf32>
    %316 = arith.mulf %305, %232 : vector<8x128xf32>
    %317 = arith.mulf %297, %307 : vector<8x128xf32>
    %318 = arith.addf %316, %317 : vector<8x128xf32>
    %319 = math.tanh %318 : vector<8x128xf32>
    %320 = arith.mulf %315, %319 : vector<8x128xf32>
    %c7_i32_127 = arith.constant 7 : i32
    %321 = arith.subi %c7_i32_127, %c3_i32 : i32
    %322 = arith.index_cast %321 : i32 to index
    %c0_128 = arith.constant 0 : index
    %c0_129 = arith.constant 0 : index
    %323 = vector.load %arg14[%322, %c0_128, %c0_129] : memref<8x8x512xf32, #tpu.memory_space<vmem>>, vector<1x8x512xf32>
    %324 = vector.shape_cast %323 : vector<1x8x512xf32> to vector<8x512xf32>
    %325 = arith.addf %324, %285 : vector<8x512xf32>
    %326 = vector.extract_strided_slice %325 {offsets = [0, 0], sizes = [8, 128], strides = [1, 1]} : vector<8x512xf32> to vector<8x128xf32>
    %cst_130 = arith.constant 5.000000e-01 : f32
    %327 = vector.broadcast %cst_130 : f32 to vector<8x128xf32>
    %328 = arith.mulf %327, %326 : vector<8x128xf32>
    %329 = math.tanh %328 : vector<8x128xf32>
    %cst_131 = arith.constant 5.000000e-01 : f32
    %330 = vector.broadcast %cst_131 : f32 to vector<8x128xf32>
    %331 = arith.mulf %330, %329 : vector<8x128xf32>
    %cst_132 = arith.constant 5.000000e-01 : f32
    %332 = vector.broadcast %cst_132 : f32 to vector<8x128xf32>
    %333 = arith.addf %331, %332 : vector<8x128xf32>
    %334 = vector.extract_strided_slice %325 {offsets = [0, 128], sizes = [8, 128], strides = [1, 1]} : vector<8x512xf32> to vector<8x128xf32>
    %cst_133 = arith.constant 5.000000e-01 : f32
    %335 = vector.broadcast %cst_133 : f32 to vector<8x128xf32>
    %336 = arith.mulf %335, %334 : vector<8x128xf32>
    %337 = math.tanh %336 : vector<8x128xf32>
    %cst_134 = arith.constant 5.000000e-01 : f32
    %338 = vector.broadcast %cst_134 : f32 to vector<8x128xf32>
    %339 = arith.mulf %338, %337 : vector<8x128xf32>
    %cst_135 = arith.constant 5.000000e-01 : f32
    %340 = vector.broadcast %cst_135 : f32 to vector<8x128xf32>
    %341 = arith.addf %339, %340 : vector<8x128xf32>
    %342 = vector.extract_strided_slice %325 {offsets = [0, 256], sizes = [8, 128], strides = [1, 1]} : vector<8x512xf32> to vector<8x128xf32>
    %343 = math.tanh %342 : vector<8x128xf32>
    %344 = vector.extract_strided_slice %325 {offsets = [0, 384], sizes = [8, 128], strides = [1, 1]} : vector<8x512xf32> to vector<8x128xf32>
    %cst_136 = arith.constant 5.000000e-01 : f32
    %345 = vector.broadcast %cst_136 : f32 to vector<8x128xf32>
    %346 = arith.mulf %345, %344 : vector<8x128xf32>
    %347 = math.tanh %346 : vector<8x128xf32>
    %cst_137 = arith.constant 5.000000e-01 : f32
    %348 = vector.broadcast %cst_137 : f32 to vector<8x128xf32>
    %349 = arith.mulf %348, %347 : vector<8x128xf32>
    %cst_138 = arith.constant 5.000000e-01 : f32
    %350 = vector.broadcast %cst_138 : f32 to vector<8x128xf32>
    %351 = arith.addf %349, %350 : vector<8x128xf32>
    %352 = arith.mulf %341, %268 : vector<8x128xf32>
    %353 = arith.mulf %333, %343 : vector<8x128xf32>
    %354 = arith.addf %352, %353 : vector<8x128xf32>
    %355 = math.tanh %354 : vector<8x128xf32>
    %356 = arith.mulf %351, %355 : vector<8x128xf32>
    %357 = arith.index_cast %281 : i32 to index
    %c0_139 = arith.constant 0 : index
    %c0_140 = arith.constant 0 : index
    %358 = vector.load %arg15[%357, %c0_139, %c0_140] : memref<8x8x128xf32, #tpu.memory_space<vmem>>, vector<1x8x128xf32>
    %359 = vector.shape_cast %358 : vector<1x8x128xf32> to vector<8x128xf32>
    %360 = vector.shape_cast %320 : vector<8x128xf32> to vector<1x8x128xf32>
    tpu.vector_store %arg15[%357, %c0_139, %c0_140], %360 {strides = array<i32>} : memref<8x8x128xf32, #tpu.memory_space<vmem>>, vector<1x8x128xf32>,
    %361 = arith.index_cast %282 : i32 to index
    %c0_141 = arith.constant 0 : index
    %c0_142 = arith.constant 0 : index
    %362 = vector.load %arg16[%361, %c0_141, %c0_142] : memref<8x8x128xf32, #tpu.memory_space<vmem>>, vector<1x8x128xf32>
    %363 = vector.shape_cast %362 : vector<1x8x128xf32> to vector<8x128xf32>
    %364 = vector.shape_cast %356 : vector<8x128xf32> to vector<1x8x128xf32>
    tpu.vector_store %arg16[%361, %c0_141, %c0_142], %364 {strides = array<i32>} : memref<8x8x128xf32, #tpu.memory_space<vmem>>, vector<1x8x128xf32>,
    %365 = tpu.concatenate %320, %356 in 1 : vector<8x128xf32>, vector<8x128xf32> -> vector<8x256xf32>
    %366 = arith.truncf %365 : vector<8x256xf32> to vector<8x256xbf16>
    %c4_i32 = arith.constant 4 : i32
    %c0_i32_143 = arith.constant 0 : i32
    %367 = arith.addi %c0_i32_143, %c4_i32 : i32
    %c7_i32_144 = arith.constant 7 : i32
    %368 = arith.subi %c7_i32_144, %367 : i32
    %cst_145 = arith.constant dense<0.000000e+00> : vector<8x1024xf32>
    %369 = tpu.matmul %366, %4, %cst_145 {dimension_numbers = #tpu.dot_dimension_numbers<[1], [0], [0], [1], [0, 0, 1, 1], [], []>} : vector<8x256xbf16>, vector<256x1024xbf16>, vector<8x1024xf32> -> vector<8x1024xf32>
    %370 = vector.extract_strided_slice %369 {offsets = [0, 0], sizes = [8, 512], strides = [1, 1]} : vector<8x1024xf32> to vector<8x512xf32>
    %371 = vector.extract_strided_slice %369 {offsets = [0, 512], sizes = [8, 512], strides = [1, 1]} : vector<8x1024xf32> to vector<8x512xf32>
    %372 = arith.index_cast %c4_i32 : i32 to index
    %c0_146 = arith.constant 0 : index
    %c0_147 = arith.constant 0 : index
    %373 = vector.load %arg13[%372, %c0_146, %c0_147] : memref<8x8x512xf32, #tpu.memory_space<vmem>>, vector<1x8x512xf32>
    %374 = vector.shape_cast %373 : vector<1x8x512xf32> to vector<8x512xf32>
    %375 = arith.addf %374, %370 : vector<8x512xf32>
    %376 = vector.extract_strided_slice %375 {offsets = [0, 0], sizes = [8, 128], strides = [1, 1]} : vector<8x512xf32> to vector<8x128xf32>
    %cst_148 = arith.constant 5.000000e-01 : f32
    %377 = vector.broadcast %cst_148 : f32 to vector<8x128xf32>
    %378 = arith.mulf %377, %376 : vector<8x128xf32>
    %379 = math.tanh %378 : vector<8x128xf32>
    %cst_149 = arith.constant 5.000000e-01 : f32
    %380 = vector.broadcast %cst_149 : f32 to vector<8x128xf32>
    %381 = arith.mulf %380, %379 : vector<8x128xf32>
    %cst_150 = arith.constant 5.000000e-01 : f32
    %382 = vector.broadcast %cst_150 : f32 to vector<8x128xf32>
    %383 = arith.addf %381, %382 : vector<8x128xf32>
    %384 = vector.extract_strided_slice %375 {offsets = [0, 128], sizes = [8, 128], strides = [1, 1]} : vector<8x512xf32> to vector<8x128xf32>
    %cst_151 = arith.constant 5.000000e-01 : f32
    %385 = vector.broadcast %cst_151 : f32 to vector<8x128xf32>
    %386 = arith.mulf %385, %384 : vector<8x128xf32>
    %387 = math.tanh %386 : vector<8x128xf32>
    %cst_152 = arith.constant 5.000000e-01 : f32
    %388 = vector.broadcast %cst_152 : f32 to vector<8x128xf32>
    %389 = arith.mulf %388, %387 : vector<8x128xf32>
    %cst_153 = arith.constant 5.000000e-01 : f32
    %390 = vector.broadcast %cst_153 : f32 to vector<8x128xf32>
    %391 = arith.addf %389, %390 : vector<8x128xf32>
    %392 = vector.extract_strided_slice %375 {offsets = [0, 256], sizes = [8, 128], strides = [1, 1]} : vector<8x512xf32> to vector<8x128xf32>
    %393 = math.tanh %392 : vector<8x128xf32>
    %394 = vector.extract_strided_slice %375 {offsets = [0, 384], sizes = [8, 128], strides = [1, 1]} : vector<8x512xf32> to vector<8x128xf32>
    %cst_154 = arith.constant 5.000000e-01 : f32
    %395 = vector.broadcast %cst_154 : f32 to vector<8x128xf32>
    %396 = arith.mulf %395, %394 : vector<8x128xf32>
    %397 = math.tanh %396 : vector<8x128xf32>
    %cst_155 = arith.constant 5.000000e-01 : f32
    %398 = vector.broadcast %cst_155 : f32 to vector<8x128xf32>
    %399 = arith.mulf %398, %397 : vector<8x128xf32>
    %cst_156 = arith.constant 5.000000e-01 : f32
    %400 = vector.broadcast %cst_156 : f32 to vector<8x128xf32>
    %401 = arith.addf %399, %400 : vector<8x128xf32>
    %402 = arith.mulf %391, %318 : vector<8x128xf32>
    %403 = arith.mulf %383, %393 : vector<8x128xf32>
    %404 = arith.addf %402, %403 : vector<8x128xf32>
    %405 = math.tanh %404 : vector<8x128xf32>
    %406 = arith.mulf %401, %405 : vector<8x128xf32>
    %c7_i32_157 = arith.constant 7 : i32
    %407 = arith.subi %c7_i32_157, %c4_i32 : i32
    %408 = arith.index_cast %407 : i32 to index
    %c0_158 = arith.constant 0 : index
    %c0_159 = arith.constant 0 : index
    %409 = vector.load %arg14[%408, %c0_158, %c0_159] : memref<8x8x512xf32, #tpu.memory_space<vmem>>, vector<1x8x512xf32>
    %410 = vector.shape_cast %409 : vector<1x8x512xf32> to vector<8x512xf32>
    %411 = arith.addf %410, %371 : vector<8x512xf32>
    %412 = vector.extract_strided_slice %411 {offsets = [0, 0], sizes = [8, 128], strides = [1, 1]} : vector<8x512xf32> to vector<8x128xf32>
    %cst_160 = arith.constant 5.000000e-01 : f32
    %413 = vector.broadcast %cst_160 : f32 to vector<8x128xf32>
    %414 = arith.mulf %413, %412 : vector<8x128xf32>
    %415 = math.tanh %414 : vector<8x128xf32>
    %cst_161 = arith.constant 5.000000e-01 : f32
    %416 = vector.broadcast %cst_161 : f32 to vector<8x128xf32>
    %417 = arith.mulf %416, %415 : vector<8x128xf32>
    %cst_162 = arith.constant 5.000000e-01 : f32
    %418 = vector.broadcast %cst_162 : f32 to vector<8x128xf32>
    %419 = arith.addf %417, %418 : vector<8x128xf32>
    %420 = vector.extract_strided_slice %411 {offsets = [0, 128], sizes = [8, 128], strides = [1, 1]} : vector<8x512xf32> to vector<8x128xf32>
    %cst_163 = arith.constant 5.000000e-01 : f32
    %421 = vector.broadcast %cst_163 : f32 to vector<8x128xf32>
    %422 = arith.mulf %421, %420 : vector<8x128xf32>
    %423 = math.tanh %422 : vector<8x128xf32>
    %cst_164 = arith.constant 5.000000e-01 : f32
    %424 = vector.broadcast %cst_164 : f32 to vector<8x128xf32>
    %425 = arith.mulf %424, %423 : vector<8x128xf32>
    %cst_165 = arith.constant 5.000000e-01 : f32
    %426 = vector.broadcast %cst_165 : f32 to vector<8x128xf32>
    %427 = arith.addf %425, %426 : vector<8x128xf32>
    %428 = vector.extract_strided_slice %411 {offsets = [0, 256], sizes = [8, 128], strides = [1, 1]} : vector<8x512xf32> to vector<8x128xf32>
    %429 = math.tanh %428 : vector<8x128xf32>
    %430 = vector.extract_strided_slice %411 {offsets = [0, 384], sizes = [8, 128], strides = [1, 1]} : vector<8x512xf32> to vector<8x128xf32>
    %cst_166 = arith.constant 5.000000e-01 : f32
    %431 = vector.broadcast %cst_166 : f32 to vector<8x128xf32>
    %432 = arith.mulf %431, %430 : vector<8x128xf32>
    %433 = math.tanh %432 : vector<8x128xf32>
    %cst_167 = arith.constant 5.000000e-01 : f32
    %434 = vector.broadcast %cst_167 : f32 to vector<8x128xf32>
    %435 = arith.mulf %434, %433 : vector<8x128xf32>
    %cst_168 = arith.constant 5.000000e-01 : f32
    %436 = vector.broadcast %cst_168 : f32 to vector<8x128xf32>
    %437 = arith.addf %435, %436 : vector<8x128xf32>
    %438 = arith.mulf %427, %354 : vector<8x128xf32>
    %439 = arith.mulf %419, %429 : vector<8x128xf32>
    %440 = arith.addf %438, %439 : vector<8x128xf32>
    %441 = math.tanh %440 : vector<8x128xf32>
    %442 = arith.mulf %437, %441 : vector<8x128xf32>
    %443 = arith.index_cast %367 : i32 to index
    %c0_169 = arith.constant 0 : index
    %c0_170 = arith.constant 0 : index
    %444 = vector.load %arg15[%443, %c0_169, %c0_170] : memref<8x8x128xf32, #tpu.memory_space<vmem>>, vector<1x8x128xf32>
    %445 = vector.shape_cast %444 : vector<1x8x128xf32> to vector<8x128xf32>
    %446 = vector.shape_cast %406 : vector<8x128xf32> to vector<1x8x128xf32>
    tpu.vector_store %arg15[%443, %c0_169, %c0_170], %446 {strides = array<i32>} : memref<8x8x128xf32, #tpu.memory_space<vmem>>, vector<1x8x128xf32>,
    %447 = arith.index_cast %368 : i32 to index
    %c0_171 = arith.constant 0 : index
    %c0_172 = arith.constant 0 : index
    %448 = vector.load %arg16[%447, %c0_171, %c0_172] : memref<8x8x128xf32, #tpu.memory_space<vmem>>, vector<1x8x128xf32>
    %449 = vector.shape_cast %448 : vector<1x8x128xf32> to vector<8x128xf32>
    %450 = vector.shape_cast %442 : vector<8x128xf32> to vector<1x8x128xf32>
    tpu.vector_store %arg16[%447, %c0_171, %c0_172], %450 {strides = array<i32>} : memref<8x8x128xf32, #tpu.memory_space<vmem>>, vector<1x8x128xf32>,
    %451 = tpu.concatenate %406, %442 in 1 : vector<8x128xf32>, vector<8x128xf32> -> vector<8x256xf32>
    %452 = arith.truncf %451 : vector<8x256xf32> to vector<8x256xbf16>
    %c5_i32 = arith.constant 5 : i32
    %c0_i32_173 = arith.constant 0 : i32
    %453 = arith.addi %c0_i32_173, %c5_i32 : i32
    %c7_i32_174 = arith.constant 7 : i32
    %454 = arith.subi %c7_i32_174, %453 : i32
    %cst_175 = arith.constant dense<0.000000e+00> : vector<8x1024xf32>
    %455 = tpu.matmul %452, %4, %cst_175 {dimension_numbers = #tpu.dot_dimension_numbers<[1], [0], [0], [1], [0, 0, 1, 1], [], []>} : vector<8x256xbf16>, vector<256x1024xbf16>, vector<8x1024xf32> -> vector<8x1024xf32>
    %456 = vector.extract_strided_slice %455 {offsets = [0, 0], sizes = [8, 512], strides = [1, 1]} : vector<8x1024xf32> to vector<8x512xf32>
    %457 = vector.extract_strided_slice %455 {offsets = [0, 512], sizes = [8, 512], strides = [1, 1]} : vector<8x1024xf32> to vector<8x512xf32>
    %458 = arith.index_cast %c5_i32 : i32 to index
    %c0_176 = arith.constant 0 : index
    %c0_177 = arith.constant 0 : index
    %459 = vector.load %arg13[%458, %c0_176, %c0_177] : memref<8x8x512xf32, #tpu.memory_space<vmem>>, vector<1x8x512xf32>
    %460 = vector.shape_cast %459 : vector<1x8x512xf32> to vector<8x512xf32>
    %461 = arith.addf %460, %456 : vector<8x512xf32>
    %462 = vector.extract_strided_slice %461 {offsets = [0, 0], sizes = [8, 128], strides = [1, 1]} : vector<8x512xf32> to vector<8x128xf32>
    %cst_178 = arith.constant 5.000000e-01 : f32
    %463 = vector.broadcast %cst_178 : f32 to vector<8x128xf32>
    %464 = arith.mulf %463, %462 : vector<8x128xf32>
    %465 = math.tanh %464 : vector<8x128xf32>
    %cst_179 = arith.constant 5.000000e-01 : f32
    %466 = vector.broadcast %cst_179 : f32 to vector<8x128xf32>
    %467 = arith.mulf %466, %465 : vector<8x128xf32>
    %cst_180 = arith.constant 5.000000e-01 : f32
    %468 = vector.broadcast %cst_180 : f32 to vector<8x128xf32>
    %469 = arith.addf %467, %468 : vector<8x128xf32>
    %470 = vector.extract_strided_slice %461 {offsets = [0, 128], sizes = [8, 128], strides = [1, 1]} : vector<8x512xf32> to vector<8x128xf32>
    %cst_181 = arith.constant 5.000000e-01 : f32
    %471 = vector.broadcast %cst_181 : f32 to vector<8x128xf32>
    %472 = arith.mulf %471, %470 : vector<8x128xf32>
    %473 = math.tanh %472 : vector<8x128xf32>
    %cst_182 = arith.constant 5.000000e-01 : f32
    %474 = vector.broadcast %cst_182 : f32 to vector<8x128xf32>
    %475 = arith.mulf %474, %473 : vector<8x128xf32>
    %cst_183 = arith.constant 5.000000e-01 : f32
    %476 = vector.broadcast %cst_183 : f32 to vector<8x128xf32>
    %477 = arith.addf %475, %476 : vector<8x128xf32>
    %478 = vector.extract_strided_slice %461 {offsets = [0, 256], sizes = [8, 128], strides = [1, 1]} : vector<8x512xf32> to vector<8x128xf32>
    %479 = math.tanh %478 : vector<8x128xf32>
    %480 = vector.extract_strided_slice %461 {offsets = [0, 384], sizes = [8, 128], strides = [1, 1]} : vector<8x512xf32> to vector<8x128xf32>
    %cst_184 = arith.constant 5.000000e-01 : f32
    %481 = vector.broadcast %cst_184 : f32 to vector<8x128xf32>
    %482 = arith.mulf %481, %480 : vector<8x128xf32>
    %483 = math.tanh %482 : vector<8x128xf32>
    %cst_185 = arith.constant 5.000000e-01 : f32
    %484 = vector.broadcast %cst_185 : f32 to vector<8x128xf32>
    %485 = arith.mulf %484, %483 : vector<8x128xf32>
    %cst_186 = arith.constant 5.000000e-01 : f32
    %486 = vector.broadcast %cst_186 : f32 to vector<8x128xf32>
    %487 = arith.addf %485, %486 : vector<8x128xf32>
    %488 = arith.mulf %477, %404 : vector<8x128xf32>
    %489 = arith.mulf %469, %479 : vector<8x128xf32>
    %490 = arith.addf %488, %489 : vector<8x128xf32>
    %491 = math.tanh %490 : vector<8x128xf32>
    %492 = arith.mulf %487, %491 : vector<8x128xf32>
    %c7_i32_187 = arith.constant 7 : i32
    %493 = arith.subi %c7_i32_187, %c5_i32 : i32
    %494 = arith.index_cast %493 : i32 to index
    %c0_188 = arith.constant 0 : index
    %c0_189 = arith.constant 0 : index
    %495 = vector.load %arg14[%494, %c0_188, %c0_189] : memref<8x8x512xf32, #tpu.memory_space<vmem>>, vector<1x8x512xf32>
    %496 = vector.shape_cast %495 : vector<1x8x512xf32> to vector<8x512xf32>
    %497 = arith.addf %496, %457 : vector<8x512xf32>
    %498 = vector.extract_strided_slice %497 {offsets = [0, 0], sizes = [8, 128], strides = [1, 1]} : vector<8x512xf32> to vector<8x128xf32>
    %cst_190 = arith.constant 5.000000e-01 : f32
    %499 = vector.broadcast %cst_190 : f32 to vector<8x128xf32>
    %500 = arith.mulf %499, %498 : vector<8x128xf32>
    %501 = math.tanh %500 : vector<8x128xf32>
    %cst_191 = arith.constant 5.000000e-01 : f32
    %502 = vector.broadcast %cst_191 : f32 to vector<8x128xf32>
    %503 = arith.mulf %502, %501 : vector<8x128xf32>
    %cst_192 = arith.constant 5.000000e-01 : f32
    %504 = vector.broadcast %cst_192 : f32 to vector<8x128xf32>
    %505 = arith.addf %503, %504 : vector<8x128xf32>
    %506 = vector.extract_strided_slice %497 {offsets = [0, 128], sizes = [8, 128], strides = [1, 1]} : vector<8x512xf32> to vector<8x128xf32>
    %cst_193 = arith.constant 5.000000e-01 : f32
    %507 = vector.broadcast %cst_193 : f32 to vector<8x128xf32>
    %508 = arith.mulf %507, %506 : vector<8x128xf32>
    %509 = math.tanh %508 : vector<8x128xf32>
    %cst_194 = arith.constant 5.000000e-01 : f32
    %510 = vector.broadcast %cst_194 : f32 to vector<8x128xf32>
    %511 = arith.mulf %510, %509 : vector<8x128xf32>
    %cst_195 = arith.constant 5.000000e-01 : f32
    %512 = vector.broadcast %cst_195 : f32 to vector<8x128xf32>
    %513 = arith.addf %511, %512 : vector<8x128xf32>
    %514 = vector.extract_strided_slice %497 {offsets = [0, 256], sizes = [8, 128], strides = [1, 1]} : vector<8x512xf32> to vector<8x128xf32>
    %515 = math.tanh %514 : vector<8x128xf32>
    %516 = vector.extract_strided_slice %497 {offsets = [0, 384], sizes = [8, 128], strides = [1, 1]} : vector<8x512xf32> to vector<8x128xf32>
    %cst_196 = arith.constant 5.000000e-01 : f32
    %517 = vector.broadcast %cst_196 : f32 to vector<8x128xf32>
    %518 = arith.mulf %517, %516 : vector<8x128xf32>
    %519 = math.tanh %518 : vector<8x128xf32>
    %cst_197 = arith.constant 5.000000e-01 : f32
    %520 = vector.broadcast %cst_197 : f32 to vector<8x128xf32>
    %521 = arith.mulf %520, %519 : vector<8x128xf32>
    %cst_198 = arith.constant 5.000000e-01 : f32
    %522 = vector.broadcast %cst_198 : f32 to vector<8x128xf32>
    %523 = arith.addf %521, %522 : vector<8x128xf32>
    %524 = arith.mulf %513, %440 : vector<8x128xf32>
    %525 = arith.mulf %505, %515 : vector<8x128xf32>
    %526 = arith.addf %524, %525 : vector<8x128xf32>
    %527 = math.tanh %526 : vector<8x128xf32>
    %528 = arith.mulf %523, %527 : vector<8x128xf32>
    %529 = arith.index_cast %453 : i32 to index
    %c0_199 = arith.constant 0 : index
    %c0_200 = arith.constant 0 : index
    %530 = vector.load %arg15[%529, %c0_199, %c0_200] : memref<8x8x128xf32, #tpu.memory_space<vmem>>, vector<1x8x128xf32>
    %531 = vector.shape_cast %530 : vector<1x8x128xf32> to vector<8x128xf32>
    %532 = vector.shape_cast %492 : vector<8x128xf32> to vector<1x8x128xf32>
    tpu.vector_store %arg15[%529, %c0_199, %c0_200], %532 {strides = array<i32>} : memref<8x8x128xf32, #tpu.memory_space<vmem>>, vector<1x8x128xf32>,
    %533 = arith.index_cast %454 : i32 to index
    %c0_201 = arith.constant 0 : index
    %c0_202 = arith.constant 0 : index
    %534 = vector.load %arg16[%533, %c0_201, %c0_202] : memref<8x8x128xf32, #tpu.memory_space<vmem>>, vector<1x8x128xf32>
    %535 = vector.shape_cast %534 : vector<1x8x128xf32> to vector<8x128xf32>
    %536 = vector.shape_cast %528 : vector<8x128xf32> to vector<1x8x128xf32>
    tpu.vector_store %arg16[%533, %c0_201, %c0_202], %536 {strides = array<i32>} : memref<8x8x128xf32, #tpu.memory_space<vmem>>, vector<1x8x128xf32>,
    %537 = tpu.concatenate %492, %528 in 1 : vector<8x128xf32>, vector<8x128xf32> -> vector<8x256xf32>
    %538 = arith.truncf %537 : vector<8x256xf32> to vector<8x256xbf16>
    %c6_i32 = arith.constant 6 : i32
    %c0_i32_203 = arith.constant 0 : i32
    %539 = arith.addi %c0_i32_203, %c6_i32 : i32
    %c7_i32_204 = arith.constant 7 : i32
    %540 = arith.subi %c7_i32_204, %539 : i32
    %cst_205 = arith.constant dense<0.000000e+00> : vector<8x1024xf32>
    %541 = tpu.matmul %538, %4, %cst_205 {dimension_numbers = #tpu.dot_dimension_numbers<[1], [0], [0], [1], [0, 0, 1, 1], [], []>} : vector<8x256xbf16>, vector<256x1024xbf16>, vector<8x1024xf32> -> vector<8x1024xf32>
    %542 = vector.extract_strided_slice %541 {offsets = [0, 0], sizes = [8, 512], strides = [1, 1]} : vector<8x1024xf32> to vector<8x512xf32>
    %543 = vector.extract_strided_slice %541 {offsets = [0, 512], sizes = [8, 512], strides = [1, 1]} : vector<8x1024xf32> to vector<8x512xf32>
    %544 = arith.index_cast %c6_i32 : i32 to index
    %c0_206 = arith.constant 0 : index
    %c0_207 = arith.constant 0 : index
    %545 = vector.load %arg13[%544, %c0_206, %c0_207] : memref<8x8x512xf32, #tpu.memory_space<vmem>>, vector<1x8x512xf32>
    %546 = vector.shape_cast %545 : vector<1x8x512xf32> to vector<8x512xf32>
    %547 = arith.addf %546, %542 : vector<8x512xf32>
    %548 = vector.extract_strided_slice %547 {offsets = [0, 0], sizes = [8, 128], strides = [1, 1]} : vector<8x512xf32> to vector<8x128xf32>
    %cst_208 = arith.constant 5.000000e-01 : f32
    %549 = vector.broadcast %cst_208 : f32 to vector<8x128xf32>
    %550 = arith.mulf %549, %548 : vector<8x128xf32>
    %551 = math.tanh %550 : vector<8x128xf32>
    %cst_209 = arith.constant 5.000000e-01 : f32
    %552 = vector.broadcast %cst_209 : f32 to vector<8x128xf32>
    %553 = arith.mulf %552, %551 : vector<8x128xf32>
    %cst_210 = arith.constant 5.000000e-01 : f32
    %554 = vector.broadcast %cst_210 : f32 to vector<8x128xf32>
    %555 = arith.addf %553, %554 : vector<8x128xf32>
    %556 = vector.extract_strided_slice %547 {offsets = [0, 128], sizes = [8, 128], strides = [1, 1]} : vector<8x512xf32> to vector<8x128xf32>
    %cst_211 = arith.constant 5.000000e-01 : f32
    %557 = vector.broadcast %cst_211 : f32 to vector<8x128xf32>
    %558 = arith.mulf %557, %556 : vector<8x128xf32>
    %559 = math.tanh %558 : vector<8x128xf32>
    %cst_212 = arith.constant 5.000000e-01 : f32
    %560 = vector.broadcast %cst_212 : f32 to vector<8x128xf32>
    %561 = arith.mulf %560, %559 : vector<8x128xf32>
    %cst_213 = arith.constant 5.000000e-01 : f32
    %562 = vector.broadcast %cst_213 : f32 to vector<8x128xf32>
    %563 = arith.addf %561, %562 : vector<8x128xf32>
    %564 = vector.extract_strided_slice %547 {offsets = [0, 256], sizes = [8, 128], strides = [1, 1]} : vector<8x512xf32> to vector<8x128xf32>
    %565 = math.tanh %564 : vector<8x128xf32>
    %566 = vector.extract_strided_slice %547 {offsets = [0, 384], sizes = [8, 128], strides = [1, 1]} : vector<8x512xf32> to vector<8x128xf32>
    %cst_214 = arith.constant 5.000000e-01 : f32
    %567 = vector.broadcast %cst_214 : f32 to vector<8x128xf32>
    %568 = arith.mulf %567, %566 : vector<8x128xf32>
    %569 = math.tanh %568 : vector<8x128xf32>
    %cst_215 = arith.constant 5.000000e-01 : f32
    %570 = vector.broadcast %cst_215 : f32 to vector<8x128xf32>
    %571 = arith.mulf %570, %569 : vector<8x128xf32>
    %cst_216 = arith.constant 5.000000e-01 : f32
    %572 = vector.broadcast %cst_216 : f32 to vector<8x128xf32>
    %573 = arith.addf %571, %572 : vector<8x128xf32>
    %574 = arith.mulf %563, %490 : vector<8x128xf32>
    %575 = arith.mulf %555, %565 : vector<8x128xf32>
    %576 = arith.addf %574, %575 : vector<8x128xf32>
    %577 = math.tanh %576 : vector<8x128xf32>
    %578 = arith.mulf %573, %577 : vector<8x128xf32>
    %c7_i32_217 = arith.constant 7 : i32
    %579 = arith.subi %c7_i32_217, %c6_i32 : i32
    %580 = arith.index_cast %579 : i32 to index
    %c0_218 = arith.constant 0 : index
    %c0_219 = arith.constant 0 : index
    %581 = vector.load %arg14[%580, %c0_218, %c0_219] : memref<8x8x512xf32, #tpu.memory_space<vmem>>, vector<1x8x512xf32>
    %582 = vector.shape_cast %581 : vector<1x8x512xf32> to vector<8x512xf32>
    %583 = arith.addf %582, %543 : vector<8x512xf32>
    %584 = vector.extract_strided_slice %583 {offsets = [0, 0], sizes = [8, 128], strides = [1, 1]} : vector<8x512xf32> to vector<8x128xf32>
    %cst_220 = arith.constant 5.000000e-01 : f32
    %585 = vector.broadcast %cst_220 : f32 to vector<8x128xf32>
    %586 = arith.mulf %585, %584 : vector<8x128xf32>
    %587 = math.tanh %586 : vector<8x128xf32>
    %cst_221 = arith.constant 5.000000e-01 : f32
    %588 = vector.broadcast %cst_221 : f32 to vector<8x128xf32>
    %589 = arith.mulf %588, %587 : vector<8x128xf32>
    %cst_222 = arith.constant 5.000000e-01 : f32
    %590 = vector.broadcast %cst_222 : f32 to vector<8x128xf32>
    %591 = arith.addf %589, %590 : vector<8x128xf32>
    %592 = vector.extract_strided_slice %583 {offsets = [0, 128], sizes = [8, 128], strides = [1, 1]} : vector<8x512xf32> to vector<8x128xf32>
    %cst_223 = arith.constant 5.000000e-01 : f32
    %593 = vector.broadcast %cst_223 : f32 to vector<8x128xf32>
    %594 = arith.mulf %593, %592 : vector<8x128xf32>
    %595 = math.tanh %594 : vector<8x128xf32>
    %cst_224 = arith.constant 5.000000e-01 : f32
    %596 = vector.broadcast %cst_224 : f32 to vector<8x128xf32>
    %597 = arith.mulf %596, %595 : vector<8x128xf32>
    %cst_225 = arith.constant 5.000000e-01 : f32
    %598 = vector.broadcast %cst_225 : f32 to vector<8x128xf32>
    %599 = arith.addf %597, %598 : vector<8x128xf32>
    %600 = vector.extract_strided_slice %583 {offsets = [0, 256], sizes = [8, 128], strides = [1, 1]} : vector<8x512xf32> to vector<8x128xf32>
    %601 = math.tanh %600 : vector<8x128xf32>
    %602 = vector.extract_strided_slice %583 {offsets = [0, 384], sizes = [8, 128], strides = [1, 1]} : vector<8x512xf32> to vector<8x128xf32>
    %cst_226 = arith.constant 5.000000e-01 : f32
    %603 = vector.broadcast %cst_226 : f32 to vector<8x128xf32>
    %604 = arith.mulf %603, %602 : vector<8x128xf32>
    %605 = math.tanh %604 : vector<8x128xf32>
    %cst_227 = arith.constant 5.000000e-01 : f32
    %606 = vector.broadcast %cst_227 : f32 to vector<8x128xf32>
    %607 = arith.mulf %606, %605 : vector<8x128xf32>
    %cst_228 = arith.constant 5.000000e-01 : f32
    %608 = vector.broadcast %cst_228 : f32 to vector<8x128xf32>
    %609 = arith.addf %607, %608 : vector<8x128xf32>
    %610 = arith.mulf %599, %526 : vector<8x128xf32>
    %611 = arith.mulf %591, %601 : vector<8x128xf32>
    %612 = arith.addf %610, %611 : vector<8x128xf32>
    %613 = math.tanh %612 : vector<8x128xf32>
    %614 = arith.mulf %609, %613 : vector<8x128xf32>
    %615 = arith.index_cast %539 : i32 to index
    %c0_229 = arith.constant 0 : index
    %c0_230 = arith.constant 0 : index
    %616 = vector.load %arg15[%615, %c0_229, %c0_230] : memref<8x8x128xf32, #tpu.memory_space<vmem>>, vector<1x8x128xf32>
    %617 = vector.shape_cast %616 : vector<1x8x128xf32> to vector<8x128xf32>
    %618 = vector.shape_cast %578 : vector<8x128xf32> to vector<1x8x128xf32>
    tpu.vector_store %arg15[%615, %c0_229, %c0_230], %618 {strides = array<i32>} : memref<8x8x128xf32, #tpu.memory_space<vmem>>, vector<1x8x128xf32>,
    %619 = arith.index_cast %540 : i32 to index
    %c0_231 = arith.constant 0 : index
    %c0_232 = arith.constant 0 : index
    %620 = vector.load %arg16[%619, %c0_231, %c0_232] : memref<8x8x128xf32, #tpu.memory_space<vmem>>, vector<1x8x128xf32>
    %621 = vector.shape_cast %620 : vector<1x8x128xf32> to vector<8x128xf32>
    %622 = vector.shape_cast %614 : vector<8x128xf32> to vector<1x8x128xf32>
    tpu.vector_store %arg16[%619, %c0_231, %c0_232], %622 {strides = array<i32>} : memref<8x8x128xf32, #tpu.memory_space<vmem>>, vector<1x8x128xf32>,
    %623 = tpu.concatenate %578, %614 in 1 : vector<8x128xf32>, vector<8x128xf32> -> vector<8x256xf32>
    %624 = arith.truncf %623 : vector<8x256xf32> to vector<8x256xbf16>
    %c7_i32_233 = arith.constant 7 : i32
    %c0_i32_234 = arith.constant 0 : i32
    %625 = arith.addi %c0_i32_234, %c7_i32_233 : i32
    %c7_i32_235 = arith.constant 7 : i32
    %626 = arith.subi %c7_i32_235, %625 : i32
    %cst_236 = arith.constant dense<0.000000e+00> : vector<8x1024xf32>
    %627 = tpu.matmul %624, %4, %cst_236 {dimension_numbers = #tpu.dot_dimension_numbers<[1], [0], [0], [1], [0, 0, 1, 1], [], []>} : vector<8x256xbf16>, vector<256x1024xbf16>, vector<8x1024xf32> -> vector<8x1024xf32>
    %628 = vector.extract_strided_slice %627 {offsets = [0, 0], sizes = [8, 512], strides = [1, 1]} : vector<8x1024xf32> to vector<8x512xf32>
    %629 = vector.extract_strided_slice %627 {offsets = [0, 512], sizes = [8, 512], strides = [1, 1]} : vector<8x1024xf32> to vector<8x512xf32>
    %630 = arith.index_cast %c7_i32_233 : i32 to index
    %c0_237 = arith.constant 0 : index
    %c0_238 = arith.constant 0 : index
    %631 = vector.load %arg13[%630, %c0_237, %c0_238] : memref<8x8x512xf32, #tpu.memory_space<vmem>>, vector<1x8x512xf32>
    %632 = vector.shape_cast %631 : vector<1x8x512xf32> to vector<8x512xf32>
    %633 = arith.addf %632, %628 : vector<8x512xf32>
    %634 = vector.extract_strided_slice %633 {offsets = [0, 0], sizes = [8, 128], strides = [1, 1]} : vector<8x512xf32> to vector<8x128xf32>
    %cst_239 = arith.constant 5.000000e-01 : f32
    %635 = vector.broadcast %cst_239 : f32 to vector<8x128xf32>
    %636 = arith.mulf %635, %634 : vector<8x128xf32>
    %637 = math.tanh %636 : vector<8x128xf32>
    %cst_240 = arith.constant 5.000000e-01 : f32
    %638 = vector.broadcast %cst_240 : f32 to vector<8x128xf32>
    %639 = arith.mulf %638, %637 : vector<8x128xf32>
    %cst_241 = arith.constant 5.000000e-01 : f32
    %640 = vector.broadcast %cst_241 : f32 to vector<8x128xf32>
    %641 = arith.addf %639, %640 : vector<8x128xf32>
    %642 = vector.extract_strided_slice %633 {offsets = [0, 128], sizes = [8, 128], strides = [1, 1]} : vector<8x512xf32> to vector<8x128xf32>
    %cst_242 = arith.constant 5.000000e-01 : f32
    %643 = vector.broadcast %cst_242 : f32 to vector<8x128xf32>
    %644 = arith.mulf %643, %642 : vector<8x128xf32>
    %645 = math.tanh %644 : vector<8x128xf32>
    %cst_243 = arith.constant 5.000000e-01 : f32
    %646 = vector.broadcast %cst_243 : f32 to vector<8x128xf32>
    %647 = arith.mulf %646, %645 : vector<8x128xf32>
    %cst_244 = arith.constant 5.000000e-01 : f32
    %648 = vector.broadcast %cst_244 : f32 to vector<8x128xf32>
    %649 = arith.addf %647, %648 : vector<8x128xf32>
    %650 = vector.extract_strided_slice %633 {offsets = [0, 256], sizes = [8, 128], strides = [1, 1]} : vector<8x512xf32> to vector<8x128xf32>
    %651 = math.tanh %650 : vector<8x128xf32>
    %652 = vector.extract_strided_slice %633 {offsets = [0, 384], sizes = [8, 128], strides = [1, 1]} : vector<8x512xf32> to vector<8x128xf32>
    %cst_245 = arith.constant 5.000000e-01 : f32
    %653 = vector.broadcast %cst_245 : f32 to vector<8x128xf32>
    %654 = arith.mulf %653, %652 : vector<8x128xf32>
    %655 = math.tanh %654 : vector<8x128xf32>
    %cst_246 = arith.constant 5.000000e-01 : f32
    %656 = vector.broadcast %cst_246 : f32 to vector<8x128xf32>
    %657 = arith.mulf %656, %655 : vector<8x128xf32>
    %cst_247 = arith.constant 5.000000e-01 : f32
    %658 = vector.broadcast %cst_247 : f32 to vector<8x128xf32>
    %659 = arith.addf %657, %658 : vector<8x128xf32>
    %660 = arith.mulf %649, %576 : vector<8x128xf32>
    %661 = arith.mulf %641, %651 : vector<8x128xf32>
    %662 = arith.addf %660, %661 : vector<8x128xf32>
    %663 = math.tanh %662 : vector<8x128xf32>
    %664 = arith.mulf %659, %663 : vector<8x128xf32>
    %c7_i32_248 = arith.constant 7 : i32
    %665 = arith.subi %c7_i32_248, %c7_i32_233 : i32
    %666 = arith.index_cast %665 : i32 to index
    %c0_249 = arith.constant 0 : index
    %c0_250 = arith.constant 0 : index
    %667 = vector.load %arg14[%666, %c0_249, %c0_250] : memref<8x8x512xf32, #tpu.memory_space<vmem>>, vector<1x8x512xf32>
    %668 = vector.shape_cast %667 : vector<1x8x512xf32> to vector<8x512xf32>
    %669 = arith.addf %668, %629 : vector<8x512xf32>
    %670 = vector.extract_strided_slice %669 {offsets = [0, 0], sizes = [8, 128], strides = [1, 1]} : vector<8x512xf32> to vector<8x128xf32>
    %cst_251 = arith.constant 5.000000e-01 : f32
    %671 = vector.broadcast %cst_251 : f32 to vector<8x128xf32>
    %672 = arith.mulf %671, %670 : vector<8x128xf32>
    %673 = math.tanh %672 : vector<8x128xf32>
    %cst_252 = arith.constant 5.000000e-01 : f32
    %674 = vector.broadcast %cst_252 : f32 to vector<8x128xf32>
    %675 = arith.mulf %674, %673 : vector<8x128xf32>
    %cst_253 = arith.constant 5.000000e-01 : f32
    %676 = vector.broadcast %cst_253 : f32 to vector<8x128xf32>
    %677 = arith.addf %675, %676 : vector<8x128xf32>
    %678 = vector.extract_strided_slice %669 {offsets = [0, 128], sizes = [8, 128], strides = [1, 1]} : vector<8x512xf32> to vector<8x128xf32>
    %cst_254 = arith.constant 5.000000e-01 : f32
    %679 = vector.broadcast %cst_254 : f32 to vector<8x128xf32>
    %680 = arith.mulf %679, %678 : vector<8x128xf32>
    %681 = math.tanh %680 : vector<8x128xf32>
    %cst_255 = arith.constant 5.000000e-01 : f32
    %682 = vector.broadcast %cst_255 : f32 to vector<8x128xf32>
    %683 = arith.mulf %682, %681 : vector<8x128xf32>
    %cst_256 = arith.constant 5.000000e-01 : f32
    %684 = vector.broadcast %cst_256 : f32 to vector<8x128xf32>
    %685 = arith.addf %683, %684 : vector<8x128xf32>
    %686 = vector.extract_strided_slice %669 {offsets = [0, 256], sizes = [8, 128], strides = [1, 1]} : vector<8x512xf32> to vector<8x128xf32>
    %687 = math.tanh %686 : vector<8x128xf32>
    %688 = vector.extract_strided_slice %669 {offsets = [0, 384], sizes = [8, 128], strides = [1, 1]} : vector<8x512xf32> to vector<8x128xf32>
    %cst_257 = arith.constant 5.000000e-01 : f32
    %689 = vector.broadcast %cst_257 : f32 to vector<8x128xf32>
    %690 = arith.mulf %689, %688 : vector<8x128xf32>
    %691 = math.tanh %690 : vector<8x128xf32>
    %cst_258 = arith.constant 5.000000e-01 : f32
    %692 = vector.broadcast %cst_258 : f32 to vector<8x128xf32>
    %693 = arith.mulf %692, %691 : vector<8x128xf32>
    %cst_259 = arith.constant 5.000000e-01 : f32
    %694 = vector.broadcast %cst_259 : f32 to vector<8x128xf32>
    %695 = arith.addf %693, %694 : vector<8x128xf32>
    %696 = arith.mulf %685, %612 : vector<8x128xf32>
    %697 = arith.mulf %677, %687 : vector<8x128xf32>
    %698 = arith.addf %696, %697 : vector<8x128xf32>
    %699 = math.tanh %698 : vector<8x128xf32>
    %700 = arith.mulf %695, %699 : vector<8x128xf32>
    %701 = arith.index_cast %625 : i32 to index
    %c0_260 = arith.constant 0 : index
    %c0_261 = arith.constant 0 : index
    %702 = vector.load %arg15[%701, %c0_260, %c0_261] : memref<8x8x128xf32, #tpu.memory_space<vmem>>, vector<1x8x128xf32>
    %703 = vector.shape_cast %702 : vector<1x8x128xf32> to vector<8x128xf32>
    %704 = vector.shape_cast %664 : vector<8x128xf32> to vector<1x8x128xf32>
    tpu.vector_store %arg15[%701, %c0_260, %c0_261], %704 {strides = array<i32>} : memref<8x8x128xf32, #tpu.memory_space<vmem>>, vector<1x8x128xf32>,
    %705 = arith.index_cast %626 : i32 to index
    %c0_262 = arith.constant 0 : index
    %c0_263 = arith.constant 0 : index
    %706 = vector.load %arg16[%705, %c0_262, %c0_263] : memref<8x8x128xf32, #tpu.memory_space<vmem>>, vector<1x8x128xf32>
    %707 = vector.shape_cast %706 : vector<1x8x128xf32> to vector<8x128xf32>
    %708 = vector.shape_cast %700 : vector<8x128xf32> to vector<1x8x128xf32>
    tpu.vector_store %arg16[%705, %c0_262, %c0_263], %708 {strides = array<i32>} : memref<8x8x128xf32, #tpu.memory_space<vmem>>, vector<1x8x128xf32>,
    %709 = tpu.concatenate %664, %700 in 1 : vector<8x128xf32>, vector<8x128xf32> -> vector<8x256xf32>
    %710 = arith.truncf %709 : vector<8x256xf32> to vector<8x256xbf16>
    %c8_i32 = arith.constant 8 : i32
    %c0_264 = arith.constant 0 : index
    %c0_265 = arith.constant 0 : index
    %c0_266 = arith.constant 0 : index
    %711 = vector.load %arg15[%c0_264, %c0_265, %c0_266] : memref<8x8x128xf32, #tpu.memory_space<vmem>>, vector<8x8x128xf32>
    %712 = vector.shape_cast %711 : vector<8x8x128xf32> to vector<64x128xf32>
    %713 = arith.truncf %712 : vector<64x128xf32> to vector<64x128xbf16>
    %c0_267 = arith.constant 0 : index
    %c0_268 = arith.constant 0 : index
    %c0_269 = arith.constant 0 : index
    %714 = vector.load %arg16[%c0_267, %c0_268, %c0_269] : memref<8x8x128xf32, #tpu.memory_space<vmem>>, vector<8x8x128xf32>
    %715 = vector.shape_cast %714 : vector<8x8x128xf32> to vector<64x128xf32>
    %716 = arith.truncf %715 : vector<64x128xf32> to vector<64x128xbf16>
    %c0_270 = arith.constant 0 : index
    %c0_271 = arith.constant 0 : index
    %717 = vector.load %arg7[%c0_270, %c0_271] : memref<128x128xbf16, #tpu.memory_space<vmem>>, vector<128x128xbf16>
    %cst_272 = arith.constant dense<0.000000e+00> : vector<64x128xf32>
    %718 = tpu.matmul %713, %717, %cst_272 {dimension_numbers = #tpu.dot_dimension_numbers<[1], [0], [0], [1], [0, 0, 1, 1], [], []>} : vector<64x128xbf16>, vector<128x128xbf16>, vector<64x128xf32> -> vector<64x128xf32>
    %c0_273 = arith.constant 0 : index
    %c0_274 = arith.constant 0 : index
    %719 = vector.load %arg8[%c0_273, %c0_274] : memref<128x128xbf16, #tpu.memory_space<vmem>>, vector<128x128xbf16>
    %cst_275 = arith.constant dense<0.000000e+00> : vector<64x128xf32>
    %720 = tpu.matmul %716, %719, %cst_275 {dimension_numbers = #tpu.dot_dimension_numbers<[1], [0], [0], [1], [0, 0, 1, 1], [], []>} : vector<64x128xbf16>, vector<128x128xbf16>, vector<64x128xf32> -> vector<64x128xf32>
    %721 = arith.addf %718, %720 : vector<64x128xf32>
    %c0_276 = arith.constant 0 : index
    %c0_277 = arith.constant 0 : index
    %722 = vector.load %arg9[%c0_276, %c0_277] : memref<1x128xf32, #tpu.memory_space<vmem>>, vector<1x128xf32>
    %723 = vector.broadcast %722 : vector<1x128xf32> to vector<64x128xf32>
    %724 = arith.addf %721, %723 : vector<64x128xf32>
    %cst_278 = arith.constant 0.000000e+00 : f32
    %725 = vector.broadcast %cst_278 : f32 to vector<64x128xf32>
    %726 = arith.maximumf %724, %725 : vector<64x128xf32>
    %727 = arith.truncf %726 : vector<64x128xf32> to vector<64x128xbf16>
    %c0_279 = arith.constant 0 : index
    %c0_280 = arith.constant 0 : index
    %728 = vector.load %arg10[%c0_279, %c0_280] : memref<128x128xbf16, #tpu.memory_space<vmem>>, vector<128x128xbf16>
    %cst_281 = arith.constant dense<0.000000e+00> : vector<64x128xf32>
    %729 = tpu.matmul %727, %728, %cst_281 {dimension_numbers = #tpu.dot_dimension_numbers<[1], [0], [0], [1], [0, 0, 1, 1], [], []>} : vector<64x128xbf16>, vector<128x128xbf16>, vector<64x128xf32> -> vector<64x128xf32>
    %c0_282 = arith.constant 0 : index
    %c0_283 = arith.constant 0 : index
    %730 = vector.load %arg11[%c0_282, %c0_283] : memref<1x128xf32, #tpu.memory_space<vmem>>, vector<1x128xf32>
    %731 = vector.broadcast %730 : vector<1x128xf32> to vector<64x128xf32>
    %732 = arith.addf %729, %731 : vector<64x128xf32>
    %733 = vector.extract_strided_slice %732 {offsets = [0, 0], sizes = [8, 128], strides = [1, 1]} : vector<64x128xf32> to vector<8x128xf32>
    %c0_284 = arith.constant 0 : index
    %c0_285 = arith.constant 0 : index
    %734 = vector.load %arg12[%c0_284, %c0_285] : memref<8x1024xf32, #tpu.memory_space<vmem>>, vector<8x128xf32>
    tpu.vector_store %arg12[%c0_284, %c0_285], %733 {strides = array<i32>} : memref<8x1024xf32, #tpu.memory_space<vmem>>, vector<8x128xf32>,
    %735 = vector.extract_strided_slice %732 {offsets = [8, 0], sizes = [8, 128], strides = [1, 1]} : vector<64x128xf32> to vector<8x128xf32>
    %c0_286 = arith.constant 0 : index
    %c128 = arith.constant 128 : index
    %736 = vector.load %arg12[%c0_286, %c128] : memref<8x1024xf32, #tpu.memory_space<vmem>>, vector<8x128xf32>
    tpu.vector_store %arg12[%c0_286, %c128], %735 {strides = array<i32>} : memref<8x1024xf32, #tpu.memory_space<vmem>>, vector<8x128xf32>,
    %737 = vector.extract_strided_slice %732 {offsets = [16, 0], sizes = [8, 128], strides = [1, 1]} : vector<64x128xf32> to vector<8x128xf32>
    %c0_287 = arith.constant 0 : index
    %c256 = arith.constant 256 : index
    %738 = vector.load %arg12[%c0_287, %c256] : memref<8x1024xf32, #tpu.memory_space<vmem>>, vector<8x128xf32>
    tpu.vector_store %arg12[%c0_287, %c256], %737 {strides = array<i32>} : memref<8x1024xf32, #tpu.memory_space<vmem>>, vector<8x128xf32>,
    %739 = vector.extract_strided_slice %732 {offsets = [24, 0], sizes = [8, 128], strides = [1, 1]} : vector<64x128xf32> to vector<8x128xf32>
    %c0_288 = arith.constant 0 : index
    %c384 = arith.constant 384 : index
    %740 = vector.load %arg12[%c0_288, %c384] : memref<8x1024xf32, #tpu.memory_space<vmem>>, vector<8x128xf32>
    tpu.vector_store %arg12[%c0_288, %c384], %739 {strides = array<i32>} : memref<8x1024xf32, #tpu.memory_space<vmem>>, vector<8x128xf32>,
    %741 = vector.extract_strided_slice %732 {offsets = [32, 0], sizes = [8, 128], strides = [1, 1]} : vector<64x128xf32> to vector<8x128xf32>
    %c0_289 = arith.constant 0 : index
    %c512 = arith.constant 512 : index
    %742 = vector.load %arg12[%c0_289, %c512] : memref<8x1024xf32, #tpu.memory_space<vmem>>, vector<8x128xf32>
    tpu.vector_store %arg12[%c0_289, %c512], %741 {strides = array<i32>} : memref<8x1024xf32, #tpu.memory_space<vmem>>, vector<8x128xf32>,
    %743 = vector.extract_strided_slice %732 {offsets = [40, 0], sizes = [8, 128], strides = [1, 1]} : vector<64x128xf32> to vector<8x128xf32>
    %c0_290 = arith.constant 0 : index
    %c640 = arith.constant 640 : index
    %744 = vector.load %arg12[%c0_290, %c640] : memref<8x1024xf32, #tpu.memory_space<vmem>>, vector<8x128xf32>
    tpu.vector_store %arg12[%c0_290, %c640], %743 {strides = array<i32>} : memref<8x1024xf32, #tpu.memory_space<vmem>>, vector<8x128xf32>,
    %745 = vector.extract_strided_slice %732 {offsets = [48, 0], sizes = [8, 128], strides = [1, 1]} : vector<64x128xf32> to vector<8x128xf32>
    %c0_291 = arith.constant 0 : index
    %c768 = arith.constant 768 : index
    %746 = vector.load %arg12[%c0_291, %c768] : memref<8x1024xf32, #tpu.memory_space<vmem>>, vector<8x128xf32>
    tpu.vector_store %arg12[%c0_291, %c768], %745 {strides = array<i32>} : memref<8x1024xf32, #tpu.memory_space<vmem>>, vector<8x128xf32>,
    %747 = vector.extract_strided_slice %732 {offsets = [56, 0], sizes = [8, 128], strides = [1, 1]} : vector<64x128xf32> to vector<8x128xf32>
    %c0_292 = arith.constant 0 : index
    %c896 = arith.constant 896 : index
    %748 = vector.load %arg12[%c0_292, %c896] : memref<8x1024xf32, #tpu.memory_space<vmem>>, vector<8x128xf32>
    tpu.vector_store %arg12[%c0_292, %c896], %747 {strides = array<i32>} : memref<8x1024xf32, #tpu.memory_space<vmem>>, vector<8x128xf32>,
    return
  }
  func.func @transform_0(%arg0: i32) -> (i32, i32, i32) {
    %c0_i32 = arith.constant 0 : i32
    %c0_i32_0 = arith.constant 0 : i32
    %c0_i32_1 = arith.constant 0 : i32
    return %c0_i32, %arg0, %c0_i32_0 : i32, i32, i32
  }
  func.func @transform_1(%arg0: i32) -> (i32, i32) {
    %c0_i32 = arith.constant 0 : i32
    %c0_i32_0 = arith.constant 0 : i32
    %c0_i32_1 = arith.constant 0 : i32
    return %c0_i32, %c0_i32_0 : i32, i32
  }
  func.func @transform_2(%arg0: i32) -> (i32, i32) {
    %c0_i32 = arith.constant 0 : i32
    %c0_i32_0 = arith.constant 0 : i32
    %c0_i32_1 = arith.constant 0 : i32
    return %c0_i32, %c0_i32_0 : i32, i32
  }
  func.func @transform_3(%arg0: i32) -> (i32, i32) {
    %c0_i32 = arith.constant 0 : i32
    %c0_i32_0 = arith.constant 0 : i32
    %c0_i32_1 = arith.constant 0 : i32
    return %c0_i32, %c0_i32_0 : i32, i32
  }
  func.func @transform_4(%arg0: i32) -> (i32, i32) {
    %c0_i32 = arith.constant 0 : i32
    %c0_i32_0 = arith.constant 0 : i32
    %c0_i32_1 = arith.constant 0 : i32
    return %c0_i32, %c0_i32_0 : i32, i32
  }
  func.func @transform_5(%arg0: i32) -> (i32, i32) {
    %c0_i32 = arith.constant 0 : i32
    %c0_i32_0 = arith.constant 0 : i32
    %c0_i32_1 = arith.constant 0 : i32
    return %c0_i32, %c0_i32_0 : i32, i32
  }
  func.func @transform_6(%arg0: i32) -> (i32, i32) {
    %c0_i32 = arith.constant 0 : i32
    %c0_i32_0 = arith.constant 0 : i32
    %c0_i32_1 = arith.constant 0 : i32
    return %c0_i32, %c0_i32_0 : i32, i32
  }
  func.func @transform_7(%arg0: i32) -> (i32, i32) {
    %c0_i32 = arith.constant 0 : i32
    %c0_i32_0 = arith.constant 0 : i32
    %c0_i32_1 = arith.constant 0 : i32
    return %c0_i32, %c0_i32_0 : i32, i32
  }
  func.func @transform_8(%arg0: i32) -> (i32, i32) {
    %c0_i32 = arith.constant 0 : i32
    %c0_i32_0 = arith.constant 0 : i32
    %c0_i32_1 = arith.constant 0 : i32
    return %c0_i32, %c0_i32_0 : i32, i32
  }
  func.func @transform_9(%arg0: i32) -> (i32, i32) {
    %c0_i32 = arith.constant 0 : i32
    %c0_i32_0 = arith.constant 0 : i32
    %c0_i32_1 = arith.constant 0 : i32
    return %c0_i32, %c0_i32_0 : i32, i32
  }
  func.func @transform_10(%arg0: i32) -> (i32, i32) {
    %c0_i32 = arith.constant 0 : i32
    %c0_i32_0 = arith.constant 0 : i32
    %c0_i32_1 = arith.constant 0 : i32
    return %c0_i32, %c0_i32_0 : i32, i32
  }
  func.func @transform_11(%arg0: i32) -> (i32, i32) {
    %c0_i32 = arith.constant 0 : i32
    %c0_i32_0 = arith.constant 0 : i32
    return %arg0, %c0_i32 : i32, i32
  }
}

</mosaic_0001>

<llo_original>
// kernel: tpu_custom_call.1
$region0: #{tpu_custom_call.1}
  #allocation0 [shape = 'u32[]', space=smem, size = 0x4, offset = 0x4, fixed_abs, tag = 'smem constant byte address 0x4 - core index']
  #allocation1 [shape = 'u32[72,128]{1,0:T(1,128)}', space=vmem, size = 0x9000, scoped, tag = 'internal scratch']
  #allocation2 [shape = 'f32[8,8,512]{2,1,0:T(8,128)}', space=vmem, size = 0x20000, scoped, tag = 'scratch operand']
  #allocation3 [shape = 'f32[8,8,512]{2,1,0:T(8,128)}', space=vmem, size = 0x20000, scoped, tag = 'scratch operand']
  #allocation4 [shape = 'f32[8,8,128]{2,1,0:T(8,128)}', space=vmem, size = 0x8000, scoped, tag = 'scratch operand']
  #allocation5 [shape = 'f32[8,8,128]{2,1,0:T(8,128)}', space=vmem, size = 0x8000, scoped, tag = 'scratch operand']
  %s0 = inlined_call_operand.hbm [shape: f32[8,8,16], index: 0, kind: input, shape index: {}]
  %s1 = inlined_call_operand.hbm [shape: bf16[16,512], index: 1, kind: input, shape index: {}]
  %s2 = inlined_call_operand.hbm [shape: bf16[16,512], index: 2, kind: input, shape index: {}]
  %s3 = inlined_call_operand.hbm [shape: f32[1,512], index: 3, kind: input, shape index: {}]
  %s4 = inlined_call_operand.hbm [shape: f32[1,512], index: 4, kind: input, shape index: {}]
  %s5 = inlined_call_operand.hbm [shape: bf16[256,1024], index: 5, kind: input, shape index: {}]
  %s6 = inlined_call_operand.hbm [shape: bf16[128,128], index: 6, kind: input, shape index: {}]
  %s7 = inlined_call_operand.hbm [shape: bf16[128,128], index: 7, kind: input, shape index: {}]
  %s8 = inlined_call_operand.vmem [shape: f32[1,128], index: 8, kind: input, shape index: {}]
  %s9 = inlined_call_operand.hbm [shape: bf16[128,128], index: 9, kind: input, shape index: {}]
  %s10 = inlined_call_operand.vmem [shape: f32[1,128], index: 10, kind: input, shape index: {}]
  %s11 = inlined_call_operand.hbm [shape: f32[8,1024], index: 11, kind: output, shape index: {}]
  %s12 = sld [smem:[#allocation0]]
  $region90: #{tpu_custom_call.1} parent=0
    _
  %s14 = ssub.s32 1, %s12
  %s15 = scalar_select 0, %s14, %s12
  $region1: #{tpu_custom_call.1} parent=0
    #allocation6 [shape = 'u8[32768]{0}', space=vmem, size = 0x8000, scoped, tag = 'input window, operand 0, single buffered']
    #allocation7 [shape = 's32[1]{0}', space=sflag, size = 0x4, scoped, tag = 'scoped memory for tpu_custom_call.1']
    #allocation8 [shape = 's32[1]{0}', space=sflag, size = 0x4, scoped, tag = 'scoped memory for tpu_custom_call.1']
    #allocation9 [shape = 'u8[16384]{0}', space=vmem, size = 0x4000, scoped, tag = 'input window, operand 1, single buffered']
    #allocation10 [shape = 's32[1]{0}', space=sflag, size = 0x4, scoped, tag = 'scoped memory for tpu_custom_call.1']
    #allocation11 [shape = 'u8[16384]{0}', space=vmem, size = 0x4000, scoped, tag = 'input window, operand 2, single buffered']
    #allocation12 [shape = 'u8[2048]{0}', space=vmem, size = 0x800, scoped, tag = 'input window, operand 3, single buffered']
    #allocation13 [shape = 's32[1]{0}', space=sflag, size = 0x4, scoped, tag = 'scoped memory for tpu_custom_call.1']
    #allocation14 [shape = 'u8[2048]{0}', space=vmem, size = 0x800, scoped, tag = 'input window, operand 4, single buffered']
    #allocation15 [shape = 'u8[524288]{0}', space=vmem, size = 0x80000, scoped, tag = 'input window, operand 5, single buffered']
    #allocation16 [shape = 's32[1]{0}', space=sflag, size = 0x4, scoped, tag = 'scoped memory for tpu_custom_call.1']
    #allocation17 [shape = 'u8[32768]{0}', space=vmem, size = 0x8000, scoped, tag = 'input window, operand 6, single buffered']
    #allocation18 [shape = 'u8[32768]{0}', space=vmem, size = 0x8000, scoped, tag = 'input window, operand 7, single buffered']
    #allocation19 [shape = 's32[1]{0}', space=sflag, size = 0x4, scoped, tag = 'scoped memory for tpu_custom_call.1']
    #allocation20 [shape = 'u8[32768]{0}', space=vmem, size = 0x8000, scoped, tag = 'input window, operand 9, single buffered']
    #allocation21 [shape = 'u8[32768]{0}', space=vmem, size = 0x8000, scoped, tag = 'output window, operand 0, single buffered']
    %16 = vsyncpa [#allocation7], 0
    %17 = vsyncpa [#allocation10], 0
    %18 = vsyncpa [#allocation13], 0
    %19 = vsyncpa [#allocation16], 0
    %20 = vsyncpa [#allocation19], 0
    %21 = vsyncpa [#allocation8], 0
    // Predicated region
    $region2: #{tpu_custom_call.1} parent=1 // pred_check
      _
    $region3: #{tpu_custom_call.1} parent=1 // pred_check_branch
      %23 = sbr.rel (0) target = $region5
    $region4: #{tpu_custom_call.1} parent=1 // pred_region
      %25 = vsyncadd [#allocation7], 0
      %s26 = sshll.u32 %s0, 4
      %s27 = int_to_ptr.hbm [resolvable:$true] %s26
      %s28 = sshll.u32 [#allocation6], 4
      %s29 = int_to_ptr.vmem [resolvable:$true] %s28
      %34 = dma.hbm_to_vmem [thread:$0]  %s27, 1024, %s29, [#allocation7], 128, 128, 8
    $region5: #{tpu_custom_call.1} parent=1 // pred_fallthru
      _
    // Predicated region
    $region6: #{tpu_custom_call.1} parent=1 // pred_check
      _
    $region7: #{tpu_custom_call.1} parent=1 // pred_check_branch
      %36 = sbr.rel (0) target = $region9
    $region8: #{tpu_custom_call.1} parent=1 // pred_region
      %38 = vsyncadd [#allocation10], 0
      %s39 = sshll.u32 %s1, 4
      %s40 = int_to_ptr.hbm [resolvable:$true] %s39
      %s41 = sshll.u32 [#allocation9], 4
      %s42 = int_to_ptr.vmem [resolvable:$true] %s41
      %47 = dma.hbm_to_vmem [thread:$0]  %s40, 512, %s42, [#allocation10], 256, 256, 16
    $region9: #{tpu_custom_call.1} parent=1 // pred_fallthru
      _
    // Predicated region
    $region10: #{tpu_custom_call.1} parent=1 // pred_check
      _
    $region11: #{tpu_custom_call.1} parent=1 // pred_check_branch
      %49 = sbr.rel (0) target = $region13
    $region12: #{tpu_custom_call.1} parent=1 // pred_region
      %51 = vsyncadd [#allocation10], 0
      %s52 = sshll.u32 %s2, 4
      %s53 = int_to_ptr.hbm [resolvable:$true] %s52
      %s54 = sshll.u32 [#allocation11], 4
      %s55 = int_to_ptr.vmem [resolvable:$true] %s54
      %60 = dma.hbm_to_vmem [thread:$0]  %s53, 512, %s55, [#allocation10], 256, 256, 16
    $region13: #{tpu_custom_call.1} parent=1 // pred_fallthru
      _
    // Predicated region
    $region14: #{tpu_custom_call.1} parent=1 // pred_check
      _
    $region15: #{tpu_custom_call.1} parent=1 // pred_check_branch
      %62 = sbr.rel (0) target = $region17
    $region16: #{tpu_custom_call.1} parent=1 // pred_region
      %64 = vsyncadd [#allocation13], 0
      %s66 = sshll.u32 %s3, 4
      %s67 = int_to_ptr.hbm [resolvable:$true] %s66
      %s68 = sshll.u32 [#allocation12], 4
      %s69 = int_to_ptr.vmem [resolvable:$true] %s68
      %71 = dma.hbm_to_vmem [thread:$0]  %s67, 64, %s69, [#allocation13]
    $region17: #{tpu_custom_call.1} parent=1 // pred_fallthru
      _
    // Predicated region
    $region18: #{tpu_custom_call.1} parent=1 // pred_check
      _
    $region19: #{tpu_custom_call.1} parent=1 // pred_check_branch
      %73 = sbr.rel (0) target = $region21
    $region20: #{tpu_custom_call.1} parent=1 // pred_region
      %75 = vsyncadd [#allocation13], 0
      %s77 = sshll.u32 %s4, 4
      %s78 = int_to_ptr.hbm [resolvable:$true] %s77
      %s79 = sshll.u32 [#allocation14], 4
      %s80 = int_to_ptr.vmem [resolvable:$true] %s79
      %82 = dma.hbm_to_vmem [thread:$0]  %s78, 64, %s80, [#allocation13]
    $region21: #{tpu_custom_call.1} parent=1 // pred_fallthru
      _
    // Predicated region
    $region22: #{tpu_custom_call.1} parent=1 // pred_check
      _
    $region23: #{tpu_custom_call.1} parent=1 // pred_check_branch
      %84 = sbr.rel (0) target = $region25
    $region24: #{tpu_custom_call.1} parent=1 // pred_region
      %86 = vsyncadd [#allocation16], 0
      %s87 = sshll.u32 %s5, 4
      %s88 = int_to_ptr.hbm [resolvable:$true] %s87
      %s89 = sshll.u32 [#allocation15], 4
      %s90 = int_to_ptr.vmem [resolvable:$true] %s89
      %95 = dma.hbm_to_vmem [thread:$0]  %s88, 16384, %s90, [#allocation16], 512, 512, 32
    $region25: #{tpu_custom_call.1} parent=1 // pred_fallthru
      _
    // Predicated region
    $region26: #{tpu_custom_call.1} parent=1 // pred_check
      _
    $region27: #{tpu_custom_call.1} parent=1 // pred_check_branch
      %97 = sbr.rel (0) target = $region29
    $region28: #{tpu_custom_call.1} parent=1 // pred_region
      %99 = vsyncadd [#allocation16], 0
      %s100 = sshll.u32 %s6, 4
      %s101 = int_to_ptr.hbm [resolvable:$true] %s100
      %s102 = sshll.u32 [#allocation17], 4
      %s103 = int_to_ptr.vmem [resolvable:$true] %s102
      %108 = dma.hbm_to_vmem [thread:$0]  %s101, 1024, %s103, [#allocation16], 64, 64, 4
    $region29: #{tpu_custom_call.1} parent=1 // pred_fallthru
      _
    // Predicated region
    $region30: #{tpu_custom_call.1} parent=1 // pred_check
      _
    $region31: #{tpu_custom_call.1} parent=1 // pred_check_branch
      %110 = sbr.rel (0) target = $region33
    $region32: #{tpu_custom_call.1} parent=1 // pred_region
      %112 = vsyncadd [#allocation19], 0
      %s113 = sshll.u32 %s7, 4
      %s114 = int_to_ptr.hbm [resolvable:$true] %s113
      %s115 = sshll.u32 [#allocation18], 4
      %s116 = int_to_ptr.vmem [resolvable:$true] %s115
      %121 = dma.hbm_to_vmem [thread:$0]  %s114, 1024, %s116, [#allocation19], 64, 64, 4
    $region33: #{tpu_custom_call.1} parent=1 // pred_fallthru
      _
    // Predicated region
    $region34: #{tpu_custom_call.1} parent=1 // pred_check
      _
    $region35: #{tpu_custom_call.1} parent=1 // pred_check_branch
      %123 = sbr.rel (0) target = $region37
    $region36: #{tpu_custom_call.1} parent=1 // pred_region
      _
    $region37: #{tpu_custom_call.1} parent=1 // pred_fallthru
      _
    // Predicated region
    $region38: #{tpu_custom_call.1} parent=1 // pred_check
      _
    $region39: #{tpu_custom_call.1} parent=1 // pred_check_branch
      %125 = sbr.rel (0) target = $region41
    $region40: #{tpu_custom_call.1} parent=1 // pred_region
      %127 = vsyncadd [#allocation19], 0
      %s128 = sshll.u32 %s9, 4
      %s129 = int_to_ptr.hbm [resolvable:$true] %s128
      %s130 = sshll.u32 [#allocation20], 4
      %s131 = int_to_ptr.vmem [resolvable:$true] %s130
      %136 = dma.hbm_to_vmem [thread:$0]  %s129, 1024, %s131, [#allocation19], 64, 64, 4
    $region41: #{tpu_custom_call.1} parent=1 // pred_fallthru
      _
    // Predicated region
    $region42: #{tpu_custom_call.1} parent=1 // pred_check
      _
    $region43: #{tpu_custom_call.1} parent=1 // pred_check_branch
      %138 = sbr.rel (0) target = $region45
    $region44: #{tpu_custom_call.1} parent=1 // pred_region
      _
    $region45: #{tpu_custom_call.1} parent=1 // pred_fallthru
      _
    // Predicated region
    $region46: #{tpu_custom_call.1} parent=1 // pred_check
      _
    $region47: #{tpu_custom_call.1} parent=1 // pred_check_branch
      %140 = sbr.rel (0) target = $region49
    $region48: #{tpu_custom_call.1} parent=1 // pred_region
      %142 = dma.done [#allocation7], 1024
    $region49: #{tpu_custom_call.1} parent=1 // pred_fallthru
      _
    // Predicated region
    $region50: #{tpu_custom_call.1} parent=1 // pred_check
      _
    $region51: #{tpu_custom_call.1} parent=1 // pred_check_branch
      %144 = sbr.rel (0) target = $region53
    $region52: #{tpu_custom_call.1} parent=1 // pred_region
      %146 = dma.done [#allocation10], 512
    $region53: #{tpu_custom_call.1} parent=1 // pred_fallthru
      _
    // Predicated region
    $region54: #{tpu_custom_call.1} parent=1 // pred_check
      _
    $region55: #{tpu_custom_call.1} parent=1 // pred_check_branch
      %148 = sbr.rel (0) target = $region57
    $region56: #{tpu_custom_call.1} parent=1 // pred_region
      %150 = dma.done [#allocation10], 512
    $region57: #{tpu_custom_call.1} parent=1 // pred_fallthru
      _
    // Predicated region
    $region58: #{tpu_custom_call.1} parent=1 // pred_check
      _
    $region59: #{tpu_custom_call.1} parent=1 // pred_check_branch
      %152 = sbr.rel (0) target = $region61
    $region60: #{tpu_custom_call.1} parent=1 // pred_region
      %154 = dma.done [#allocation13], 64
    $region61: #{tpu_custom_call.1} parent=1 // pred_fallthru
      _
    // Predicated region
    $region62: #{tpu_custom_call.1} parent=1 // pred_check
      _
    $region63: #{tpu_custom_call.1} parent=1 // pred_check_branch
      %156 = sbr.rel (0) target = $region65
    $region64: #{tpu_custom_call.1} parent=1 // pred_region
      %158 = dma.done [#allocation13], 64
    $region65: #{tpu_custom_call.1} parent=1 // pred_fallthru
      _
    // Predicated region
    $region66: #{tpu_custom_call.1} parent=1 // pred_check
      _
    $region67: #{tpu_custom_call.1} parent=1 // pred_check_branch
      %160 = sbr.rel (0) target = $region69
    $region68: #{tpu_custom_call.1} parent=1 // pred_region
      %162 = dma.done [#allocation16], 16384
    $region69: #{tpu_custom_call.1} parent=1 // pred_fallthru
      _
    // Predicated region
    $region70: #{tpu_custom_call.1} parent=1 // pred_check
      _
    $region71: #{tpu_custom_call.1} parent=1 // pred_check_branch
      %164 = sbr.rel (0) target = $region73
    $region72: #{tpu_custom_call.1} parent=1 // pred_region
      %166 = dma.done [#allocation16], 1024
    $region73: #{tpu_custom_call.1} parent=1 // pred_fallthru
      _
    // Predicated region
    $region74: #{tpu_custom_call.1} parent=1 // pred_check
      _
    $region75: #{tpu_custom_call.1} parent=1 // pred_check_branch
      %168 = sbr.rel (0) target = $region77
    $region76: #{tpu_custom_call.1} parent=1 // pred_region
      %170 = dma.done [#allocation19], 1024
    $region77: #{tpu_custom_call.1} parent=1 // pred_fallthru
      _
    // Predicated region
    $region78: #{tpu_custom_call.1} parent=1 // pred_check
      _
    $region79: #{tpu_custom_call.1} parent=1 // pred_check_branch
      %172 = sbr.rel (0) target = $region81
    $region80: #{tpu_custom_call.1} parent=1 // pred_region
      %174 = dma.done [#allocation19], 1024
    $region81: #{tpu_custom_call.1} parent=1 // pred_fallthru
      _
    %v176 = vld [vmem:[#allocation9] sm:$0xff]
    %v177 = vld [vmem:[#allocation9 + $0x8] sm:$0xff]
    %v178 = vld [vmem:[#allocation9 + $0x10] sm:$0xff]
    %v179 = vld [vmem:[#allocation9 + $0x18] sm:$0xff]
    %v180 = vld [vmem:[#allocation11] sm:$0xff]
    %v181 = vld [vmem:[#allocation11 + $0x8] sm:$0xff]
    %v182 = vld [vmem:[#allocation11 + $0x10] sm:$0xff]
    %v183 = vld [vmem:[#allocation11 + $0x18] sm:$0xff]
    %v184 = vld [vmem:[#allocation12] sm:$0xf]
    %v185 = vld [vmem:[#allocation14] sm:$0xf]
    %v186 = vld [vmem:[#allocation15] sm:$0xff]
    %v187 = vld [vmem:[#allocation15 + $0x8] sm:$0xff]
    %v188 = vld [vmem:[#allocation15 + $0x10] sm:$0xff]
    %v189 = vld [vmem:[#allocation15 + $0x18] sm:$0xff]
    %v190 = vld [vmem:[#allocation15 + $0x20] sm:$0xff]
    %v191 = vld [vmem:[#allocation15 + $0x28] sm:$0xff]
    %v192 = vld [vmem:[#allocation15 + $0x30] sm:$0xff]
    %v193 = vld [vmem:[#allocation15 + $0x38] sm:$0xff]
    %v194 = vld [vmem:[#allocation15 + $0x40] sm:$0xff]
    %v195 = vld [vmem:[#allocation15 + $0x48] sm:$0xff]
    %v196 = vld [vmem:[#allocation15 + $0x50] sm:$0xff]
    %v197 = vld [vmem:[#allocation15 + $0x58] sm:$0xff]
    %v198 = vld [vmem:[#allocation15 + $0x60] sm:$0xff]
    %v199 = vld [vmem:[#allocation15 + $0x68] sm:$0xff]
    %v200 = vld [vmem:[#allocation15 + $0x70] sm:$0xff]
    %v201 = vld [vmem:[#allocation15 + $0x78] sm:$0xff]
    %v202 = vld [vmem:[#allocation15 + $0x80] sm:$0xff]
    %v203 = vld [vmem:[#allocation15 + $0x88] sm:$0xff]
    %v204 = vld [vmem:[#allocation15 + $0x90] sm:$0xff]
    %v205 = vld [vmem:[#allocation15 + $0x98] sm:$0xff]
    %v206 = vld [vmem:[#allocation15 + $0xa0] sm:$0xff]
    %v207 = vld [vmem:[#allocation15 + $0xa8] sm:$0xff]
    %v208 = vld [vmem:[#allocation15 + $0xb0] sm:$0xff]
    %v209 = vld [vmem:[#allocation15 + $0xb8] sm:$0xff]
    %v210 = vld [vmem:[#allocation15 + $0xc0] sm:$0xff]
    %v211 = vld [vmem:[#allocation15 + $0xc8] sm:$0xff]
    %v212 = vld [vmem:[#allocation15 + $0xd0] sm:$0xff]
    %v213 = vld [vmem:[#allocation15 + $0xd8] sm:$0xff]
    %v214 = vld [vmem:[#allocation15 + $0xe0] sm:$0xff]
    %v215 = vld [vmem:[#allocation15 + $0xe8] sm:$0xff]
    %v216 = vld [vmem:[#allocation15 + $0xf0] sm:$0xff]
    %v217 = vld [vmem:[#allocation15 + $0xf8] sm:$0xff]
    %v218 = vld [vmem:[#allocation15 + $0x100] sm:$0xff]
    %v219 = vld [vmem:[#allocation15 + $0x108] sm:$0xff]
    %v220 = vld [vmem:[#allocation15 + $0x110] sm:$0xff]
    %v221 = vld [vmem:[#allocation15 + $0x118] sm:$0xff]
    %v222 = vld [vmem:[#allocation15 + $0x120] sm:$0xff]
    %v223 = vld [vmem:[#allocation15 + $0x128] sm:$0xff]
    %v224 = vld [vmem:[#allocation15 + $0x130] sm:$0xff]
    %v225 = vld [vmem:[#allocation15 + $0x138] sm:$0xff]
    %v226 = vld [vmem:[#allocation15 + $0x140] sm:$0xff]
    %v227 = vld [vmem:[#allocation15 + $0x148] sm:$0xff]
    %v228 = vld [vmem:[#allocation15 + $0x150] sm:$0xff]
    %v229 = vld [vmem:[#allocation15 + $0x158] sm:$0xff]
    %v230 = vld [vmem:[#allocation15 + $0x160] sm:$0xff]
    %v231 = vld [vmem:[#allocation15 + $0x168] sm:$0xff]
    %v232 = vld [vmem:[#allocation15 + $0x170] sm:$0xff]
    %v233 = vld [vmem:[#allocation15 + $0x178] sm:$0xff]
    %v234 = vld [vmem:[#allocation15 + $0x180] sm:$0xff]
    %v235 = vld [vmem:[#allocation15 + $0x188] sm:$0xff]
    %v236 = vld [vmem:[#allocation15 + $0x190] sm:$0xff]
    %v237 = vld [vmem:[#allocation15 + $0x198] sm:$0xff]
    %v238 = vld [vmem:[#allocation15 + $0x1a0] sm:$0xff]
    %v239 = vld [vmem:[#allocation15 + $0x1a8] sm:$0xff]
    %v240 = vld [vmem:[#allocation15 + $0x1b0] sm:$0xff]
    %v241 = vld [vmem:[#allocation15 + $0x1b8] sm:$0xff]
    %v242 = vld [vmem:[#allocation15 + $0x1c0] sm:$0xff]
    %v243 = vld [vmem:[#allocation15 + $0x1c8] sm:$0xff]
    %v244 = vld [vmem:[#allocation15 + $0x1d0] sm:$0xff]
    %v245 = vld [vmem:[#allocation15 + $0x1d8] sm:$0xff]
    %v246 = vld [vmem:[#allocation15 + $0x1e0] sm:$0xff]
    %v247 = vld [vmem:[#allocation15 + $0x1e8] sm:$0xff]
    %v248 = vld [vmem:[#allocation15 + $0x1f0] sm:$0xff]
    %v249 = vld [vmem:[#allocation15 + $0x1f8] sm:$0xff]
    %v250 = vld [vmem:[#allocation15 + $0x200] sm:$0xff]
    %v251 = vld [vmem:[#allocation15 + $0x208] sm:$0xff]
    %v252 = vld [vmem:[#allocation15 + $0x210] sm:$0xff]
    %v253 = vld [vmem:[#allocation15 + $0x218] sm:$0xff]
    %v254 = vld [vmem:[#allocation15 + $0x220] sm:$0xff]
    %v255 = vld [vmem:[#allocation15 + $0x228] sm:$0xff]
    %v256 = vld [vmem:[#allocation15 + $0x230] sm:$0xff]
    %v257 = vld [vmem:[#allocation15 + $0x238] sm:$0xff]
    %v258 = vld [vmem:[#allocation15 + $0x240] sm:$0xff]
    %v259 = vld [vmem:[#allocation15 + $0x248] sm:$0xff]
    %v260 = vld [vmem:[#allocation15 + $0x250] sm:$0xff]
    %v261 = vld [vmem:[#allocation15 + $0x258] sm:$0xff]
    %v262 = vld [vmem:[#allocation15 + $0x260] sm:$0xff]
    %v263 = vld [vmem:[#allocation15 + $0x268] sm:$0xff]
    %v264 = vld [vmem:[#allocation15 + $0x270] sm:$0xff]
    %v265 = vld [vmem:[#allocation15 + $0x278] sm:$0xff]
    %v266 = vld [vmem:[#allocation15 + $0x280] sm:$0xff]
    %v267 = vld [vmem:[#allocation15 + $0x288] sm:$0xff]
    %v268 = vld [vmem:[#allocation15 + $0x290] sm:$0xff]
    %v269 = vld [vmem:[#allocation15 + $0x298] sm:$0xff]
    %v270 = vld [vmem:[#allocation15 + $0x2a0] sm:$0xff]
    %v271 = vld [vmem:[#allocation15 + $0x2a8] sm:$0xff]
    %v272 = vld [vmem:[#allocation15 + $0x2b0] sm:$0xff]
    %v273 = vld [vmem:[#allocation15 + $0x2b8] sm:$0xff]
    %v274 = vld [vmem:[#allocation15 + $0x2c0] sm:$0xff]
    %v275 = vld [vmem:[#allocation15 + $0x2c8] sm:$0xff]
    %v276 = vld [vmem:[#allocation15 + $0x2d0] sm:$0xff]
    %v277 = vld [vmem:[#allocation15 + $0x2d8] sm:$0xff]
    %v278 = vld [vmem:[#allocation15 + $0x2e0] sm:$0xff]
    %v279 = vld [vmem:[#allocation15 + $0x2e8] sm:$0xff]
    %v280 = vld [vmem:[#allocation15 + $0x2f0] sm:$0xff]
    %v281 = vld [vmem:[#allocation15 + $0x2f8] sm:$0xff]
    %v282 = vld [vmem:[#allocation15 + $0x300] sm:$0xff]
    %v283 = vld [vmem:[#allocation15 + $0x308] sm:$0xff]
    %v284 = vld [vmem:[#allocation15 + $0x310] sm:$0xff]
    %v285 = vld [vmem:[#allocation15 + $0x318] sm:$0xff]
    %v286 = vld [vmem:[#allocation15 + $0x320] sm:$0xff]
    %v287 = vld [vmem:[#allocation15 + $0x328] sm:$0xff]
    %v288 = vld [vmem:[#allocation15 + $0x330] sm:$0xff]
    %v289 = vld [vmem:[#allocation15 + $0x338] sm:$0xff]
    %v290 = vld [vmem:[#allocation15 + $0x340] sm:$0xff]
    %v291 = vld [vmem:[#allocation15 + $0x348] sm:$0xff]
    %v292 = vld [vmem:[#allocation15 + $0x350] sm:$0xff]
    %v293 = vld [vmem:[#allocation15 + $0x358] sm:$0xff]
    %v294 = vld [vmem:[#allocation15 + $0x360] sm:$0xff]
    %v295 = vld [vmem:[#allocation15 + $0x368] sm:$0xff]
    %v296 = vld [vmem:[#allocation15 + $0x370] sm:$0xff]
    %v297 = vld [vmem:[#allocation15 + $0x378] sm:$0xff]
    %v298 = vld [vmem:[#allocation15 + $0x380] sm:$0xff]
    %v299 = vld [vmem:[#allocation15 + $0x388] sm:$0xff]
    %v300 = vld [vmem:[#allocation15 + $0x390] sm:$0xff]
    %v301 = vld [vmem:[#allocation15 + $0x398] sm:$0xff]
    %v302 = vld [vmem:[#allocation15 + $0x3a0] sm:$0xff]
    %v303 = vld [vmem:[#allocation15 + $0x3a8] sm:$0xff]
    %v304 = vld [vmem:[#allocation15 + $0x3b0] sm:$0xff]
    %v305 = vld [vmem:[#allocation15 + $0x3b8] sm:$0xff]
    %v306 = vld [vmem:[#allocation15 + $0x3c0] sm:$0xff]
    %v307 = vld [vmem:[#allocation15 + $0x3c8] sm:$0xff]
    %v308 = vld [vmem:[#allocation15 + $0x3d0] sm:$0xff]
    %v309 = vld [vmem:[#allocation15 + $0x3d8] sm:$0xff]
    %v310 = vld [vmem:[#allocation15 + $0x3e0] sm:$0xff]
    %v311 = vld [vmem:[#allocation15 + $0x3e8] sm:$0xff]
    %v312 = vld [vmem:[#allocation15 + $0x3f0] sm:$0xff]
    %v313 = vld [vmem:[#allocation15 + $0x3f8] sm:$0xff]
    %v314 = vld [vmem:[#allocation6] sm:$0xff]
    %v315 = vld [vmem:[#allocation6 + $0x8] sm:$0xff]
    %v316 = vld [vmem:[#allocation6 + $0x10] sm:$0xff]
    %v317 = vld [vmem:[#allocation6 + $0x18] sm:$0xff]
    %v318 = vld [vmem:[#allocation6 + $0x20] sm:$0xff]
    %v319 = vld [vmem:[#allocation6 + $0x28] sm:$0xff]
    %v320 = vld [vmem:[#allocation6 + $0x30] sm:$0xff]
    %v321 = vld [vmem:[#allocation6 + $0x38] sm:$0xff]
    %v322 = vpack.c.bf16 %v315, %v314
    %v323 = vpack.c.bf16 %v317, %v316
    %v324 = vpack.c.bf16 %v319, %v318
    %v325 = vpack.c.bf16 %v321, %v320
    %v327 = vperm.slane %v184, 0
    %v328 = vperm.slane %v184, 1
    %v329 = vperm.slane %v184, 2
    %v330 = vperm.slane %v184, 3
    %v339 = vunpack.c.l.b16 %v176
    %v340 = vunpack.c.h.b16 %v176
    %v341 = vunpack.c.l.b16 %v177
    %v342 = vunpack.c.h.b16 %v177
    %v343 = vunpack.c.l.b16 %v178
    %v344 = vunpack.c.h.b16 %v178
    %v345 = vunpack.c.l.b16 %v179
    %v346 = vunpack.c.h.b16 %v179
    %v347 = vpack.c.b16 %v343, %v339
    %v348 = vpack.c.b16 %v344, %v340
    %v349 = vpack.c.b16 %v345, %v341
    %v350 = vpack.c.b16 %v346, %v342
    %vm355 = vcmask 130048
    %v357 = vsel %vm355, %v322, 0
    %v360 = vsel %vm355, %v323, 0
    %v363 = vsel %vm355, %v324, 0
    %v366 = vsel %vm355, %v325, 0
    %368 = vmatpush.bf16.msra.mxu0 0
    %369 = vmatpush.bf16.msra.mxu0 0
    %370 = vmatpush.bf16.msra.mxu0 0
    %371 = vmatpush.bf16.msra.mxu0 0
    %372 = vmatpush.bf16.msra.mxu0 0
    %373 = vmatpush.bf16.msra.mxu0 0
    %374 = vmatpush.bf16.msra.mxu0 0
    %375 = vmatpush.bf16.msra.mxu0 %v347
    %376 = vmatmul.bf16.gmra.mxu0 %v357
    %v377 = vpop.f32.mrf.mxu0
    %v378 = vadd.f32 %v327, %v377
    %v379 = vpop.f32.mrf.mxu0
    %v380 = vadd.f32 %v327, %v379
    %381 = vmatmul.bf16.gmra.mxu0 %v360
    %v382 = vpop.f32.mrf.mxu0
    %v383 = vadd.f32 %v327, %v382
    %v384 = vpop.f32.mrf.mxu0
    %v385 = vadd.f32 %v327, %v384
    %386 = vmatmul.bf16.gmra.mxu0 %v363
    %v387 = vpop.f32.mrf.mxu0
    %v388 = vadd.f32 %v327, %v387
    %v389 = vpop.f32.mrf.mxu0
    %v390 = vadd.f32 %v327, %v389
    %391 = vmatmul.bf16.gmra.mxu0 %v366
    %v392 = vpop.f32.mrf.mxu0
    %v393 = vadd.f32 %v327, %v392
    %v394 = vpop.f32.mrf.mxu0
    %v395 = vadd.f32 %v327, %v394
    %396 = vdwg.mxu0
    %397 = vmatpush.bf16.msra.mxu0 0
    %398 = vmatpush.bf16.msra.mxu0 0
    %399 = vmatpush.bf16.msra.mxu0 0
    %400 = vmatpush.bf16.msra.mxu0 0
    %401 = vmatpush.bf16.msra.mxu0 0
    %402 = vmatpush.bf16.msra.mxu0 0
    %403 = vmatpush.bf16.msra.mxu0 0
    %404 = vmatpush.bf16.msra.mxu0 %v348
    %405 = vmatmul.bf16.gmra.mxu0 %v357
    %v406 = vpop.f32.mrf.mxu0
    %v407 = vadd.f32 %v328, %v406
    %v408 = vpop.f32.mrf.mxu0
    %v409 = vadd.f32 %v328, %v408
    %410 = vmatmul.bf16.gmra.mxu0 %v360
    %v411 = vpop.f32.mrf.mxu0
    %v412 = vadd.f32 %v328, %v411
    %v413 = vpop.f32.mrf.mxu0
    %v414 = vadd.f32 %v328, %v413
    %415 = vmatmul.bf16.gmra.mxu0 %v363
    %v416 = vpop.f32.mrf.mxu0
    %v417 = vadd.f32 %v328, %v416
    %v418 = vpop.f32.mrf.mxu0
    %v419 = vadd.f32 %v328, %v418
    %420 = vmatmul.bf16.gmra.mxu0 %v366
    %v421 = vpop.f32.mrf.mxu0
    %v422 = vadd.f32 %v328, %v421
    %v423 = vpop.f32.mrf.mxu0
    %v424 = vadd.f32 %v328, %v423
    %425 = vdwg.mxu0
    %426 = vmatpush.bf16.msra.mxu0 0
    %427 = vmatpush.bf16.msra.mxu0 0
    %428 = vmatpush.bf16.msra.mxu0 0
    %429 = vmatpush.bf16.msra.mxu0 0
    %430 = vmatpush.bf16.msra.mxu0 0
    %431 = vmatpush.bf16.msra.mxu0 0
    %432 = vmatpush.bf16.msra.mxu0 0
    %433 = vmatpush.bf16.msra.mxu0 %v349
    %434 = vmatmul.bf16.gmra.mxu0 %v357
    %v435 = vpop.f32.mrf.mxu0
    %v436 = vadd.f32 %v329, %v435
    %v437 = vpop.f32.mrf.mxu0
    %v438 = vadd.f32 %v329, %v437
    %439 = vmatmul.bf16.gmra.mxu0 %v360
    %v440 = vpop.f32.mrf.mxu0
    %v441 = vadd.f32 %v329, %v440
    %v442 = vpop.f32.mrf.mxu0
    %v443 = vadd.f32 %v329, %v442
    %444 = vmatmul.bf16.gmra.mxu0 %v363
    %v445 = vpop.f32.mrf.mxu0
    %v446 = vadd.f32 %v329, %v445
    %v447 = vpop.f32.mrf.mxu0
    %v448 = vadd.f32 %v329, %v447
    %449 = vmatmul.bf16.gmra.mxu0 %v366
    %v450 = vpop.f32.mrf.mxu0
    %v451 = vadd.f32 %v329, %v450
    %v452 = vpop.f32.mrf.mxu0
    %v453 = vadd.f32 %v329, %v452
    %454 = vdwg.mxu0
    %455 = vmatpush.bf16.msra.mxu0 0
    %456 = vmatpush.bf16.msra.mxu0 0
    %457 = vmatpush.bf16.msra.mxu0 0
    %458 = vmatpush.bf16.msra.mxu0 0
    %459 = vmatpush.bf16.msra.mxu0 0
    %460 = vmatpush.bf16.msra.mxu0 0
    %461 = vmatpush.bf16.msra.mxu0 0
    %462 = vmatpush.bf16.msra.mxu0 %v350
    %463 = vmatmul.bf16.gmra.mxu0 %v357
    %v464 = vpop.f32.mrf.mxu0
    %v465 = vadd.f32 %v330, %v464
    %v466 = vpop.f32.mrf.mxu0
    %v467 = vadd.f32 %v330, %v466
    %468 = vmatmul.bf16.gmra.mxu0 %v360
    %v469 = vpop.f32.mrf.mxu0
    %v470 = vadd.f32 %v330, %v469
    %v471 = vpop.f32.mrf.mxu0
    %v472 = vadd.f32 %v330, %v471
    %473 = vmatmul.bf16.gmra.mxu0 %v363
    %v474 = vpop.f32.mrf.mxu0
    %v475 = vadd.f32 %v330, %v474
    %v476 = vpop.f32.mrf.mxu0
    %v477 = vadd.f32 %v330, %v476
    %478 = vmatmul.bf16.gmra.mxu0 %v366
    %v479 = vpop.f32.mrf.mxu0
    %v480 = vadd.f32 %v330, %v479
    %v481 = vpop.f32.mrf.mxu0
    %v482 = vadd.f32 %v330, %v481
    %483 = vdwg.mxu0
    %484 = vst [vmem:[#allocation2] sm:$0xff] %v378
    %485 = vst [vmem:[#allocation2 + $0x8] sm:$0xff] %v407
    %486 = vst [vmem:[#allocation2 + $0x10] sm:$0xff] %v436
    %487 = vst [vmem:[#allocation2 + $0x18] sm:$0xff] %v465
    %488 = vst [vmem:[#allocation2 + $0x20] sm:$0xff] %v380
    %489 = vst [vmem:[#allocation2 + $0x28] sm:$0xff] %v409
    %490 = vst [vmem:[#allocation2 + $0x30] sm:$0xff] %v438
    %491 = vst [vmem:[#allocation2 + $0x38] sm:$0xff] %v467
    %492 = vst [vmem:[#allocation2 + $0x40] sm:$0xff] %v383
    %493 = vst [vmem:[#allocation2 + $0x48] sm:$0xff] %v412
    %494 = vst [vmem:[#allocation2 + $0x50] sm:$0xff] %v441
    %495 = vst [vmem:[#allocation2 + $0x58] sm:$0xff] %v470
    %496 = vst [vmem:[#allocation2 + $0x60] sm:$0xff] %v385
    %497 = vst [vmem:[#allocation2 + $0x68] sm:$0xff] %v414
    %498 = vst [vmem:[#allocation2 + $0x70] sm:$0xff] %v443
    %499 = vst [vmem:[#allocation2 + $0x78] sm:$0xff] %v472
    %500 = vst [vmem:[#allocation2 + $0x80] sm:$0xff] %v388
    %501 = vst [vmem:[#allocation2 + $0x88] sm:$0xff] %v417
    %502 = vst [vmem:[#allocation2 + $0x90] sm:$0xff] %v446
    %503 = vst [vmem:[#allocation2 + $0x98] sm:$0xff] %v475
    %504 = vst [vmem:[#allocation2 + $0xa0] sm:$0xff] %v390
    %505 = vst [vmem:[#allocation2 + $0xa8] sm:$0xff] %v419
    %506 = vst [vmem:[#allocation2 + $0xb0] sm:$0xff] %v448
    %507 = vst [vmem:[#allocation2 + $0xb8] sm:$0xff] %v477
    %508 = vst [vmem:[#allocation2 + $0xc0] sm:$0xff] %v393
    %509 = vst [vmem:[#allocation2 + $0xc8] sm:$0xff] %v422
    %510 = vst [vmem:[#allocation2 + $0xd0] sm:$0xff] %v451
    %511 = vst [vmem:[#allocation2 + $0xd8] sm:$0xff] %v480
    %512 = vst [vmem:[#allocation2 + $0xe0] sm:$0xff] %v395
    %513 = vst [vmem:[#allocation2 + $0xe8] sm:$0xff] %v424
    %514 = vst [vmem:[#allocation2 + $0xf0] sm:$0xff] %v453
    %515 = vst [vmem:[#allocation2 + $0xf8] sm:$0xff] %v482
    %v517 = vperm.slane %v185, 0
    %v518 = vperm.slane %v185, 1
    %v519 = vperm.slane %v185, 2
    %v520 = vperm.slane %v185, 3
    %v529 = vunpack.c.l.b16 %v180
    %v530 = vunpack.c.h.b16 %v180
    %v531 = vunpack.c.l.b16 %v181
    %v532 = vunpack.c.h.b16 %v181
    %v533 = vunpack.c.l.b16 %v182
    %v534 = vunpack.c.h.b16 %v182
    %v535 = vunpack.c.l.b16 %v183
    %v536 = vunpack.c.h.b16 %v183
    %v537 = vpack.c.b16 %v533, %v529
    %v538 = vpack.c.b16 %v534, %v530
    %v539 = vpack.c.b16 %v535, %v531
    %v540 = vpack.c.b16 %v536, %v532
    %545 = vmatpush.bf16.msra.mxu0 0
    %546 = vmatpush.bf16.msra.mxu0 0
    %547 = vmatpush.bf16.msra.mxu0 0
    %548 = vmatpush.bf16.msra.mxu0 0
    %549 = vmatpush.bf16.msra.mxu0 0
    %550 = vmatpush.bf16.msra.mxu0 0
    %551 = vmatpush.bf16.msra.mxu0 0
    %552 = vmatpush.bf16.msra.mxu0 %v537
    %553 = vmatmul.bf16.gmra.mxu0 %v357
    %v554 = vpop.f32.mrf.mxu0
    %v555 = vadd.f32 %v517, %v554
    %v556 = vpop.f32.mrf.mxu0
    %v557 = vadd.f32 %v517, %v556
    %558 = vmatmul.bf16.gmra.mxu0 %v360
    %v559 = vpop.f32.mrf.mxu0
    %v560 = vadd.f32 %v517, %v559
    %v561 = vpop.f32.mrf.mxu0
    %v562 = vadd.f32 %v517, %v561
    %563 = vmatmul.bf16.gmra.mxu0 %v363
    %v564 = vpop.f32.mrf.mxu0
    %v565 = vadd.f32 %v517, %v564
    %v566 = vpop.f32.mrf.mxu0
    %v567 = vadd.f32 %v517, %v566
    %568 = vmatmul.bf16.gmra.mxu0 %v366
    %v569 = vpop.f32.mrf.mxu0
    %v570 = vadd.f32 %v517, %v569
    %v571 = vpop.f32.mrf.mxu0
    %v572 = vadd.f32 %v517, %v571
    %573 = vdwg.mxu0
    %574 = vmatpush.bf16.msra.mxu0 0
    %575 = vmatpush.bf16.msra.mxu0 0
    %576 = vmatpush.bf16.msra.mxu0 0
    %577 = vmatpush.bf16.msra.mxu0 0
    %578 = vmatpush.bf16.msra.mxu0 0
    %579 = vmatpush.bf16.msra.mxu0 0
    %580 = vmatpush.bf16.msra.mxu0 0
    %581 = vmatpush.bf16.msra.mxu0 %v538
    %582 = vmatmul.bf16.gmra.mxu0 %v357
    %v583 = vpop.f32.mrf.mxu0
    %v584 = vadd.f32 %v518, %v583
    %v585 = vpop.f32.mrf.mxu0
    %v586 = vadd.f32 %v518, %v585
    %587 = vmatmul.bf16.gmra.mxu0 %v360
    %v588 = vpop.f32.mrf.mxu0
    %v589 = vadd.f32 %v518, %v588
    %v590 = vpop.f32.mrf.mxu0
    %v591 = vadd.f32 %v518, %v590
    %592 = vmatmul.bf16.gmra.mxu0 %v363
    %v593 = vpop.f32.mrf.mxu0
    %v594 = vadd.f32 %v518, %v593
    %v595 = vpop.f32.mrf.mxu0
    %v596 = vadd.f32 %v518, %v595
    %597 = vmatmul.bf16.gmra.mxu0 %v366
    %v598 = vpop.f32.mrf.mxu0
    %v599 = vadd.f32 %v518, %v598
    %v600 = vpop.f32.mrf.mxu0
    %v601 = vadd.f32 %v518, %v600
    %602 = vdwg.mxu0
    %603 = vmatpush.bf16.msra.mxu0 0
    %604 = vmatpush.bf16.msra.mxu0 0
    %605 = vmatpush.bf16.msra.mxu0 0
    %606 = vmatpush.bf16.msra.mxu0 0
    %607 = vmatpush.bf16.msra.mxu0 0
    %608 = vmatpush.bf16.msra.mxu0 0
    %609 = vmatpush.bf16.msra.mxu0 0
    %610 = vmatpush.bf16.msra.mxu0 %v539
    %611 = vmatmul.bf16.gmra.mxu0 %v357
    %v612 = vpop.f32.mrf.mxu0
    %v613 = vadd.f32 %v519, %v612
    %v614 = vpop.f32.mrf.mxu0
    %v615 = vadd.f32 %v519, %v614
    %616 = vmatmul.bf16.gmra.mxu0 %v360
    %v617 = vpop.f32.mrf.mxu0
    %v618 = vadd.f32 %v519, %v617
    %v619 = vpop.f32.mrf.mxu0
    %v620 = vadd.f32 %v519, %v619
    %621 = vmatmul.bf16.gmra.mxu0 %v363
    %v622 = vpop.f32.mrf.mxu0
    %v623 = vadd.f32 %v519, %v622
    %v624 = vpop.f32.mrf.mxu0
    %v625 = vadd.f32 %v519, %v624
    %626 = vmatmul.bf16.gmra.mxu0 %v366
    %v627 = vpop.f32.mrf.mxu0
    %v628 = vadd.f32 %v519, %v627
    %v629 = vpop.f32.mrf.mxu0
    %v630 = vadd.f32 %v519, %v629
    %631 = vdwg.mxu0
    %632 = vmatpush.bf16.msra.mxu0 0
    %633 = vmatpush.bf16.msra.mxu0 0
    %634 = vmatpush.bf16.msra.mxu0 0
    %635 = vmatpush.bf16.msra.mxu0 0
    %636 = vmatpush.bf16.msra.mxu0 0
    %637 = vmatpush.bf16.msra.mxu0 0
    %638 = vmatpush.bf16.msra.mxu0 0
    %639 = vmatpush.bf16.msra.mxu0 %v540
    %640 = vmatmul.bf16.gmra.mxu0 %v357
    %v641 = vpop.f32.mrf.mxu0
    %v642 = vadd.f32 %v520, %v641
    %v643 = vpop.f32.mrf.mxu0
    %v644 = vadd.f32 %v520, %v643
    %645 = vmatmul.bf16.gmra.mxu0 %v360
    %v646 = vpop.f32.mrf.mxu0
    %v647 = vadd.f32 %v520, %v646
    %v648 = vpop.f32.mrf.mxu0
    %v649 = vadd.f32 %v520, %v648
    %650 = vmatmul.bf16.gmra.mxu0 %v363
    %v651 = vpop.f32.mrf.mxu0
    %v652 = vadd.f32 %v520, %v651
    %v653 = vpop.f32.mrf.mxu0
    %v654 = vadd.f32 %v520, %v653
    %655 = vmatmul.bf16.gmra.mxu0 %v366
    %v656 = vpop.f32.mrf.mxu0
    %v657 = vadd.f32 %v520, %v656
    %v658 = vpop.f32.mrf.mxu0
    %v659 = vadd.f32 %v520, %v658
    %660 = vdwg.mxu0
    %661 = vst [vmem:[#allocation3] sm:$0xff] %v555
    %662 = vst [vmem:[#allocation3 + $0x8] sm:$0xff] %v584
    %663 = vst [vmem:[#allocation3 + $0x10] sm:$0xff] %v613
    %664 = vst [vmem:[#allocation3 + $0x18] sm:$0xff] %v642
    %665 = vst [vmem:[#allocation3 + $0x20] sm:$0xff] %v557
    %666 = vst [vmem:[#allocation3 + $0x28] sm:$0xff] %v586
    %667 = vst [vmem:[#allocation3 + $0x30] sm:$0xff] %v615
    %668 = vst [vmem:[#allocation3 + $0x38] sm:$0xff] %v644
    %669 = vst [vmem:[#allocation3 + $0x40] sm:$0xff] %v560
    %670 = vst [vmem:[#allocation3 + $0x48] sm:$0xff] %v589
    %671 = vst [vmem:[#allocation3 + $0x50] sm:$0xff] %v618
    %672 = vst [vmem:[#allocation3 + $0x58] sm:$0xff] %v647
    %673 = vst [vmem:[#allocation3 + $0x60] sm:$0xff] %v562
    %674 = vst [vmem:[#allocation3 + $0x68] sm:$0xff] %v591
    %675 = vst [vmem:[#allocation3 + $0x70] sm:$0xff] %v620
    %676 = vst [vmem:[#allocation3 + $0x78] sm:$0xff] %v649
    %677 = vst [vmem:[#allocation3 + $0x80] sm:$0xff] %v565
    %678 = vst [vmem:[#allocation3 + $0x88] sm:$0xff] %v594
    %679 = vst [vmem:[#allocation3 + $0x90] sm:$0xff] %v623
    %680 = vst [vmem:[#allocation3 + $0x98] sm:$0xff] %v652
    %681 = vst [vmem:[#allocation3 + $0xa0] sm:$0xff] %v567
    %682 = vst [vmem:[#allocation3 + $0xa8] sm:$0xff] %v596
    %683 = vst [vmem:[#allocation3 + $0xb0] sm:$0xff] %v625
    %684 = vst [vmem:[#allocation3 + $0xb8] sm:$0xff] %v654
    %685 = vst [vmem:[#allocation3 + $0xc0] sm:$0xff] %v570
    %686 = vst [vmem:[#allocation3 + $0xc8] sm:$0xff] %v599
    %687 = vst [vmem:[#allocation3 + $0xd0] sm:$0xff] %v628
    %688 = vst [vmem:[#allocation3 + $0xd8] sm:$0xff] %v657
    %689 = vst [vmem:[#allocation3 + $0xe0] sm:$0xff] %v572
    %690 = vst [vmem:[#allocation3 + $0xe8] sm:$0xff] %v601
    %691 = vst [vmem:[#allocation3 + $0xf0] sm:$0xff] %v630
    %692 = vst [vmem:[#allocation3 + $0xf8] sm:$0xff] %v659
    %v821 = vunpack.c.l.b16 %v186
    %v822 = vunpack.c.h.b16 %v186
    %v823 = vunpack.c.l.b16 %v187
    %v824 = vunpack.c.h.b16 %v187
    %v825 = vunpack.c.l.b16 %v188
    %v826 = vunpack.c.h.b16 %v188
    %v827 = vunpack.c.l.b16 %v189
    %v828 = vunpack.c.h.b16 %v189
    %v829 = vunpack.c.l.b16 %v190
    %v830 = vunpack.c.h.b16 %v190
    %v831 = vunpack.c.l.b16 %v191
    %v832 = vunpack.c.h.b16 %v191
    %v833 = vunpack.c.l.b16 %v192
    %v834 = vunpack.c.h.b16 %v192
    %v835 = vunpack.c.l.b16 %v193
    %v836 = vunpack.c.h.b16 %v193
    %v837 = vunpack.c.l.b16 %v194
    %v838 = vunpack.c.h.b16 %v194
    %v839 = vunpack.c.l.b16 %v195
    %v840 = vunpack.c.h.b16 %v195
    %v841 = vunpack.c.l.b16 %v196
    %v842 = vunpack.c.h.b16 %v196
    %v843 = vunpack.c.l.b16 %v197
    %v844 = vunpack.c.h.b16 %v197
    %v845 = vunpack.c.l.b16 %v198
    %v846 = vunpack.c.h.b16 %v198
    %v847 = vunpack.c.l.b16 %v199
    %v848 = vunpack.c.h.b16 %v199
    %v849 = vunpack.c.l.b16 %v200
    %v850 = vunpack.c.h.b16 %v200
    %v851 = vunpack.c.l.b16 %v201
    %v852 = vunpack.c.h.b16 %v201
    %v853 = vunpack.c.l.b16 %v202
    %v854 = vunpack.c.h.b16 %v202
    %v855 = vunpack.c.l.b16 %v203
    %v856 = vunpack.c.h.b16 %v203
    %v857 = vunpack.c.l.b16 %v204
    %v858 = vunpack.c.h.b16 %v204
    %v859 = vunpack.c.l.b16 %v205
    %v860 = vunpack.c.h.b16 %v205
    %v861 = vunpack.c.l.b16 %v206
    %v862 = vunpack.c.h.b16 %v206
    %v863 = vunpack.c.l.b16 %v207
    %v864 = vunpack.c.h.b16 %v207
    %v865 = vunpack.c.l.b16 %v208
    %v866 = vunpack.c.h.b16 %v208
    %v867 = vunpack.c.l.b16 %v209
    %v868 = vunpack.c.h.b16 %v209
    %v869 = vunpack.c.l.b16 %v210
    %v870 = vunpack.c.h.b16 %v210
    %v871 = vunpack.c.l.b16 %v211
    %v872 = vunpack.c.h.b16 %v211
    %v873 = vunpack.c.l.b16 %v212
    %v874 = vunpack.c.h.b16 %v212
    %v875 = vunpack.c.l.b16 %v213
    %v876 = vunpack.c.h.b16 %v213
    %v877 = vunpack.c.l.b16 %v214
    %v878 = vunpack.c.h.b16 %v214
    %v879 = vunpack.c.l.b16 %v215
    %v880 = vunpack.c.h.b16 %v215
    %v881 = vunpack.c.l.b16 %v216
    %v882 = vunpack.c.h.b16 %v216
    %v883 = vunpack.c.l.b16 %v217
    %v884 = vunpack.c.h.b16 %v217
    %v885 = vunpack.c.l.b16 %v218
    %v886 = vunpack.c.h.b16 %v218
    %v887 = vunpack.c.l.b16 %v219
    %v888 = vunpack.c.h.b16 %v219
    %v889 = vunpack.c.l.b16 %v220
    %v890 = vunpack.c.h.b16 %v220
    %v891 = vunpack.c.l.b16 %v221
    %v892 = vunpack.c.h.b16 %v221
    %v893 = vunpack.c.l.b16 %v222
    %v894 = vunpack.c.h.b16 %v222
    %v895 = vunpack.c.l.b16 %v223
    %v896 = vunpack.c.h.b16 %v223
    %v897 = vunpack.c.l.b16 %v224
    %v898 = vunpack.c.h.b16 %v224
    %v899 = vunpack.c.l.b16 %v225
    %v900 = vunpack.c.h.b16 %v225
    %v901 = vunpack.c.l.b16 %v226
    %v902 = vunpack.c.h.b16 %v226
    %v903 = vunpack.c.l.b16 %v227
    %v904 = vunpack.c.h.b16 %v227
    %v905 = vunpack.c.l.b16 %v228
    %v906 = vunpack.c.h.b16 %v228
    %v907 = vunpack.c.l.b16 %v229
    %v908 = vunpack.c.h.b16 %v229
    %v909 = vunpack.c.l.b16 %v230
    %v910 = vunpack.c.h.b16 %v230
    %v911 = vunpack.c.l.b16 %v231
    %v912 = vunpack.c.h.b16 %v231
    %v913 = vunpack.c.l.b16 %v232
    %v914 = vunpack.c.h.b16 %v232
    %v915 = vunpack.c.l.b16 %v233
    %v916 = vunpack.c.h.b16 %v233
    %v917 = vunpack.c.l.b16 %v234
    %v918 = vunpack.c.h.b16 %v234
    %v919 = vunpack.c.l.b16 %v235
    %v920 = vunpack.c.h.b16 %v235
    %v921 = vunpack.c.l.b16 %v236
    %v922 = vunpack.c.h.b16 %v236
    %v923 = vunpack.c.l.b16 %v237
    %v924 = vunpack.c.h.b16 %v237
    %v925 = vunpack.c.l.b16 %v238
    %v926 = vunpack.c.h.b16 %v238
    %v927 = vunpack.c.l.b16 %v239
    %v928 = vunpack.c.h.b16 %v239
    %v929 = vunpack.c.l.b16 %v240
    %v930 = vunpack.c.h.b16 %v240
    %v931 = vunpack.c.l.b16 %v241
    %v932 = vunpack.c.h.b16 %v241
    %v933 = vunpack.c.l.b16 %v242
    %v934 = vunpack.c.h.b16 %v242
    %v935 = vunpack.c.l.b16 %v243
    %v936 = vunpack.c.h.b16 %v243
    %v937 = vunpack.c.l.b16 %v244
    %v938 = vunpack.c.h.b16 %v244
    %v939 = vunpack.c.l.b16 %v245
    %v940 = vunpack.c.h.b16 %v245
    %v941 = vunpack.c.l.b16 %v246
    %v942 = vunpack.c.h.b16 %v246
    %v943 = vunpack.c.l.b16 %v247
    %v944 = vunpack.c.h.b16 %v247
    %v945 = vunpack.c.l.b16 %v248
    %v946 = vunpack.c.h.b16 %v248
    %v947 = vunpack.c.l.b16 %v249
    %v948 = vunpack.c.h.b16 %v249
    %v949 = vunpack.c.l.b16 %v250
    %v950 = vunpack.c.h.b16 %v250
    %v951 = vunpack.c.l.b16 %v251
    %v952 = vunpack.c.h.b16 %v251
    %v953 = vunpack.c.l.b16 %v252
    %v954 = vunpack.c.h.b16 %v252
    %v955 = vunpack.c.l.b16 %v253
    %v956 = vunpack.c.h.b16 %v253
    %v957 = vunpack.c.l.b16 %v254
    %v958 = vunpack.c.h.b16 %v254
    %v959 = vunpack.c.l.b16 %v255
    %v960 = vunpack.c.h.b16 %v255
    %v961 = vunpack.c.l.b16 %v256
    %v962 = vunpack.c.h.b16 %v256
    %v963 = vunpack.c.l.b16 %v257
    %v964 = vunpack.c.h.b16 %v257
    %v965 = vunpack.c.l.b16 %v258
    %v966 = vunpack.c.h.b16 %v258
    %v967 = vunpack.c.l.b16 %v259
    %v968 = vunpack.c.h.b16 %v259
    %v969 = vunpack.c.l.b16 %v260
    %v970 = vunpack.c.h.b16 %v260
    %v971 = vunpack.c.l.b16 %v261
    %v972 = vunpack.c.h.b16 %v261
    %v973 = vunpack.c.l.b16 %v262
    %v974 = vunpack.c.h.b16 %v262
    %v975 = vunpack.c.l.b16 %v263
    %v976 = vunpack.c.h.b16 %v263
    %v977 = vunpack.c.l.b16 %v264
    %v978 = vunpack.c.h.b16 %v264
    %v979 = vunpack.c.l.b16 %v265
    %v980 = vunpack.c.h.b16 %v265
    %v981 = vunpack.c.l.b16 %v266
    %v982 = vunpack.c.h.b16 %v266
    %v983 = vunpack.c.l.b16 %v267
    %v984 = vunpack.c.h.b16 %v267
    %v985 = vunpack.c.l.b16 %v268
    %v986 = vunpack.c.h.b16 %v268
    %v987 = vunpack.c.l.b16 %v269
    %v988 = vunpack.c.h.b16 %v269
    %v989 = vunpack.c.l.b16 %v270
    %v990 = vunpack.c.h.b16 %v270
    %v991 = vunpack.c.l.b16 %v271
    %v992 = vunpack.c.h.b16 %v271
    %v993 = vunpack.c.l.b16 %v272
    %v994 = vunpack.c.h.b16 %v272
    %v995 = vunpack.c.l.b16 %v273
    %v996 = vunpack.c.h.b16 %v273
    %v997 = vunpack.c.l.b16 %v274
    %v998 = vunpack.c.h.b16 %v274
    %v999 = vunpack.c.l.b16 %v275
    %v1000 = vunpack.c.h.b16 %v275
    %v1001 = vunpack.c.l.b16 %v276
    %v1002 = vunpack.c.h.b16 %v276
    %v1003 = vunpack.c.l.b16 %v277
    %v1004 = vunpack.c.h.b16 %v277
    %v1005 = vunpack.c.l.b16 %v278
    %v1006 = vunpack.c.h.b16 %v278
    %v1007 = vunpack.c.l.b16 %v279
    %v1008 = vunpack.c.h.b16 %v279
    %v1009 = vunpack.c.l.b16 %v280
    %v1010 = vunpack.c.h.b16 %v280
    %v1011 = vunpack.c.l.b16 %v281
    %v1012 = vunpack.c.h.b16 %v281
    %v1013 = vunpack.c.l.b16 %v282
    %v1014 = vunpack.c.h.b16 %v282
    %v1015 = vunpack.c.l.b16 %v283
    %v1016 = vunpack.c.h.b16 %v283
    %v1017 = vunpack.c.l.b16 %v284
    %v1018 = vunpack.c.h.b16 %v284
    %v1019 = vunpack.c.l.b16 %v285
    %v1020 = vunpack.c.h.b16 %v285
    %v1021 = vunpack.c.l.b16 %v286
    %v1022 = vunpack.c.h.b16 %v286
    %v1023 = vunpack.c.l.b16 %v287
    %v1024 = vunpack.c.h.b16 %v287
    %v1025 = vunpack.c.l.b16 %v288
    %v1026 = vunpack.c.h.b16 %v288
    %v1027 = vunpack.c.l.b16 %v289
    %v1028 = vunpack.c.h.b16 %v289
    %v1029 = vunpack.c.l.b16 %v290
    %v1030 = vunpack.c.h.b16 %v290
    %v1031 = vunpack.c.l.b16 %v291
    %v1032 = vunpack.c.h.b16 %v291
    %v1033 = vunpack.c.l.b16 %v292
    %v1034 = vunpack.c.h.b16 %v292
    %v1035 = vunpack.c.l.b16 %v293
    %v1036 = vunpack.c.h.b16 %v293
    %v1037 = vunpack.c.l.b16 %v294
    %v1038 = vunpack.c.h.b16 %v294
    %v1039 = vunpack.c.l.b16 %v295
    %v1040 = vunpack.c.h.b16 %v295
    %v1041 = vunpack.c.l.b16 %v296
    %v1042 = vunpack.c.h.b16 %v296
    %v1043 = vunpack.c.l.b16 %v297
    %v1044 = vunpack.c.h.b16 %v297
    %v1045 = vunpack.c.l.b16 %v298
    %v1046 = vunpack.c.h.b16 %v298
    %v1047 = vunpack.c.l.b16 %v299
    %v1048 = vunpack.c.h.b16 %v299
    %v1049 = vunpack.c.l.b16 %v300
    %v1050 = vunpack.c.h.b16 %v300
    %v1051 = vunpack.c.l.b16 %v301
    %v1052 = vunpack.c.h.b16 %v301
    %v1053 = vunpack.c.l.b16 %v302
    %v1054 = vunpack.c.h.b16 %v302
    %v1055 = vunpack.c.l.b16 %v303
    %v1056 = vunpack.c.h.b16 %v303
    %v1057 = vunpack.c.l.b16 %v304
    %v1058 = vunpack.c.h.b16 %v304
    %v1059 = vunpack.c.l.b16 %v305
    %v1060 = vunpack.c.h.b16 %v305
    %v1061 = vunpack.c.l.b16 %v306
    %v1062 = vunpack.c.h.b16 %v306
    %v1063 = vunpack.c.l.b16 %v307
    %v1064 = vunpack.c.h.b16 %v307
    %v1065 = vunpack.c.l.b16 %v308
    %v1066 = vunpack.c.h.b16 %v308
    %v1067 = vunpack.c.l.b16 %v309
    %v1068 = vunpack.c.h.b16 %v309
    %v1069 = vunpack.c.l.b16 %v310
    %v1070 = vunpack.c.h.b16 %v310
    %v1071 = vunpack.c.l.b16 %v311
    %v1072 = vunpack.c.h.b16 %v311
    %v1073 = vunpack.c.l.b16 %v312
    %v1074 = vunpack.c.h.b16 %v312
    %v1075 = vunpack.c.l.b16 %v313
    %v1076 = vunpack.c.h.b16 %v313
    %v1077 = vpack.c.b16 %v829, %v821
    %v1078 = vpack.c.b16 %v830, %v822
    %v1079 = vpack.c.b16 %v831, %v823
    %v1080 = vpack.c.b16 %v832, %v824
    %v1081 = vpack.c.b16 %v833, %v825
    %v1082 = vpack.c.b16 %v834, %v826
    %v1083 = vpack.c.b16 %v835, %v827
    %v1084 = vpack.c.b16 %v836, %v828
    %v1085 = vpack.c.b16 %v845, %v837
    %v1086 = vpack.c.b16 %v846, %v838
    %v1087 = vpack.c.b16 %v847, %v839
    %v1088 = vpack.c.b16 %v848, %v840
    %v1089 = vpack.c.b16 %v849, %v841
    %v1090 = vpack.c.b16 %v850, %v842
    %v1091 = vpack.c.b16 %v851, %v843
    %v1092 = vpack.c.b16 %v852, %v844
    %v1093 = vpack.c.b16 %v861, %v853
    %v1094 = vpack.c.b16 %v862, %v854
    %v1095 = vpack.c.b16 %v863, %v855
    %v1096 = vpack.c.b16 %v864, %v856
    %v1097 = vpack.c.b16 %v865, %v857
    %v1098 = vpack.c.b16 %v866, %v858
    %v1099 = vpack.c.b16 %v867, %v859
    %v1100 = vpack.c.b16 %v868, %v860
    %v1101 = vpack.c.b16 %v877, %v869
    %v1102 = vpack.c.b16 %v878, %v870
    %v1103 = vpack.c.b16 %v879, %v871
    %v1104 = vpack.c.b16 %v880, %v872
    %v1105 = vpack.c.b16 %v881, %v873
    %v1106 = vpack.c.b16 %v882, %v874
    %v1107 = vpack.c.b16 %v883, %v875
    %v1108 = vpack.c.b16 %v884, %v876
    %v1109 = vpack.c.b16 %v893, %v885
    %v1110 = vpack.c.b16 %v894, %v886
    %v1111 = vpack.c.b16 %v895, %v887
    %v1112 = vpack.c.b16 %v896, %v888
    %v1113 = vpack.c.b16 %v897, %v889
    %v1114 = vpack.c.b16 %v898, %v890
    %v1115 = vpack.c.b16 %v899, %v891
    %v1116 = vpack.c.b16 %v900, %v892
    %v1117 = vpack.c.b16 %v909, %v901
    %v1118 = vpack.c.b16 %v910, %v902
    %v1119 = vpack.c.b16 %v911, %v903
    %v1120 = vpack.c.b16 %v912, %v904
    %v1121 = vpack.c.b16 %v913, %v905
    %v1122 = vpack.c.b16 %v914, %v906
    %v1123 = vpack.c.b16 %v915, %v907
    %v1124 = vpack.c.b16 %v916, %v908
    %v1125 = vpack.c.b16 %v925, %v917
    %v1126 = vpack.c.b16 %v926, %v918
    %v1127 = vpack.c.b16 %v927, %v919
    %v1128 = vpack.c.b16 %v928, %v920
    %v1129 = vpack.c.b16 %v929, %v921
    %v1130 = vpack.c.b16 %v930, %v922
    %v1131 = vpack.c.b16 %v931, %v923
    %v1132 = vpack.c.b16 %v932, %v924
    %v1133 = vpack.c.b16 %v941, %v933
    %v1134 = vpack.c.b16 %v942, %v934
    %v1135 = vpack.c.b16 %v943, %v935
    %v1136 = vpack.c.b16 %v944, %v936
    %v1137 = vpack.c.b16 %v945, %v937
    %v1138 = vpack.c.b16 %v946, %v938
    %v1139 = vpack.c.b16 %v947, %v939
    %v1140 = vpack.c.b16 %v948, %v940
    %v1141 = vpack.c.b16 %v957, %v949
    %v1142 = vpack.c.b16 %v958, %v950
    %v1143 = vpack.c.b16 %v959, %v951
    %v1144 = vpack.c.b16 %v960, %v952
    %v1145 = vpack.c.b16 %v961, %v953
    %v1146 = vpack.c.b16 %v962, %v954
    %v1147 = vpack.c.b16 %v963, %v955
    %v1148 = vpack.c.b16 %v964, %v956
    %v1149 = vpack.c.b16 %v973, %v965
    %v1150 = vpack.c.b16 %v974, %v966
    %v1151 = vpack.c.b16 %v975, %v967
    %v1152 = vpack.c.b16 %v976, %v968
    %v1153 = vpack.c.b16 %v977, %v969
    %v1154 = vpack.c.b16 %v978, %v970
    %v1155 = vpack.c.b16 %v979, %v971
    %v1156 = vpack.c.b16 %v980, %v972
    %v1157 = vpack.c.b16 %v989, %v981
    %v1158 = vpack.c.b16 %v990, %v982
    %v1159 = vpack.c.b16 %v991, %v983
    %v1160 = vpack.c.b16 %v992, %v984
    %v1161 = vpack.c.b16 %v993, %v985
    %v1162 = vpack.c.b16 %v994, %v986
    %v1163 = vpack.c.b16 %v995, %v987
    %v1164 = vpack.c.b16 %v996, %v988
    %v1165 = vpack.c.b16 %v1005, %v997
    %v1166 = vpack.c.b16 %v1006, %v998
    %v1167 = vpack.c.b16 %v1007, %v999
    %v1168 = vpack.c.b16 %v1008, %v1000
    %v1169 = vpack.c.b16 %v1009, %v1001
    %v1170 = vpack.c.b16 %v1010, %v1002
    %v1171 = vpack.c.b16 %v1011, %v1003
    %v1172 = vpack.c.b16 %v1012, %v1004
    %v1173 = vpack.c.b16 %v1021, %v1013
    %v1174 = vpack.c.b16 %v1022, %v1014
    %v1175 = vpack.c.b16 %v1023, %v1015
    %v1176 = vpack.c.b16 %v1024, %v1016
    %v1177 = vpack.c.b16 %v1025, %v1017
    %v1178 = vpack.c.b16 %v1026, %v1018
    %v1179 = vpack.c.b16 %v1027, %v1019
    %v1180 = vpack.c.b16 %v1028, %v1020
    %v1181 = vpack.c.b16 %v1037, %v1029
    %v1182 = vpack.c.b16 %v1038, %v1030
    %v1183 = vpack.c.b16 %v1039, %v1031
    %v1184 = vpack.c.b16 %v1040, %v1032
    %v1185 = vpack.c.b16 %v1041, %v1033
    %v1186 = vpack.c.b16 %v1042, %v1034
    %v1187 = vpack.c.b16 %v1043, %v1035
    %v1188 = vpack.c.b16 %v1044, %v1036
    %v1189 = vpack.c.b16 %v1053, %v1045
    %v1190 = vpack.c.b16 %v1054, %v1046
    %v1191 = vpack.c.b16 %v1055, %v1047
    %v1192 = vpack.c.b16 %v1056, %v1048
    %v1193 = vpack.c.b16 %v1057, %v1049
    %v1194 = vpack.c.b16 %v1058, %v1050
    %v1195 = vpack.c.b16 %v1059, %v1051
    %v1196 = vpack.c.b16 %v1060, %v1052
    %v1197 = vpack.c.b16 %v1069, %v1061
    %v1198 = vpack.c.b16 %v1070, %v1062
    %v1199 = vpack.c.b16 %v1071, %v1063
    %v1200 = vpack.c.b16 %v1072, %v1064
    %v1201 = vpack.c.b16 %v1073, %v1065
    %v1202 = vpack.c.b16 %v1074, %v1066
    %v1203 = vpack.c.b16 %v1075, %v1067
    %v1204 = vpack.c.b16 %v1076, %v1068
    %1333 = vmatpush.bf16.msra.mxu0 %v1133
    %1334 = vmatpush.bf16.msra.mxu0 %v1125
    %1335 = vmatpush.bf16.msra.mxu0 %v1117
    %1336 = vmatpush.bf16.msra.mxu0 %v1109
    %1337 = vmatpush.bf16.msra.mxu0 %v1101
    %1338 = vmatpush.bf16.msra.mxu0 %v1093
    %1339 = vmatpush.bf16.msra.mxu0 %v1085
    %1340 = vmatpush.bf16.msra.mxu0 %v1077
    %1341 = vmatmul.bf16.gmra.mxu0 0
    %v1342 = vpop.f32.mrf.mxu0
    %v1343 = vadd.f32 0.0, %v1342
    %v1344 = vpop.f32.mrf.mxu0
    %1345 = vdwg.mxu0
    %1346 = vmatpush.bf16.msra.mxu0 %v1197
    %1347 = vmatpush.bf16.msra.mxu0 %v1189
    %1348 = vmatpush.bf16.msra.mxu0 %v1181
    %1349 = vmatpush.bf16.msra.mxu0 %v1173
    %1350 = vmatpush.bf16.msra.mxu0 %v1165
    %1351 = vmatpush.bf16.msra.mxu0 %v1157
    %1352 = vmatpush.bf16.msra.mxu0 %v1149
    %1353 = vmatpush.bf16.msra.mxu0 %v1141
    %1354 = vmatmul.bf16.gmra.mxu0 0
    %v1355 = vpop.f32.mrf.mxu0
    %v1356 = vadd.f32 %v1343, %v1355
    %v1357 = vpop.f32.mrf.mxu0
    %1358 = vdwg.mxu0
    %1359 = vmatpush.bf16.msra.mxu0 %v1134
    %1360 = vmatpush.bf16.msra.mxu0 %v1126
    %1361 = vmatpush.bf16.msra.mxu0 %v1118
    %1362 = vmatpush.bf16.msra.mxu0 %v1110
    %1363 = vmatpush.bf16.msra.mxu0 %v1102
    %1364 = vmatpush.bf16.msra.mxu0 %v1094
    %1365 = vmatpush.bf16.msra.mxu0 %v1086
    %1366 = vmatpush.bf16.msra.mxu0 %v1078
    %1367 = vmatmul.bf16.gmra.mxu0 0
    %v1368 = vpop.f32.mrf.mxu0
    %v1369 = vadd.f32 0.0, %v1368
    %v1370 = vpop.f32.mrf.mxu0
    %1371 = vdwg.mxu0
    %1372 = vmatpush.bf16.msra.mxu0 %v1198
    %1373 = vmatpush.bf16.msra.mxu0 %v1190
    %1374 = vmatpush.bf16.msra.mxu0 %v1182
    %1375 = vmatpush.bf16.msra.mxu0 %v1174
    %1376 = vmatpush.bf16.msra.mxu0 %v1166
    %1377 = vmatpush.bf16.msra.mxu0 %v1158
    %1378 = vmatpush.bf16.msra.mxu0 %v1150
    %1379 = vmatpush.bf16.msra.mxu0 %v1142
    %1380 = vmatmul.bf16.gmra.mxu0 0
    %v1381 = vpop.f32.mrf.mxu0
    %v1382 = vadd.f32 %v1369, %v1381
    %v1383 = vpop.f32.mrf.mxu0
    %1384 = vdwg.mxu0
    %1385 = vmatpush.bf16.msra.mxu0 %v1135
    %1386 = vmatpush.bf16.msra.mxu0 %v1127
    %1387 = vmatpush.bf16.msra.mxu0 %v1119
    %1388 = vmatpush.bf16.msra.mxu0 %v1111
    %1389 = vmatpush.bf16.msra.mxu0 %v1103
    %1390 = vmatpush.bf16.msra.mxu0 %v1095
    %1391 = vmatpush.bf16.msra.mxu0 %v1087
    %1392 = vmatpush.bf16.msra.mxu0 %v1079
    %1393 = vmatmul.bf16.gmra.mxu0 0
    %v1394 = vpop.f32.mrf.mxu0
    %v1395 = vadd.f32 0.0, %v1394
    %v1396 = vpop.f32.mrf.mxu0
    %1397 = vdwg.mxu0
    %1398 = vmatpush.bf16.msra.mxu0 %v1199
    %1399 = vmatpush.bf16.msra.mxu0 %v1191
    %1400 = vmatpush.bf16.msra.mxu0 %v1183
    %1401 = vmatpush.bf16.msra.mxu0 %v1175
    %1402 = vmatpush.bf16.msra.mxu0 %v1167
    %1403 = vmatpush.bf16.msra.mxu0 %v1159
    %1404 = vmatpush.bf16.msra.mxu0 %v1151
    %1405 = vmatpush.bf16.msra.mxu0 %v1143
    %1406 = vmatmul.bf16.gmra.mxu0 0
    %v1407 = vpop.f32.mrf.mxu0
    %v1408 = vadd.f32 %v1395, %v1407
    %v1409 = vpop.f32.mrf.mxu0
    %1410 = vdwg.mxu0
    %1411 = vmatpush.bf16.msra.mxu0 %v1136
    %1412 = vmatpush.bf16.msra.mxu0 %v1128
    %1413 = vmatpush.bf16.msra.mxu0 %v1120
    %1414 = vmatpush.bf16.msra.mxu0 %v1112
    %1415 = vmatpush.bf16.msra.mxu0 %v1104
    %1416 = vmatpush.bf16.msra.mxu0 %v1096
    %1417 = vmatpush.bf16.msra.mxu0 %v1088
    %1418 = vmatpush.bf16.msra.mxu0 %v1080
    %1419 = vmatmul.bf16.gmra.mxu0 0
    %v1420 = vpop.f32.mrf.mxu0
    %v1421 = vadd.f32 0.0, %v1420
    %v1422 = vpop.f32.mrf.mxu0
    %1423 = vdwg.mxu0
    %1424 = vmatpush.bf16.msra.mxu0 %v1200
    %1425 = vmatpush.bf16.msra.mxu0 %v1192
    %1426 = vmatpush.bf16.msra.mxu0 %v1184
    %1427 = vmatpush.bf16.msra.mxu0 %v1176
    %1428 = vmatpush.bf16.msra.mxu0 %v1168
    %1429 = vmatpush.bf16.msra.mxu0 %v1160
    %1430 = vmatpush.bf16.msra.mxu0 %v1152
    %1431 = vmatpush.bf16.msra.mxu0 %v1144
    %1432 = vmatmul.bf16.gmra.mxu0 0
    %v1433 = vpop.f32.mrf.mxu0
    %v1434 = vadd.f32 %v1421, %v1433
    %v1435 = vpop.f32.mrf.mxu0
    %1436 = vdwg.mxu0
    %1437 = vmatpush.bf16.msra.mxu0 %v1137
    %1438 = vmatpush.bf16.msra.mxu0 %v1129
    %1439 = vmatpush.bf16.msra.mxu0 %v1121
    %1440 = vmatpush.bf16.msra.mxu0 %v1113
    %1441 = vmatpush.bf16.msra.mxu0 %v1105
    %1442 = vmatpush.bf16.msra.mxu0 %v1097
    %1443 = vmatpush.bf16.msra.mxu0 %v1089
    %1444 = vmatpush.bf16.msra.mxu0 %v1081
    %1445 = vmatmul.bf16.gmra.mxu0 0
    %v1446 = vpop.f32.mrf.mxu0
    %v1447 = vadd.f32 0.0, %v1446
    %v1448 = vpop.f32.mrf.mxu0
    %1449 = vdwg.mxu0
    %1450 = vmatpush.bf16.msra.mxu0 %v1201
    %1451 = vmatpush.bf16.msra.mxu0 %v1193
    %1452 = vmatpush.bf16.msra.mxu0 %v1185
    %1453 = vmatpush.bf16.msra.mxu0 %v1177
    %1454 = vmatpush.bf16.msra.mxu0 %v1169
    %1455 = vmatpush.bf16.msra.mxu0 %v1161
    %1456 = vmatpush.bf16.msra.mxu0 %v1153
    %1457 = vmatpush.bf16.msra.mxu0 %v1145
    %1458 = vmatmul.bf16.gmra.mxu0 0
    %v1459 = vpop.f32.mrf.mxu0
    %v1460 = vadd.f32 %v1447, %v1459
    %v1461 = vpop.f32.mrf.mxu0
    %1462 = vdwg.mxu0
    %1463 = vmatpush.bf16.msra.mxu0 %v1138
    %1464 = vmatpush.bf16.msra.mxu0 %v1130
    %1465 = vmatpush.bf16.msra.mxu0 %v1122
    %1466 = vmatpush.bf16.msra.mxu0 %v1114
    %1467 = vmatpush.bf16.msra.mxu0 %v1106
    %1468 = vmatpush.bf16.msra.mxu0 %v1098
    %1469 = vmatpush.bf16.msra.mxu0 %v1090
    %1470 = vmatpush.bf16.msra.mxu0 %v1082
    %1471 = vmatmul.bf16.gmra.mxu0 0
    %v1472 = vpop.f32.mrf.mxu0
    %v1473 = vadd.f32 0.0, %v1472
    %v1474 = vpop.f32.mrf.mxu0
    %1475 = vdwg.mxu0
    %1476 = vmatpush.bf16.msra.mxu0 %v1202
    %1477 = vmatpush.bf16.msra.mxu0 %v1194
    %1478 = vmatpush.bf16.msra.mxu0 %v1186
    %1479 = vmatpush.bf16.msra.mxu0 %v1178
    %1480 = vmatpush.bf16.msra.mxu0 %v1170
    %1481 = vmatpush.bf16.msra.mxu0 %v1162
    %1482 = vmatpush.bf16.msra.mxu0 %v1154
    %1483 = vmatpush.bf16.msra.mxu0 %v1146
    %1484 = vmatmul.bf16.gmra.mxu0 0
    %v1485 = vpop.f32.mrf.mxu0
    %v1486 = vadd.f32 %v1473, %v1485
    %v1487 = vpop.f32.mrf.mxu0
    %1488 = vdwg.mxu0
    %1489 = vmatpush.bf16.msra.mxu0 %v1139
    %1490 = vmatpush.bf16.msra.mxu0 %v1131
    %1491 = vmatpush.bf16.msra.mxu0 %v1123
    %1492 = vmatpush.bf16.msra.mxu0 %v1115
    %1493 = vmatpush.bf16.msra.mxu0 %v1107
    %1494 = vmatpush.bf16.msra.mxu0 %v1099
    %1495 = vmatpush.bf16.msra.mxu0 %v1091
    %1496 = vmatpush.bf16.msra.mxu0 %v1083
    %1497 = vmatmul.bf16.gmra.mxu0 0
    %v1498 = vpop.f32.mrf.mxu0
    %v1499 = vadd.f32 0.0, %v1498
    %v1500 = vpop.f32.mrf.mxu0
    %1501 = vdwg.mxu0
    %1502 = vmatpush.bf16.msra.mxu0 %v1203
    %1503 = vmatpush.bf16.msra.mxu0 %v1195
    %1504 = vmatpush.bf16.msra.mxu0 %v1187
    %1505 = vmatpush.bf16.msra.mxu0 %v1179
    %1506 = vmatpush.bf16.msra.mxu0 %v1171
    %1507 = vmatpush.bf16.msra.mxu0 %v1163
    %1508 = vmatpush.bf16.msra.mxu0 %v1155
    %1509 = vmatpush.bf16.msra.mxu0 %v1147
    %1510 = vmatmul.bf16.gmra.mxu0 0
    %v1511 = vpop.f32.mrf.mxu0
    %v1512 = vadd.f32 %v1499, %v1511
    %v1513 = vpop.f32.mrf.mxu0
    %1514 = vdwg.mxu0
    %1515 = vmatpush.bf16.msra.mxu0 %v1140
    %1516 = vmatpush.bf16.msra.mxu0 %v1132
    %1517 = vmatpush.bf16.msra.mxu0 %v1124
    %1518 = vmatpush.bf16.msra.mxu0 %v1116
    %1519 = vmatpush.bf16.msra.mxu0 %v1108
    %1520 = vmatpush.bf16.msra.mxu0 %v1100
    %1521 = vmatpush.bf16.msra.mxu0 %v1092
    %1522 = vmatpush.bf16.msra.mxu0 %v1084
    %1523 = vmatmul.bf16.gmra.mxu0 0
    %v1524 = vpop.f32.mrf.mxu0
    %v1525 = vadd.f32 0.0, %v1524
    %v1526 = vpop.f32.mrf.mxu0
    %1527 = vdwg.mxu0
    %1528 = vmatpush.bf16.msra.mxu0 %v1204
    %1529 = vmatpush.bf16.msra.mxu0 %v1196
    %1530 = vmatpush.bf16.msra.mxu0 %v1188
    %1531 = vmatpush.bf16.msra.mxu0 %v1180
    %1532 = vmatpush.bf16.msra.mxu0 %v1172
    %1533 = vmatpush.bf16.msra.mxu0 %v1164
    %1534 = vmatpush.bf16.msra.mxu0 %v1156
    %1535 = vmatpush.bf16.msra.mxu0 %v1148
    %1536 = vmatmul.bf16.gmra.mxu0 0
    %v1537 = vpop.f32.mrf.mxu0
    %v1538 = vadd.f32 %v1525, %v1537
    %v1539 = vpop.f32.mrf.mxu0
    %1540 = vdwg.mxu0
    %v1541 = vld [vmem:[#allocation2] sm:$0xff]
    %v1542 = vld [vmem:[#allocation2 + $0x8] sm:$0xff]
    %v1543 = vld [vmem:[#allocation2 + $0x10] sm:$0xff]
    %v1544 = vld [vmem:[#allocation2 + $0x18] sm:$0xff]
    %v1545 = vadd.f32 %v1541, %v1356
    %v1546 = vadd.f32 %v1542, %v1382
    %v1547 = vadd.f32 %v1543, %v1408
    %v1548 = vadd.f32 %v1544, %v1434
    %v1549 = vmul.f32 %v1545, 0.5
    %v1550 = vtanh.pop %v1549
    %v1551 = vmul.f32 %v1550, 0.5
    %v1552 = vadd.f32 %v1551, 0.5
    %v1553 = vmul.f32 %v1546, 0.5
    %v1554 = vtanh.pop %v1553
    %v1555 = vmul.f32 %v1554, 0.5
    %v1556 = vadd.f32 %v1555, 0.5
    %v1557 = vtanh.pop %v1547
    %v1558 = vmul.f32 %v1548, 0.5
    %v1559 = vtanh.pop %v1558
    %v1560 = vmul.f32 %v1559, 0.5
    %v1561 = vadd.f32 %v1560, 0.5
    %v1562 = vmul.f32 %v1556, 0.0
    %v1563 = vmul.f32 %v1552, %v1557
    %v1564 = vadd.f32 %v1562, %v1563
    %v1565 = vtanh.pop %v1564
    %v1566 = vmul.f32 %v1561, %v1565
    %s1567 = scalar_lea.vmem [#allocation3], 224
    %v1568 = vld [vmem:[%s1567] sm:$0xff]
    %v1569 = vld [vmem:[%s1567 + $0x8] sm:$0xff]
    %v1570 = vld [vmem:[%s1567 + $0x10] sm:$0xff]
    %v1571 = vld [vmem:[%s1567 + $0x18] sm:$0xff]
    %v1572 = vadd.f32 %v1568, %v1460
    %v1573 = vadd.f32 %v1569, %v1486
    %v1574 = vadd.f32 %v1570, %v1512
    %v1575 = vadd.f32 %v1571, %v1538
    %v1576 = vmul.f32 %v1572, 0.5
    %v1577 = vtanh.pop %v1576
    %v1578 = vmul.f32 %v1577, 0.5
    %v1579 = vadd.f32 %v1578, 0.5
    %v1580 = vmul.f32 %v1573, 0.5
    %v1581 = vtanh.pop %v1580
    %v1582 = vmul.f32 %v1581, 0.5
    %v1583 = vadd.f32 %v1582, 0.5
    %v1584 = vtanh.pop %v1574
    %v1585 = vmul.f32 %v1575, 0.5
    %v1586 = vtanh.pop %v1585
    %v1587 = vmul.f32 %v1586, 0.5
    %v1588 = vadd.f32 %v1587, 0.5
    %v1589 = vmul.f32 %v1583, 0.0
    %v1590 = vmul.f32 %v1579, %v1584
    %v1591 = vadd.f32 %v1589, %v1590
    %v1592 = vtanh.pop %v1591
    %v1593 = vmul.f32 %v1588, %v1592
    %1594 = vst [vmem:[#allocation4] sm:$0xff] %v1566
    %s1595 = scalar_lea.vmem [#allocation5], 56
    %1596 = vst [vmem:[%s1595] sm:$0xff] %v1593
    %v1597 = vpack.c.bf16 %v1566, %v1566
    %v1598 = vpack.c.bf16 %v1593, %v1593
    %1599 = vmatpush.bf16.msra.mxu0 %v1133
    %1600 = vmatpush.bf16.msra.mxu0 %v1125
    %1601 = vmatpush.bf16.msra.mxu0 %v1117
    %1602 = vmatpush.bf16.msra.mxu0 %v1109
    %1603 = vmatpush.bf16.msra.mxu0 %v1101
    %1604 = vmatpush.bf16.msra.mxu0 %v1093
    %1605 = vmatpush.bf16.msra.mxu0 %v1085
    %1606 = vmatpush.bf16.msra.mxu0 %v1077
    %1607 = vmatmul.bf16.gmra.mxu0 %v1597
    %v1608 = vpop.f32.mrf.mxu0
    %v1609 = vadd.f32 0.0, %v1608
    %v1610 = vpop.f32.mrf.mxu0
    %1611 = vdwg.mxu0
    %1612 = vmatpush.bf16.msra.mxu0 %v1197
    %1613 = vmatpush.bf16.msra.mxu0 %v1189
    %1614 = vmatpush.bf16.msra.mxu0 %v1181
    %1615 = vmatpush.bf16.msra.mxu0 %v1173
    %1616 = vmatpush.bf16.msra.mxu0 %v1165
    %1617 = vmatpush.bf16.msra.mxu0 %v1157
    %1618 = vmatpush.bf16.msra.mxu0 %v1149
    %1619 = vmatpush.bf16.msra.mxu0 %v1141
    %1620 = vmatmul.bf16.gmra.mxu0 %v1598
    %v1621 = vpop.f32.mrf.mxu0
    %v1622 = vadd.f32 %v1609, %v1621
    %v1623 = vpop.f32.mrf.mxu0
    %1624 = vdwg.mxu0
    %1625 = vmatpush.bf16.msra.mxu0 %v1134
    %1626 = vmatpush.bf16.msra.mxu0 %v1126
    %1627 = vmatpush.bf16.msra.mxu0 %v1118
    %1628 = vmatpush.bf16.msra.mxu0 %v1110
    %1629 = vmatpush.bf16.msra.mxu0 %v1102
    %1630 = vmatpush.bf16.msra.mxu0 %v1094
    %1631 = vmatpush.bf16.msra.mxu0 %v1086
    %1632 = vmatpush.bf16.msra.mxu0 %v1078
    %1633 = vmatmul.bf16.gmra.mxu0 %v1597
    %v1634 = vpop.f32.mrf.mxu0
    %v1635 = vadd.f32 0.0, %v1634
    %v1636 = vpop.f32.mrf.mxu0
    %1637 = vdwg.mxu0
    %1638 = vmatpush.bf16.msra.mxu0 %v1198
    %1639 = vmatpush.bf16.msra.mxu0 %v1190
    %1640 = vmatpush.bf16.msra.mxu0 %v1182
    %1641 = vmatpush.bf16.msra.mxu0 %v1174
    %1642 = vmatpush.bf16.msra.mxu0 %v1166
    %1643 = vmatpush.bf16.msra.mxu0 %v1158
    %1644 = vmatpush.bf16.msra.mxu0 %v1150
    %1645 = vmatpush.bf16.msra.mxu0 %v1142
    %1646 = vmatmul.bf16.gmra.mxu0 %v1598
    %v1647 = vpop.f32.mrf.mxu0
    %v1648 = vadd.f32 %v1635, %v1647
    %v1649 = vpop.f32.mrf.mxu0
    %1650 = vdwg.mxu0
    %1651 = vmatpush.bf16.msra.mxu0 %v1135
    %1652 = vmatpush.bf16.msra.mxu0 %v1127
    %1653 = vmatpush.bf16.msra.mxu0 %v1119
    %1654 = vmatpush.bf16.msra.mxu0 %v1111
    %1655 = vmatpush.bf16.msra.mxu0 %v1103
    %1656 = vmatpush.bf16.msra.mxu0 %v1095
    %1657 = vmatpush.bf16.msra.mxu0 %v1087
    %1658 = vmatpush.bf16.msra.mxu0 %v1079
    %1659 = vmatmul.bf16.gmra.mxu0 %v1597
    %v1660 = vpop.f32.mrf.mxu0
    %v1661 = vadd.f32 0.0, %v1660
    %v1662 = vpop.f32.mrf.mxu0
    %1663 = vdwg.mxu0
    %1664 = vmatpush.bf16.msra.mxu0 %v1199
    %1665 = vmatpush.bf16.msra.mxu0 %v1191
    %1666 = vmatpush.bf16.msra.mxu0 %v1183
    %1667 = vmatpush.bf16.msra.mxu0 %v1175
    %1668 = vmatpush.bf16.msra.mxu0 %v1167
    %1669 = vmatpush.bf16.msra.mxu0 %v1159
    %1670 = vmatpush.bf16.msra.mxu0 %v1151
    %1671 = vmatpush.bf16.msra.mxu0 %v1143
    %1672 = vmatmul.bf16.gmra.mxu0 %v1598
    %v1673 = vpop.f32.mrf.mxu0
    %v1674 = vadd.f32 %v1661, %v1673
    %v1675 = vpop.f32.mrf.mxu0
    %1676 = vdwg.mxu0
    %1677 = vmatpush.bf16.msra.mxu0 %v1136
    %1678 = vmatpush.bf16.msra.mxu0 %v1128
    %1679 = vmatpush.bf16.msra.mxu0 %v1120
    %1680 = vmatpush.bf16.msra.mxu0 %v1112
    %1681 = vmatpush.bf16.msra.mxu0 %v1104
    %1682 = vmatpush.bf16.msra.mxu0 %v1096
    %1683 = vmatpush.bf16.msra.mxu0 %v1088
    %1684 = vmatpush.bf16.msra.mxu0 %v1080
    %1685 = vmatmul.bf16.gmra.mxu0 %v1597
    %v1686 = vpop.f32.mrf.mxu0
    %v1687 = vadd.f32 0.0, %v1686
    %v1688 = vpop.f32.mrf.mxu0
    %1689 = vdwg.mxu0
    %1690 = vmatpush.bf16.msra.mxu0 %v1200
    %1691 = vmatpush.bf16.msra.mxu0 %v1192
    %1692 = vmatpush.bf16.msra.mxu0 %v1184
    %1693 = vmatpush.bf16.msra.mxu0 %v1176
    %1694 = vmatpush.bf16.msra.mxu0 %v1168
    %1695 = vmatpush.bf16.msra.mxu0 %v1160
    %1696 = vmatpush.bf16.msra.mxu0 %v1152
    %1697 = vmatpush.bf16.msra.mxu0 %v1144
    %1698 = vmatmul.bf16.gmra.mxu0 %v1598
    %v1699 = vpop.f32.mrf.mxu0
    %v1700 = vadd.f32 %v1687, %v1699
    %v1701 = vpop.f32.mrf.mxu0
    %1702 = vdwg.mxu0
    %1703 = vmatpush.bf16.msra.mxu0 %v1137
    %1704 = vmatpush.bf16.msra.mxu0 %v1129
    %1705 = vmatpush.bf16.msra.mxu0 %v1121
    %1706 = vmatpush.bf16.msra.mxu0 %v1113
    %1707 = vmatpush.bf16.msra.mxu0 %v1105
    %1708 = vmatpush.bf16.msra.mxu0 %v1097
    %1709 = vmatpush.bf16.msra.mxu0 %v1089
    %1710 = vmatpush.bf16.msra.mxu0 %v1081
    %1711 = vmatmul.bf16.gmra.mxu0 %v1597
    %v1712 = vpop.f32.mrf.mxu0
    %v1713 = vadd.f32 0.0, %v1712
    %v1714 = vpop.f32.mrf.mxu0
    %1715 = vdwg.mxu0
    %1716 = vmatpush.bf16.msra.mxu0 %v1201
    %1717 = vmatpush.bf16.msra.mxu0 %v1193
    %1718 = vmatpush.bf16.msra.mxu0 %v1185
    %1719 = vmatpush.bf16.msra.mxu0 %v1177
    %1720 = vmatpush.bf16.msra.mxu0 %v1169
    %1721 = vmatpush.bf16.msra.mxu0 %v1161
    %1722 = vmatpush.bf16.msra.mxu0 %v1153
    %1723 = vmatpush.bf16.msra.mxu0 %v1145
    %1724 = vmatmul.bf16.gmra.mxu0 %v1598
    %v1725 = vpop.f32.mrf.mxu0
    %v1726 = vadd.f32 %v1713, %v1725
    %v1727 = vpop.f32.mrf.mxu0
    %1728 = vdwg.mxu0
    %1729 = vmatpush.bf16.msra.mxu0 %v1138
    %1730 = vmatpush.bf16.msra.mxu0 %v1130
    %1731 = vmatpush.bf16.msra.mxu0 %v1122
    %1732 = vmatpush.bf16.msra.mxu0 %v1114
    %1733 = vmatpush.bf16.msra.mxu0 %v1106
    %1734 = vmatpush.bf16.msra.mxu0 %v1098
    %1735 = vmatpush.bf16.msra.mxu0 %v1090
    %1736 = vmatpush.bf16.msra.mxu0 %v1082
    %1737 = vmatmul.bf16.gmra.mxu0 %v1597
    %v1738 = vpop.f32.mrf.mxu0
    %v1739 = vadd.f32 0.0, %v1738
    %v1740 = vpop.f32.mrf.mxu0
    %1741 = vdwg.mxu0
    %1742 = vmatpush.bf16.msra.mxu0 %v1202
    %1743 = vmatpush.bf16.msra.mxu0 %v1194
    %1744 = vmatpush.bf16.msra.mxu0 %v1186
    %1745 = vmatpush.bf16.msra.mxu0 %v1178
    %1746 = vmatpush.bf16.msra.mxu0 %v1170
    %1747 = vmatpush.bf16.msra.mxu0 %v1162
    %1748 = vmatpush.bf16.msra.mxu0 %v1154
    %1749 = vmatpush.bf16.msra.mxu0 %v1146
    %1750 = vmatmul.bf16.gmra.mxu0 %v1598
    %v1751 = vpop.f32.mrf.mxu0
    %v1752 = vadd.f32 %v1739, %v1751
    %v1753 = vpop.f32.mrf.mxu0
    %1754 = vdwg.mxu0
    %1755 = vmatpush.bf16.msra.mxu0 %v1139
    %1756 = vmatpush.bf16.msra.mxu0 %v1131
    %1757 = vmatpush.bf16.msra.mxu0 %v1123
    %1758 = vmatpush.bf16.msra.mxu0 %v1115
    %1759 = vmatpush.bf16.msra.mxu0 %v1107
    %1760 = vmatpush.bf16.msra.mxu0 %v1099
    %1761 = vmatpush.bf16.msra.mxu0 %v1091
    %1762 = vmatpush.bf16.msra.mxu0 %v1083
    %1763 = vmatmul.bf16.gmra.mxu0 %v1597
    %v1764 = vpop.f32.mrf.mxu0
    %v1765 = vadd.f32 0.0, %v1764
    %v1766 = vpop.f32.mrf.mxu0
    %1767 = vdwg.mxu0
    %1768 = vmatpush.bf16.msra.mxu0 %v1203
    %1769 = vmatpush.bf16.msra.mxu0 %v1195
    %1770 = vmatpush.bf16.msra.mxu0 %v1187
    %1771 = vmatpush.bf16.msra.mxu0 %v1179
    %1772 = vmatpush.bf16.msra.mxu0 %v1171
    %1773 = vmatpush.bf16.msra.mxu0 %v1163
    %1774 = vmatpush.bf16.msra.mxu0 %v1155
    %1775 = vmatpush.bf16.msra.mxu0 %v1147
    %1776 = vmatmul.bf16.gmra.mxu0 %v1598
    %v1777 = vpop.f32.mrf.mxu0
    %v1778 = vadd.f32 %v1765, %v1777
    %v1779 = vpop.f32.mrf.mxu0
    %1780 = vdwg.mxu0
    %1781 = vmatpush.bf16.msra.mxu0 %v1140
    %1782 = vmatpush.bf16.msra.mxu0 %v1132
    %1783 = vmatpush.bf16.msra.mxu0 %v1124
    %1784 = vmatpush.bf16.msra.mxu0 %v1116
    %1785 = vmatpush.bf16.msra.mxu0 %v1108
    %1786 = vmatpush.bf16.msra.mxu0 %v1100
    %1787 = vmatpush.bf16.msra.mxu0 %v1092
    %1788 = vmatpush.bf16.msra.mxu0 %v1084
    %1789 = vmatmul.bf16.gmra.mxu0 %v1597
    %v1790 = vpop.f32.mrf.mxu0
    %v1791 = vadd.f32 0.0, %v1790
    %v1792 = vpop.f32.mrf.mxu0
    %1793 = vdwg.mxu0
    %1794 = vmatpush.bf16.msra.mxu0 %v1204
    %1795 = vmatpush.bf16.msra.mxu0 %v1196
    %1796 = vmatpush.bf16.msra.mxu0 %v1188
    %1797 = vmatpush.bf16.msra.mxu0 %v1180
    %1798 = vmatpush.bf16.msra.mxu0 %v1172
    %1799 = vmatpush.bf16.msra.mxu0 %v1164
    %1800 = vmatpush.bf16.msra.mxu0 %v1156
    %1801 = vmatpush.bf16.msra.mxu0 %v1148
    %1802 = vmatmul.bf16.gmra.mxu0 %v1598
    %v1803 = vpop.f32.mrf.mxu0
    %v1804 = vadd.f32 %v1791, %v1803
    %v1805 = vpop.f32.mrf.mxu0
    %1806 = vdwg.mxu0
    %s1807 = scalar_lea.vmem [#allocation2], 32
    %v1808 = vld [vmem:[%s1807] sm:$0xff]
    %v1809 = vld [vmem:[%s1807 + $0x8] sm:$0xff]
    %v1810 = vld [vmem:[%s1807 + $0x10] sm:$0xff]
    %v1811 = vld [vmem:[%s1807 + $0x18] sm:$0xff]
    %v1812 = vadd.f32 %v1808, %v1622
    %v1813 = vadd.f32 %v1809, %v1648
    %v1814 = vadd.f32 %v1810, %v1674
    %v1815 = vadd.f32 %v1811, %v1700
    %v1816 = vmul.f32 %v1812, 0.5
    %v1817 = vtanh.pop %v1816
    %v1818 = vmul.f32 %v1817, 0.5
    %v1819 = vadd.f32 %v1818, 0.5
    %v1820 = vmul.f32 %v1813, 0.5
    %v1821 = vtanh.pop %v1820
    %v1822 = vmul.f32 %v1821, 0.5
    %v1823 = vadd.f32 %v1822, 0.5
    %v1824 = vtanh.pop %v1814
    %v1825 = vmul.f32 %v1815, 0.5
    %v1826 = vtanh.pop %v1825
    %v1827 = vmul.f32 %v1826, 0.5
    %v1828 = vadd.f32 %v1827, 0.5
    %v1829 = vmul.f32 %v1823, %v1564
    %v1830 = vmul.f32 %v1819, %v1824
    %v1831 = vadd.f32 %v1829, %v1830
    %v1832 = vtanh.pop %v1831
    %v1833 = vmul.f32 %v1828, %v1832
    %s1834 = scalar_lea.vmem [#allocation3], 192
    %v1835 = vld [vmem:[%s1834] sm:$0xff]
    %v1836 = vld [vmem:[%s1834 + $0x8] sm:$0xff]
    %v1837 = vld [vmem:[%s1834 + $0x10] sm:$0xff]
    %v1838 = vld [vmem:[%s1834 + $0x18] sm:$0xff]
    %v1839 = vadd.f32 %v1835, %v1726
    %v1840 = vadd.f32 %v1836, %v1752
    %v1841 = vadd.f32 %v1837, %v1778
    %v1842 = vadd.f32 %v1838, %v1804
    %v1843 = vmul.f32 %v1839, 0.5
    %v1844 = vtanh.pop %v1843
    %v1845 = vmul.f32 %v1844, 0.5
    %v1846 = vadd.f32 %v1845, 0.5
    %v1847 = vmul.f32 %v1840, 0.5
    %v1848 = vtanh.pop %v1847
    %v1849 = vmul.f32 %v1848, 0.5
    %v1850 = vadd.f32 %v1849, 0.5
    %v1851 = vtanh.pop %v1841
    %v1852 = vmul.f32 %v1842, 0.5
    %v1853 = vtanh.pop %v1852
    %v1854 = vmul.f32 %v1853, 0.5
    %v1855 = vadd.f32 %v1854, 0.5
    %v1856 = vmul.f32 %v1850, %v1591
    %v1857 = vmul.f32 %v1846, %v1851
    %v1858 = vadd.f32 %v1856, %v1857
    %v1859 = vtanh.pop %v1858
    %v1860 = vmul.f32 %v1855, %v1859
    %s1861 = scalar_lea.vmem [#allocation4], 8
    %1862 = vst [vmem:[%s1861] sm:$0xff] %v1833
    %s1863 = scalar_lea.vmem [#allocation5], 48
    %1864 = vst [vmem:[%s1863] sm:$0xff] %v1860
    %v1865 = vpack.c.bf16 %v1833, %v1833
    %v1866 = vpack.c.bf16 %v1860, %v1860
    %1867 = vmatpush.bf16.msra.mxu0 %v1133
    %1868 = vmatpush.bf16.msra.mxu0 %v1125
    %1869 = vmatpush.bf16.msra.mxu0 %v1117
    %1870 = vmatpush.bf16.msra.mxu0 %v1109
    %1871 = vmatpush.bf16.msra.mxu0 %v1101
    %1872 = vmatpush.bf16.msra.mxu0 %v1093
    %1873 = vmatpush.bf16.msra.mxu0 %v1085
    %1874 = vmatpush.bf16.msra.mxu0 %v1077
    %1875 = vmatmul.bf16.gmra.mxu0 %v1865
    %v1876 = vpop.f32.mrf.mxu0
    %v1877 = vadd.f32 0.0, %v1876
    %v1878 = vpop.f32.mrf.mxu0
    %1879 = vdwg.mxu0
    %1880 = vmatpush.bf16.msra.mxu0 %v1197
    %1881 = vmatpush.bf16.msra.mxu0 %v1189
    %1882 = vmatpush.bf16.msra.mxu0 %v1181
    %1883 = vmatpush.bf16.msra.mxu0 %v1173
    %1884 = vmatpush.bf16.msra.mxu0 %v1165
    %1885 = vmatpush.bf16.msra.mxu0 %v1157
    %1886 = vmatpush.bf16.msra.mxu0 %v1149
    %1887 = vmatpush.bf16.msra.mxu0 %v1141
    %1888 = vmatmul.bf16.gmra.mxu0 %v1866
    %v1889 = vpop.f32.mrf.mxu0
    %v1890 = vadd.f32 %v1877, %v1889
    %v1891 = vpop.f32.mrf.mxu0
    %1892 = vdwg.mxu0
    %1893 = vmatpush.bf16.msra.mxu0 %v1134
    %1894 = vmatpush.bf16.msra.mxu0 %v1126
    %1895 = vmatpush.bf16.msra.mxu0 %v1118
    %1896 = vmatpush.bf16.msra.mxu0 %v1110
    %1897 = vmatpush.bf16.msra.mxu0 %v1102
    %1898 = vmatpush.bf16.msra.mxu0 %v1094
    %1899 = vmatpush.bf16.msra.mxu0 %v1086
    %1900 = vmatpush.bf16.msra.mxu0 %v1078
    %1901 = vmatmul.bf16.gmra.mxu0 %v1865
    %v1902 = vpop.f32.mrf.mxu0
    %v1903 = vadd.f32 0.0, %v1902
    %v1904 = vpop.f32.mrf.mxu0
    %1905 = vdwg.mxu0
    %1906 = vmatpush.bf16.msra.mxu0 %v1198
    %1907 = vmatpush.bf16.msra.mxu0 %v1190
    %1908 = vmatpush.bf16.msra.mxu0 %v1182
    %1909 = vmatpush.bf16.msra.mxu0 %v1174
    %1910 = vmatpush.bf16.msra.mxu0 %v1166
    %1911 = vmatpush.bf16.msra.mxu0 %v1158
    %1912 = vmatpush.bf16.msra.mxu0 %v1150
    %1913 = vmatpush.bf16.msra.mxu0 %v1142
    %1914 = vmatmul.bf16.gmra.mxu0 %v1866
    %v1915 = vpop.f32.mrf.mxu0
    %v1916 = vadd.f32 %v1903, %v1915
    %v1917 = vpop.f32.mrf.mxu0
    %1918 = vdwg.mxu0
    %1919 = vmatpush.bf16.msra.mxu0 %v1135
    %1920 = vmatpush.bf16.msra.mxu0 %v1127
    %1921 = vmatpush.bf16.msra.mxu0 %v1119
    %1922 = vmatpush.bf16.msra.mxu0 %v1111
    %1923 = vmatpush.bf16.msra.mxu0 %v1103
    %1924 = vmatpush.bf16.msra.mxu0 %v1095
    %1925 = vmatpush.bf16.msra.mxu0 %v1087
    %1926 = vmatpush.bf16.msra.mxu0 %v1079
    %1927 = vmatmul.bf16.gmra.mxu0 %v1865
    %v1928 = vpop.f32.mrf.mxu0
    %v1929 = vadd.f32 0.0, %v1928
    %v1930 = vpop.f32.mrf.mxu0
    %1931 = vdwg.mxu0
    %1932 = vmatpush.bf16.msra.mxu0 %v1199
    %1933 = vmatpush.bf16.msra.mxu0 %v1191
    %1934 = vmatpush.bf16.msra.mxu0 %v1183
    %1935 = vmatpush.bf16.msra.mxu0 %v1175
    %1936 = vmatpush.bf16.msra.mxu0 %v1167
    %1937 = vmatpush.bf16.msra.mxu0 %v1159
    %1938 = vmatpush.bf16.msra.mxu0 %v1151
    %1939 = vmatpush.bf16.msra.mxu0 %v1143
    %1940 = vmatmul.bf16.gmra.mxu0 %v1866
    %v1941 = vpop.f32.mrf.mxu0
    %v1942 = vadd.f32 %v1929, %v1941
    %v1943 = vpop.f32.mrf.mxu0
    %1944 = vdwg.mxu0
    %1945 = vmatpush.bf16.msra.mxu0 %v1136
    %1946 = vmatpush.bf16.msra.mxu0 %v1128
    %1947 = vmatpush.bf16.msra.mxu0 %v1120
    %1948 = vmatpush.bf16.msra.mxu0 %v1112
    %1949 = vmatpush.bf16.msra.mxu0 %v1104
    %1950 = vmatpush.bf16.msra.mxu0 %v1096
    %1951 = vmatpush.bf16.msra.mxu0 %v1088
    %1952 = vmatpush.bf16.msra.mxu0 %v1080
    %1953 = vmatmul.bf16.gmra.mxu0 %v1865
    %v1954 = vpop.f32.mrf.mxu0
    %v1955 = vadd.f32 0.0, %v1954
    %v1956 = vpop.f32.mrf.mxu0
    %1957 = vdwg.mxu0
    %1958 = vmatpush.bf16.msra.mxu0 %v1200
    %1959 = vmatpush.bf16.msra.mxu0 %v1192
    %1960 = vmatpush.bf16.msra.mxu0 %v1184
    %1961 = vmatpush.bf16.msra.mxu0 %v1176
    %1962 = vmatpush.bf16.msra.mxu0 %v1168
    %1963 = vmatpush.bf16.msra.mxu0 %v1160
    %1964 = vmatpush.bf16.msra.mxu0 %v1152
    %1965 = vmatpush.bf16.msra.mxu0 %v1144
    %1966 = vmatmul.bf16.gmra.mxu0 %v1866
    %v1967 = vpop.f32.mrf.mxu0
    %v1968 = vadd.f32 %v1955, %v1967
    %v1969 = vpop.f32.mrf.mxu0
    %1970 = vdwg.mxu0
    %1971 = vmatpush.bf16.msra.mxu0 %v1137
    %1972 = vmatpush.bf16.msra.mxu0 %v1129
    %1973 = vmatpush.bf16.msra.mxu0 %v1121
    %1974 = vmatpush.bf16.msra.mxu0 %v1113
    %1975 = vmatpush.bf16.msra.mxu0 %v1105
    %1976 = vmatpush.bf16.msra.mxu0 %v1097
    %1977 = vmatpush.bf16.msra.mxu0 %v1089
    %1978 = vmatpush.bf16.msra.mxu0 %v1081
    %1979 = vmatmul.bf16.gmra.mxu0 %v1865
    %v1980 = vpop.f32.mrf.mxu0
    %v1981 = vadd.f32 0.0, %v1980
    %v1982 = vpop.f32.mrf.mxu0
    %1983 = vdwg.mxu0
    %1984 = vmatpush.bf16.msra.mxu0 %v1201
    %1985 = vmatpush.bf16.msra.mxu0 %v1193
    %1986 = vmatpush.bf16.msra.mxu0 %v1185
    %1987 = vmatpush.bf16.msra.mxu0 %v1177
    %1988 = vmatpush.bf16.msra.mxu0 %v1169
    %1989 = vmatpush.bf16.msra.mxu0 %v1161
    %1990 = vmatpush.bf16.msra.mxu0 %v1153
    %1991 = vmatpush.bf16.msra.mxu0 %v1145
    %1992 = vmatmul.bf16.gmra.mxu0 %v1866
    %v1993 = vpop.f32.mrf.mxu0
    %v1994 = vadd.f32 %v1981, %v1993
    %v1995 = vpop.f32.mrf.mxu0
    %1996 = vdwg.mxu0
    %1997 = vmatpush.bf16.msra.mxu0 %v1138
    %1998 = vmatpush.bf16.msra.mxu0 %v1130
    %1999 = vmatpush.bf16.msra.mxu0 %v1122
    %2000 = vmatpush.bf16.msra.mxu0 %v1114
    %2001 = vmatpush.bf16.msra.mxu0 %v1106
    %2002 = vmatpush.bf16.msra.mxu0 %v1098
    %2003 = vmatpush.bf16.msra.mxu0 %v1090
    %2004 = vmatpush.bf16.msra.mxu0 %v1082
    %2005 = vmatmul.bf16.gmra.mxu0 %v1865
    %v2006 = vpop.f32.mrf.mxu0
    %v2007 = vadd.f32 0.0, %v2006
    %v2008 = vpop.f32.mrf.mxu0
    %2009 = vdwg.mxu0
    %2010 = vmatpush.bf16.msra.mxu0 %v1202
    %2011 = vmatpush.bf16.msra.mxu0 %v1194
    %2012 = vmatpush.bf16.msra.mxu0 %v1186
    %2013 = vmatpush.bf16.msra.mxu0 %v1178
    %2014 = vmatpush.bf16.msra.mxu0 %v1170
    %2015 = vmatpush.bf16.msra.mxu0 %v1162
    %2016 = vmatpush.bf16.msra.mxu0 %v1154
    %2017 = vmatpush.bf16.msra.mxu0 %v1146
    %2018 = vmatmul.bf16.gmra.mxu0 %v1866
    %v2019 = vpop.f32.mrf.mxu0
    %v2020 = vadd.f32 %v2007, %v2019
    %v2021 = vpop.f32.mrf.mxu0
    %2022 = vdwg.mxu0
    %2023 = vmatpush.bf16.msra.mxu0 %v1139
    %2024 = vmatpush.bf16.msra.mxu0 %v1131
    %2025 = vmatpush.bf16.msra.mxu0 %v1123
    %2026 = vmatpush.bf16.msra.mxu0 %v1115
    %2027 = vmatpush.bf16.msra.mxu0 %v1107
    %2028 = vmatpush.bf16.msra.mxu0 %v1099
    %2029 = vmatpush.bf16.msra.mxu0 %v1091
    %2030 = vmatpush.bf16.msra.mxu0 %v1083
    %2031 = vmatmul.bf16.gmra.mxu0 %v1865
    %v2032 = vpop.f32.mrf.mxu0
    %v2033 = vadd.f32 0.0, %v2032
    %v2034 = vpop.f32.mrf.mxu0
    %2035 = vdwg.mxu0
    %2036 = vmatpush.bf16.msra.mxu0 %v1203
    %2037 = vmatpush.bf16.msra.mxu0 %v1195
    %2038 = vmatpush.bf16.msra.mxu0 %v1187
    %2039 = vmatpush.bf16.msra.mxu0 %v1179
    %2040 = vmatpush.bf16.msra.mxu0 %v1171
    %2041 = vmatpush.bf16.msra.mxu0 %v1163
    %2042 = vmatpush.bf16.msra.mxu0 %v1155
    %2043 = vmatpush.bf16.msra.mxu0 %v1147
    %2044 = vmatmul.bf16.gmra.mxu0 %v1866
    %v2045 = vpop.f32.mrf.mxu0
    %v2046 = vadd.f32 %v2033, %v2045
    %v2047 = vpop.f32.mrf.mxu0
    %2048 = vdwg.mxu0
    %2049 = vmatpush.bf16.msra.mxu0 %v1140
    %2050 = vmatpush.bf16.msra.mxu0 %v1132
    %2051 = vmatpush.bf16.msra.mxu0 %v1124
    %2052 = vmatpush.bf16.msra.mxu0 %v1116
    %2053 = vmatpush.bf16.msra.mxu0 %v1108
    %2054 = vmatpush.bf16.msra.mxu0 %v1100
    %2055 = vmatpush.bf16.msra.mxu0 %v1092
    %2056 = vmatpush.bf16.msra.mxu0 %v1084
    %2057 = vmatmul.bf16.gmra.mxu0 %v1865
    %v2058 = vpop.f32.mrf.mxu0
    %v2059 = vadd.f32 0.0, %v2058
    %v2060 = vpop.f32.mrf.mxu0
    %2061 = vdwg.mxu0
    %2062 = vmatpush.bf16.msra.mxu0 %v1204
    %2063 = vmatpush.bf16.msra.mxu0 %v1196
    %2064 = vmatpush.bf16.msra.mxu0 %v1188
    %2065 = vmatpush.bf16.msra.mxu0 %v1180
    %2066 = vmatpush.bf16.msra.mxu0 %v1172
    %2067 = vmatpush.bf16.msra.mxu0 %v1164
    %2068 = vmatpush.bf16.msra.mxu0 %v1156
    %2069 = vmatpush.bf16.msra.mxu0 %v1148
    %2070 = vmatmul.bf16.gmra.mxu0 %v1866
    %v2071 = vpop.f32.mrf.mxu0
    %v2072 = vadd.f32 %v2059, %v2071
    %v2073 = vpop.f32.mrf.mxu0
    %2074 = vdwg.mxu0
    %s2075 = scalar_lea.vmem [#allocation2], 64
    %v2076 = vld [vmem:[%s2075] sm:$0xff]
    %v2077 = vld [vmem:[%s2075 + $0x8] sm:$0xff]
    %v2078 = vld [vmem:[%s2075 + $0x10] sm:$0xff]
    %v2079 = vld [vmem:[%s2075 + $0x18] sm:$0xff]
    %v2080 = vadd.f32 %v2076, %v1890
    %v2081 = vadd.f32 %v2077, %v1916
    %v2082 = vadd.f32 %v2078, %v1942
    %v2083 = vadd.f32 %v2079, %v1968
    %v2084 = vmul.f32 %v2080, 0.5
    %v2085 = vtanh.pop %v2084
    %v2086 = vmul.f32 %v2085, 0.5
    %v2087 = vadd.f32 %v2086, 0.5
    %v2088 = vmul.f32 %v2081, 0.5
    %v2089 = vtanh.pop %v2088
    %v2090 = vmul.f32 %v2089, 0.5
    %v2091 = vadd.f32 %v2090, 0.5
    %v2092 = vtanh.pop %v2082
    %v2093 = vmul.f32 %v2083, 0.5
    %v2094 = vtanh.pop %v2093
    %v2095 = vmul.f32 %v2094, 0.5
    %v2096 = vadd.f32 %v2095, 0.5
    %v2097 = vmul.f32 %v2091, %v1831
    %v2098 = vmul.f32 %v2087, %v2092
    %v2099 = vadd.f32 %v2097, %v2098
    %v2100 = vtanh.pop %v2099
    %v2101 = vmul.f32 %v2096, %v2100
    %s2102 = scalar_lea.vmem [#allocation3], 160
    %v2103 = vld [vmem:[%s2102] sm:$0xff]
    %v2104 = vld [vmem:[%s2102 + $0x8] sm:$0xff]
    %v2105 = vld [vmem:[%s2102 + $0x10] sm:$0xff]
    %v2106 = vld [vmem:[%s2102 + $0x18] sm:$0xff]
    %v2107 = vadd.f32 %v2103, %v1994
    %v2108 = vadd.f32 %v2104, %v2020
    %v2109 = vadd.f32 %v2105, %v2046
    %v2110 = vadd.f32 %v2106, %v2072
    %v2111 = vmul.f32 %v2107, 0.5
    %v2112 = vtanh.pop %v2111
    %v2113 = vmul.f32 %v2112, 0.5
    %v2114 = vadd.f32 %v2113, 0.5
    %v2115 = vmul.f32 %v2108, 0.5
    %v2116 = vtanh.pop %v2115
    %v2117 = vmul.f32 %v2116, 0.5
    %v2118 = vadd.f32 %v2117, 0.5
    %v2119 = vtanh.pop %v2109
    %v2120 = vmul.f32 %v2110, 0.5
    %v2121 = vtanh.pop %v2120
    %v2122 = vmul.f32 %v2121, 0.5
    %v2123 = vadd.f32 %v2122, 0.5
    %v2124 = vmul.f32 %v2118, %v1858
    %v2125 = vmul.f32 %v2114, %v2119
    %v2126 = vadd.f32 %v2124, %v2125
    %v2127 = vtanh.pop %v2126
    %v2128 = vmul.f32 %v2123, %v2127
    %s2129 = scalar_lea.vmem [#allocation4], 16
    %2130 = vst [vmem:[%s2129] sm:$0xff] %v2101
    %s2131 = scalar_lea.vmem [#allocation5], 40
    %2132 = vst [vmem:[%s2131] sm:$0xff] %v2128
    %v2133 = vpack.c.bf16 %v2101, %v2101
    %v2134 = vpack.c.bf16 %v2128, %v2128
    %2135 = vmatpush.bf16.msra.mxu0 %v1133
    %2136 = vmatpush.bf16.msra.mxu0 %v1125
    %2137 = vmatpush.bf16.msra.mxu0 %v1117
    %2138 = vmatpush.bf16.msra.mxu0 %v1109
    %2139 = vmatpush.bf16.msra.mxu0 %v1101
    %2140 = vmatpush.bf16.msra.mxu0 %v1093
    %2141 = vmatpush.bf16.msra.mxu0 %v1085
    %2142 = vmatpush.bf16.msra.mxu0 %v1077
    %2143 = vmatmul.bf16.gmra.mxu0 %v2133
    %v2144 = vpop.f32.mrf.mxu0
    %v2145 = vadd.f32 0.0, %v2144
    %v2146 = vpop.f32.mrf.mxu0
    %2147 = vdwg.mxu0
    %2148 = vmatpush.bf16.msra.mxu0 %v1197
    %2149 = vmatpush.bf16.msra.mxu0 %v1189
    %2150 = vmatpush.bf16.msra.mxu0 %v1181
    %2151 = vmatpush.bf16.msra.mxu0 %v1173
    %2152 = vmatpush.bf16.msra.mxu0 %v1165
    %2153 = vmatpush.bf16.msra.mxu0 %v1157
    %2154 = vmatpush.bf16.msra.mxu0 %v1149
    %2155 = vmatpush.bf16.msra.mxu0 %v1141
    %2156 = vmatmul.bf16.gmra.mxu0 %v2134
    %v2157 = vpop.f32.mrf.mxu0
    %v2158 = vadd.f32 %v2145, %v2157
    %v2159 = vpop.f32.mrf.mxu0
    %2160 = vdwg.mxu0
    %2161 = vmatpush.bf16.msra.mxu0 %v1134
    %2162 = vmatpush.bf16.msra.mxu0 %v1126
    %2163 = vmatpush.bf16.msra.mxu0 %v1118
    %2164 = vmatpush.bf16.msra.mxu0 %v1110
    %2165 = vmatpush.bf16.msra.mxu0 %v1102
    %2166 = vmatpush.bf16.msra.mxu0 %v1094
    %2167 = vmatpush.bf16.msra.mxu0 %v1086
    %2168 = vmatpush.bf16.msra.mxu0 %v1078
    %2169 = vmatmul.bf16.gmra.mxu0 %v2133
    %v2170 = vpop.f32.mrf.mxu0
    %v2171 = vadd.f32 0.0, %v2170
    %v2172 = vpop.f32.mrf.mxu0
    %2173 = vdwg.mxu0
    %2174 = vmatpush.bf16.msra.mxu0 %v1198
    %2175 = vmatpush.bf16.msra.mxu0 %v1190
    %2176 = vmatpush.bf16.msra.mxu0 %v1182
    %2177 = vmatpush.bf16.msra.mxu0 %v1174
    %2178 = vmatpush.bf16.msra.mxu0 %v1166
    %2179 = vmatpush.bf16.msra.mxu0 %v1158
    %2180 = vmatpush.bf16.msra.mxu0 %v1150
    %2181 = vmatpush.bf16.msra.mxu0 %v1142
    %2182 = vmatmul.bf16.gmra.mxu0 %v2134
    %v2183 = vpop.f32.mrf.mxu0
    %v2184 = vadd.f32 %v2171, %v2183
    %v2185 = vpop.f32.mrf.mxu0
    %2186 = vdwg.mxu0
    %2187 = vmatpush.bf16.msra.mxu0 %v1135
    %2188 = vmatpush.bf16.msra.mxu0 %v1127
    %2189 = vmatpush.bf16.msra.mxu0 %v1119
    %2190 = vmatpush.bf16.msra.mxu0 %v1111
    %2191 = vmatpush.bf16.msra.mxu0 %v1103
    %2192 = vmatpush.bf16.msra.mxu0 %v1095
    %2193 = vmatpush.bf16.msra.mxu0 %v1087
    %2194 = vmatpush.bf16.msra.mxu0 %v1079
    %2195 = vmatmul.bf16.gmra.mxu0 %v2133
    %v2196 = vpop.f32.mrf.mxu0
    %v2197 = vadd.f32 0.0, %v2196
    %v2198 = vpop.f32.mrf.mxu0
    %2199 = vdwg.mxu0
    %2200 = vmatpush.bf16.msra.mxu0 %v1199
    %2201 = vmatpush.bf16.msra.mxu0 %v1191
    %2202 = vmatpush.bf16.msra.mxu0 %v1183
    %2203 = vmatpush.bf16.msra.mxu0 %v1175
    %2204 = vmatpush.bf16.msra.mxu0 %v1167
    %2205 = vmatpush.bf16.msra.mxu0 %v1159
    %2206 = vmatpush.bf16.msra.mxu0 %v1151
    %2207 = vmatpush.bf16.msra.mxu0 %v1143
    %2208 = vmatmul.bf16.gmra.mxu0 %v2134
    %v2209 = vpop.f32.mrf.mxu0
    %v2210 = vadd.f32 %v2197, %v2209
    %v2211 = vpop.f32.mrf.mxu0
    %2212 = vdwg.mxu0
    %2213 = vmatpush.bf16.msra.mxu0 %v1136
    %2214 = vmatpush.bf16.msra.mxu0 %v1128
    %2215 = vmatpush.bf16.msra.mxu0 %v1120
    %2216 = vmatpush.bf16.msra.mxu0 %v1112
    %2217 = vmatpush.bf16.msra.mxu0 %v1104
    %2218 = vmatpush.bf16.msra.mxu0 %v1096
    %2219 = vmatpush.bf16.msra.mxu0 %v1088
    %2220 = vmatpush.bf16.msra.mxu0 %v1080
    %2221 = vmatmul.bf16.gmra.mxu0 %v2133
    %v2222 = vpop.f32.mrf.mxu0
    %v2223 = vadd.f32 0.0, %v2222
    %v2224 = vpop.f32.mrf.mxu0
    %2225 = vdwg.mxu0
    %2226 = vmatpush.bf16.msra.mxu0 %v1200
    %2227 = vmatpush.bf16.msra.mxu0 %v1192
    %2228 = vmatpush.bf16.msra.mxu0 %v1184
    %2229 = vmatpush.bf16.msra.mxu0 %v1176
    %2230 = vmatpush.bf16.msra.mxu0 %v1168
    %2231 = vmatpush.bf16.msra.mxu0 %v1160
    %2232 = vmatpush.bf16.msra.mxu0 %v1152
    %2233 = vmatpush.bf16.msra.mxu0 %v1144
    %2234 = vmatmul.bf16.gmra.mxu0 %v2134
    %v2235 = vpop.f32.mrf.mxu0
    %v2236 = vadd.f32 %v2223, %v2235
    %v2237 = vpop.f32.mrf.mxu0
    %2238 = vdwg.mxu0
    %2239 = vmatpush.bf16.msra.mxu0 %v1137
    %2240 = vmatpush.bf16.msra.mxu0 %v1129
    %2241 = vmatpush.bf16.msra.mxu0 %v1121
    %2242 = vmatpush.bf16.msra.mxu0 %v1113
    %2243 = vmatpush.bf16.msra.mxu0 %v1105
    %2244 = vmatpush.bf16.msra.mxu0 %v1097
    %2245 = vmatpush.bf16.msra.mxu0 %v1089
    %2246 = vmatpush.bf16.msra.mxu0 %v1081
    %2247 = vmatmul.bf16.gmra.mxu0 %v2133
    %v2248 = vpop.f32.mrf.mxu0
    %v2249 = vadd.f32 0.0, %v2248
    %v2250 = vpop.f32.mrf.mxu0
    %2251 = vdwg.mxu0
    %2252 = vmatpush.bf16.msra.mxu0 %v1201
    %2253 = vmatpush.bf16.msra.mxu0 %v1193
    %2254 = vmatpush.bf16.msra.mxu0 %v1185
    %2255 = vmatpush.bf16.msra.mxu0 %v1177
    %2256 = vmatpush.bf16.msra.mxu0 %v1169
    %2257 = vmatpush.bf16.msra.mxu0 %v1161
    %2258 = vmatpush.bf16.msra.mxu0 %v1153
    %2259 = vmatpush.bf16.msra.mxu0 %v1145
    %2260 = vmatmul.bf16.gmra.mxu0 %v2134
    %v2261 = vpop.f32.mrf.mxu0
    %v2262 = vadd.f32 %v2249, %v2261
    %v2263 = vpop.f32.mrf.mxu0
    %2264 = vdwg.mxu0
    %2265 = vmatpush.bf16.msra.mxu0 %v1138
    %2266 = vmatpush.bf16.msra.mxu0 %v1130
    %2267 = vmatpush.bf16.msra.mxu0 %v1122
    %2268 = vmatpush.bf16.msra.mxu0 %v1114
    %2269 = vmatpush.bf16.msra.mxu0 %v1106
    %2270 = vmatpush.bf16.msra.mxu0 %v1098
    %2271 = vmatpush.bf16.msra.mxu0 %v1090
    %2272 = vmatpush.bf16.msra.mxu0 %v1082
    %2273 = vmatmul.bf16.gmra.mxu0 %v2133
    %v2274 = vpop.f32.mrf.mxu0
    %v2275 = vadd.f32 0.0, %v2274
    %v2276 = vpop.f32.mrf.mxu0
    %2277 = vdwg.mxu0
    %2278 = vmatpush.bf16.msra.mxu0 %v1202
    %2279 = vmatpush.bf16.msra.mxu0 %v1194
    %2280 = vmatpush.bf16.msra.mxu0 %v1186
    %2281 = vmatpush.bf16.msra.mxu0 %v1178
    %2282 = vmatpush.bf16.msra.mxu0 %v1170
    %2283 = vmatpush.bf16.msra.mxu0 %v1162
    %2284 = vmatpush.bf16.msra.mxu0 %v1154
    %2285 = vmatpush.bf16.msra.mxu0 %v1146
    %2286 = vmatmul.bf16.gmra.mxu0 %v2134
    %v2287 = vpop.f32.mrf.mxu0
    %v2288 = vadd.f32 %v2275, %v2287
    %v2289 = vpop.f32.mrf.mxu0
    %2290 = vdwg.mxu0
    %2291 = vmatpush.bf16.msra.mxu0 %v1139
    %2292 = vmatpush.bf16.msra.mxu0 %v1131
    %2293 = vmatpush.bf16.msra.mxu0 %v1123
    %2294 = vmatpush.bf16.msra.mxu0 %v1115
    %2295 = vmatpush.bf16.msra.mxu0 %v1107
    %2296 = vmatpush.bf16.msra.mxu0 %v1099
    %2297 = vmatpush.bf16.msra.mxu0 %v1091
    %2298 = vmatpush.bf16.msra.mxu0 %v1083
    %2299 = vmatmul.bf16.gmra.mxu0 %v2133
    %v2300 = vpop.f32.mrf.mxu0
    %v2301 = vadd.f32 0.0, %v2300
    %v2302 = vpop.f32.mrf.mxu0
    %2303 = vdwg.mxu0
    %2304 = vmatpush.bf16.msra.mxu0 %v1203
    %2305 = vmatpush.bf16.msra.mxu0 %v1195
    %2306 = vmatpush.bf16.msra.mxu0 %v1187
    %2307 = vmatpush.bf16.msra.mxu0 %v1179
    %2308 = vmatpush.bf16.msra.mxu0 %v1171
    %2309 = vmatpush.bf16.msra.mxu0 %v1163
    %2310 = vmatpush.bf16.msra.mxu0 %v1155
    %2311 = vmatpush.bf16.msra.mxu0 %v1147
    %2312 = vmatmul.bf16.gmra.mxu0 %v2134
    %v2313 = vpop.f32.mrf.mxu0
    %v2314 = vadd.f32 %v2301, %v2313
    %v2315 = vpop.f32.mrf.mxu0
    %2316 = vdwg.mxu0
    %2317 = vmatpush.bf16.msra.mxu0 %v1140
    %2318 = vmatpush.bf16.msra.mxu0 %v1132
    %2319 = vmatpush.bf16.msra.mxu0 %v1124
    %2320 = vmatpush.bf16.msra.mxu0 %v1116
    %2321 = vmatpush.bf16.msra.mxu0 %v1108
    %2322 = vmatpush.bf16.msra.mxu0 %v1100
    %2323 = vmatpush.bf16.msra.mxu0 %v1092
    %2324 = vmatpush.bf16.msra.mxu0 %v1084
    %2325 = vmatmul.bf16.gmra.mxu0 %v2133
    %v2326 = vpop.f32.mrf.mxu0
    %v2327 = vadd.f32 0.0, %v2326
    %v2328 = vpop.f32.mrf.mxu0
    %2329 = vdwg.mxu0
    %2330 = vmatpush.bf16.msra.mxu0 %v1204
    %2331 = vmatpush.bf16.msra.mxu0 %v1196
    %2332 = vmatpush.bf16.msra.mxu0 %v1188
    %2333 = vmatpush.bf16.msra.mxu0 %v1180
    %2334 = vmatpush.bf16.msra.mxu0 %v1172
    %2335 = vmatpush.bf16.msra.mxu0 %v1164
    %2336 = vmatpush.bf16.msra.mxu0 %v1156
    %2337 = vmatpush.bf16.msra.mxu0 %v1148
    %2338 = vmatmul.bf16.gmra.mxu0 %v2134
    %v2339 = vpop.f32.mrf.mxu0
    %v2340 = vadd.f32 %v2327, %v2339
    %v2341 = vpop.f32.mrf.mxu0
    %2342 = vdwg.mxu0
    %s2343 = scalar_lea.vmem [#allocation2], 96
    %v2344 = vld [vmem:[%s2343] sm:$0xff]
    %v2345 = vld [vmem:[%s2343 + $0x8] sm:$0xff]
    %v2346 = vld [vmem:[%s2343 + $0x10] sm:$0xff]
    %v2347 = vld [vmem:[%s2343 + $0x18] sm:$0xff]
    %v2348 = vadd.f32 %v2344, %v2158
    %v2349 = vadd.f32 %v2345, %v2184
    %v2350 = vadd.f32 %v2346, %v2210
    %v2351 = vadd.f32 %v2347, %v2236
    %v2352 = vmul.f32 %v2348, 0.5
    %v2353 = vtanh.pop %v2352
    %v2354 = vmul.f32 %v2353, 0.5
    %v2355 = vadd.f32 %v2354, 0.5
    %v2356 = vmul.f32 %v2349, 0.5
    %v2357 = vtanh.pop %v2356
    %v2358 = vmul.f32 %v2357, 0.5
    %v2359 = vadd.f32 %v2358, 0.5
    %v2360 = vtanh.pop %v2350
    %v2361 = vmul.f32 %v2351, 0.5
    %v2362 = vtanh.pop %v2361
    %v2363 = vmul.f32 %v2362, 0.5
    %v2364 = vadd.f32 %v2363, 0.5
    %v2365 = vmul.f32 %v2359, %v2099
    %v2366 = vmul.f32 %v2355, %v2360
    %v2367 = vadd.f32 %v2365, %v2366
    %v2368 = vtanh.pop %v2367
    %v2369 = vmul.f32 %v2364, %v2368
    %s2370 = scalar_lea.vmem [#allocation3], 128
    %v2371 = vld [vmem:[%s2370] sm:$0xff]
    %v2372 = vld [vmem:[%s2370 + $0x8] sm:$0xff]
    %v2373 = vld [vmem:[%s2370 + $0x10] sm:$0xff]
    %v2374 = vld [vmem:[%s2370 + $0x18] sm:$0xff]
    %v2375 = vadd.f32 %v2371, %v2262
    %v2376 = vadd.f32 %v2372, %v2288
    %v2377 = vadd.f32 %v2373, %v2314
    %v2378 = vadd.f32 %v2374, %v2340
    %v2379 = vmul.f32 %v2375, 0.5
    %v2380 = vtanh.pop %v2379
    %v2381 = vmul.f32 %v2380, 0.5
    %v2382 = vadd.f32 %v2381, 0.5
    %v2383 = vmul.f32 %v2376, 0.5
    %v2384 = vtanh.pop %v2383
    %v2385 = vmul.f32 %v2384, 0.5
    %v2386 = vadd.f32 %v2385, 0.5
    %v2387 = vtanh.pop %v2377
    %v2388 = vmul.f32 %v2378, 0.5
    %v2389 = vtanh.pop %v2388
    %v2390 = vmul.f32 %v2389, 0.5
    %v2391 = vadd.f32 %v2390, 0.5
    %v2392 = vmul.f32 %v2386, %v2126
    %v2393 = vmul.f32 %v2382, %v2387
    %v2394 = vadd.f32 %v2392, %v2393
    %v2395 = vtanh.pop %v2394
    %v2396 = vmul.f32 %v2391, %v2395
    %s2397 = scalar_lea.vmem [#allocation4], 24
    %2398 = vst [vmem:[%s2397] sm:$0xff] %v2369
    %s2399 = scalar_lea.vmem [#allocation5], 32
    %2400 = vst [vmem:[%s2399] sm:$0xff] %v2396
    %v2401 = vpack.c.bf16 %v2369, %v2369
    %v2402 = vpack.c.bf16 %v2396, %v2396
    %2403 = vmatpush.bf16.msra.mxu0 %v1133
    %2404 = vmatpush.bf16.msra.mxu0 %v1125
    %2405 = vmatpush.bf16.msra.mxu0 %v1117
    %2406 = vmatpush.bf16.msra.mxu0 %v1109
    %2407 = vmatpush.bf16.msra.mxu0 %v1101
    %2408 = vmatpush.bf16.msra.mxu0 %v1093
    %2409 = vmatpush.bf16.msra.mxu0 %v1085
    %2410 = vmatpush.bf16.msra.mxu0 %v1077
    %2411 = vmatmul.bf16.gmra.mxu0 %v2401
    %v2412 = vpop.f32.mrf.mxu0
    %v2413 = vadd.f32 0.0, %v2412
    %v2414 = vpop.f32.mrf.mxu0
    %2415 = vdwg.mxu0
    %2416 = vmatpush.bf16.msra.mxu0 %v1197
    %2417 = vmatpush.bf16.msra.mxu0 %v1189
    %2418 = vmatpush.bf16.msra.mxu0 %v1181
    %2419 = vmatpush.bf16.msra.mxu0 %v1173
    %2420 = vmatpush.bf16.msra.mxu0 %v1165
    %2421 = vmatpush.bf16.msra.mxu0 %v1157
    %2422 = vmatpush.bf16.msra.mxu0 %v1149
    %2423 = vmatpush.bf16.msra.mxu0 %v1141
    %2424 = vmatmul.bf16.gmra.mxu0 %v2402
    %v2425 = vpop.f32.mrf.mxu0
    %v2426 = vadd.f32 %v2413, %v2425
    %v2427 = vpop.f32.mrf.mxu0
    %2428 = vdwg.mxu0
    %2429 = vmatpush.bf16.msra.mxu0 %v1134
    %2430 = vmatpush.bf16.msra.mxu0 %v1126
    %2431 = vmatpush.bf16.msra.mxu0 %v1118
    %2432 = vmatpush.bf16.msra.mxu0 %v1110
    %2433 = vmatpush.bf16.msra.mxu0 %v1102
    %2434 = vmatpush.bf16.msra.mxu0 %v1094
    %2435 = vmatpush.bf16.msra.mxu0 %v1086
    %2436 = vmatpush.bf16.msra.mxu0 %v1078
    %2437 = vmatmul.bf16.gmra.mxu0 %v2401
    %v2438 = vpop.f32.mrf.mxu0
    %v2439 = vadd.f32 0.0, %v2438
    %v2440 = vpop.f32.mrf.mxu0
    %2441 = vdwg.mxu0
    %2442 = vmatpush.bf16.msra.mxu0 %v1198
    %2443 = vmatpush.bf16.msra.mxu0 %v1190
    %2444 = vmatpush.bf16.msra.mxu0 %v1182
    %2445 = vmatpush.bf16.msra.mxu0 %v1174
    %2446 = vmatpush.bf16.msra.mxu0 %v1166
    %2447 = vmatpush.bf16.msra.mxu0 %v1158
    %2448 = vmatpush.bf16.msra.mxu0 %v1150
    %2449 = vmatpush.bf16.msra.mxu0 %v1142
    %2450 = vmatmul.bf16.gmra.mxu0 %v2402
    %v2451 = vpop.f32.mrf.mxu0
    %v2452 = vadd.f32 %v2439, %v2451
    %v2453 = vpop.f32.mrf.mxu0
    %2454 = vdwg.mxu0
    %2455 = vmatpush.bf16.msra.mxu0 %v1135
    %2456 = vmatpush.bf16.msra.mxu0 %v1127
    %2457 = vmatpush.bf16.msra.mxu0 %v1119
    %2458 = vmatpush.bf16.msra.mxu0 %v1111
    %2459 = vmatpush.bf16.msra.mxu0 %v1103
    %2460 = vmatpush.bf16.msra.mxu0 %v1095
    %2461 = vmatpush.bf16.msra.mxu0 %v1087
    %2462 = vmatpush.bf16.msra.mxu0 %v1079
    %2463 = vmatmul.bf16.gmra.mxu0 %v2401
    %v2464 = vpop.f32.mrf.mxu0
    %v2465 = vadd.f32 0.0, %v2464
    %v2466 = vpop.f32.mrf.mxu0
    %2467 = vdwg.mxu0
    %2468 = vmatpush.bf16.msra.mxu0 %v1199
    %2469 = vmatpush.bf16.msra.mxu0 %v1191
    %2470 = vmatpush.bf16.msra.mxu0 %v1183
    %2471 = vmatpush.bf16.msra.mxu0 %v1175
    %2472 = vmatpush.bf16.msra.mxu0 %v1167
    %2473 = vmatpush.bf16.msra.mxu0 %v1159
    %2474 = vmatpush.bf16.msra.mxu0 %v1151
    %2475 = vmatpush.bf16.msra.mxu0 %v1143
    %2476 = vmatmul.bf16.gmra.mxu0 %v2402
    %v2477 = vpop.f32.mrf.mxu0
    %v2478 = vadd.f32 %v2465, %v2477
    %v2479 = vpop.f32.mrf.mxu0
    %2480 = vdwg.mxu0
    %2481 = vmatpush.bf16.msra.mxu0 %v1136
    %2482 = vmatpush.bf16.msra.mxu0 %v1128
    %2483 = vmatpush.bf16.msra.mxu0 %v1120
    %2484 = vmatpush.bf16.msra.mxu0 %v1112
    %2485 = vmatpush.bf16.msra.mxu0 %v1104
    %2486 = vmatpush.bf16.msra.mxu0 %v1096
    %2487 = vmatpush.bf16.msra.mxu0 %v1088
    %2488 = vmatpush.bf16.msra.mxu0 %v1080
    %2489 = vmatmul.bf16.gmra.mxu0 %v2401
    %v2490 = vpop.f32.mrf.mxu0
    %v2491 = vadd.f32 0.0, %v2490
    %v2492 = vpop.f32.mrf.mxu0
    %2493 = vdwg.mxu0
    %2494 = vmatpush.bf16.msra.mxu0 %v1200
    %2495 = vmatpush.bf16.msra.mxu0 %v1192
    %2496 = vmatpush.bf16.msra.mxu0 %v1184
    %2497 = vmatpush.bf16.msra.mxu0 %v1176
    %2498 = vmatpush.bf16.msra.mxu0 %v1168
    %2499 = vmatpush.bf16.msra.mxu0 %v1160
    %2500 = vmatpush.bf16.msra.mxu0 %v1152
    %2501 = vmatpush.bf16.msra.mxu0 %v1144
    %2502 = vmatmul.bf16.gmra.mxu0 %v2402
    %v2503 = vpop.f32.mrf.mxu0
    %v2504 = vadd.f32 %v2491, %v2503
    %v2505 = vpop.f32.mrf.mxu0
    %2506 = vdwg.mxu0
    %2507 = vmatpush.bf16.msra.mxu0 %v1137
    %2508 = vmatpush.bf16.msra.mxu0 %v1129
    %2509 = vmatpush.bf16.msra.mxu0 %v1121
    %2510 = vmatpush.bf16.msra.mxu0 %v1113
    %2511 = vmatpush.bf16.msra.mxu0 %v1105
    %2512 = vmatpush.bf16.msra.mxu0 %v1097
    %2513 = vmatpush.bf16.msra.mxu0 %v1089
    %2514 = vmatpush.bf16.msra.mxu0 %v1081
    %2515 = vmatmul.bf16.gmra.mxu0 %v2401
    %v2516 = vpop.f32.mrf.mxu0
    %v2517 = vadd.f32 0.0, %v2516
    %v2518 = vpop.f32.mrf.mxu0
    %2519 = vdwg.mxu0
    %2520 = vmatpush.bf16.msra.mxu0 %v1201
    %2521 = vmatpush.bf16.msra.mxu0 %v1193
    %2522 = vmatpush.bf16.msra.mxu0 %v1185
    %2523 = vmatpush.bf16.msra.mxu0 %v1177
    %2524 = vmatpush.bf16.msra.mxu0 %v1169
    %2525 = vmatpush.bf16.msra.mxu0 %v1161
    %2526 = vmatpush.bf16.msra.mxu0 %v1153
    %2527 = vmatpush.bf16.msra.mxu0 %v1145
    %2528 = vmatmul.bf16.gmra.mxu0 %v2402
    %v2529 = vpop.f32.mrf.mxu0
    %v2530 = vadd.f32 %v2517, %v2529
    %v2531 = vpop.f32.mrf.mxu0
    %2532 = vdwg.mxu0
    %2533 = vmatpush.bf16.msra.mxu0 %v1138
    %2534 = vmatpush.bf16.msra.mxu0 %v1130
    %2535 = vmatpush.bf16.msra.mxu0 %v1122
    %2536 = vmatpush.bf16.msra.mxu0 %v1114
    %2537 = vmatpush.bf16.msra.mxu0 %v1106
    %2538 = vmatpush.bf16.msra.mxu0 %v1098
    %2539 = vmatpush.bf16.msra.mxu0 %v1090
    %2540 = vmatpush.bf16.msra.mxu0 %v1082
    %2541 = vmatmul.bf16.gmra.mxu0 %v2401
    %v2542 = vpop.f32.mrf.mxu0
    %v2543 = vadd.f32 0.0, %v2542
    %v2544 = vpop.f32.mrf.mxu0
    %2545 = vdwg.mxu0
    %2546 = vmatpush.bf16.msra.mxu0 %v1202
    %2547 = vmatpush.bf16.msra.mxu0 %v1194
    %2548 = vmatpush.bf16.msra.mxu0 %v1186
    %2549 = vmatpush.bf16.msra.mxu0 %v1178
    %2550 = vmatpush.bf16.msra.mxu0 %v1170
    %2551 = vmatpush.bf16.msra.mxu0 %v1162
    %2552 = vmatpush.bf16.msra.mxu0 %v1154
    %2553 = vmatpush.bf16.msra.mxu0 %v1146
    %2554 = vmatmul.bf16.gmra.mxu0 %v2402
    %v2555 = vpop.f32.mrf.mxu0
    %v2556 = vadd.f32 %v2543, %v2555
    %v2557 = vpop.f32.mrf.mxu0
    %2558 = vdwg.mxu0
    %2559 = vmatpush.bf16.msra.mxu0 %v1139
    %2560 = vmatpush.bf16.msra.mxu0 %v1131
    %2561 = vmatpush.bf16.msra.mxu0 %v1123
    %2562 = vmatpush.bf16.msra.mxu0 %v1115
    %2563 = vmatpush.bf16.msra.mxu0 %v1107
    %2564 = vmatpush.bf16.msra.mxu0 %v1099
    %2565 = vmatpush.bf16.msra.mxu0 %v1091
    %2566 = vmatpush.bf16.msra.mxu0 %v1083
    %2567 = vmatmul.bf16.gmra.mxu0 %v2401
    %v2568 = vpop.f32.mrf.mxu0
    %v2569 = vadd.f32 0.0, %v2568
    %v2570 = vpop.f32.mrf.mxu0
    %2571 = vdwg.mxu0
    %2572 = vmatpush.bf16.msra.mxu0 %v1203
    %2573 = vmatpush.bf16.msra.mxu0 %v1195
    %2574 = vmatpush.bf16.msra.mxu0 %v1187
    %2575 = vmatpush.bf16.msra.mxu0 %v1179
    %2576 = vmatpush.bf16.msra.mxu0 %v1171
    %2577 = vmatpush.bf16.msra.mxu0 %v1163
    %2578 = vmatpush.bf16.msra.mxu0 %v1155
    %2579 = vmatpush.bf16.msra.mxu0 %v1147
    %2580 = vmatmul.bf16.gmra.mxu0 %v2402
    %v2581 = vpop.f32.mrf.mxu0
    %v2582 = vadd.f32 %v2569, %v2581
    %v2583 = vpop.f32.mrf.mxu0
    %2584 = vdwg.mxu0
    %2585 = vmatpush.bf16.msra.mxu0 %v1140
    %2586 = vmatpush.bf16.msra.mxu0 %v1132
    %2587 = vmatpush.bf16.msra.mxu0 %v1124
    %2588 = vmatpush.bf16.msra.mxu0 %v1116
    %2589 = vmatpush.bf16.msra.mxu0 %v1108
    %2590 = vmatpush.bf16.msra.mxu0 %v1100
    %2591 = vmatpush.bf16.msra.mxu0 %v1092
    %2592 = vmatpush.bf16.msra.mxu0 %v1084
    %2593 = vmatmul.bf16.gmra.mxu0 %v2401
    %v2594 = vpop.f32.mrf.mxu0
    %v2595 = vadd.f32 0.0, %v2594
    %v2596 = vpop.f32.mrf.mxu0
    %2597 = vdwg.mxu0
    %2598 = vmatpush.bf16.msra.mxu0 %v1204
    %2599 = vmatpush.bf16.msra.mxu0 %v1196
    %2600 = vmatpush.bf16.msra.mxu0 %v1188
    %2601 = vmatpush.bf16.msra.mxu0 %v1180
    %2602 = vmatpush.bf16.msra.mxu0 %v1172
    %2603 = vmatpush.bf16.msra.mxu0 %v1164
    %2604 = vmatpush.bf16.msra.mxu0 %v1156
    %2605 = vmatpush.bf16.msra.mxu0 %v1148
    %2606 = vmatmul.bf16.gmra.mxu0 %v2402
    %v2607 = vpop.f32.mrf.mxu0
    %v2608 = vadd.f32 %v2595, %v2607
    %v2609 = vpop.f32.mrf.mxu0
    %2610 = vdwg.mxu0
    %s2611 = scalar_lea.vmem [#allocation2], 128
    %v2612 = vld [vmem:[%s2611] sm:$0xff]
    %v2613 = vld [vmem:[%s2611 + $0x8] sm:$0xff]
    %v2614 = vld [vmem:[%s2611 + $0x10] sm:$0xff]
    %v2615 = vld [vmem:[%s2611 + $0x18] sm:$0xff]
    %v2616 = vadd.f32 %v2612, %v2426
    %v2617 = vadd.f32 %v2613, %v2452
    %v2618 = vadd.f32 %v2614, %v2478
    %v2619 = vadd.f32 %v2615, %v2504
    %v2620 = vmul.f32 %v2616, 0.5
    %v2621 = vtanh.pop %v2620
    %v2622 = vmul.f32 %v2621, 0.5
    %v2623 = vadd.f32 %v2622, 0.5
    %v2624 = vmul.f32 %v2617, 0.5
    %v2625 = vtanh.pop %v2624
    %v2626 = vmul.f32 %v2625, 0.5
    %v2627 = vadd.f32 %v2626, 0.5
    %v2628 = vtanh.pop %v2618
    %v2629 = vmul.f32 %v2619, 0.5
    %v2630 = vtanh.pop %v2629
    %v2631 = vmul.f32 %v2630, 0.5
    %v2632 = vadd.f32 %v2631, 0.5
    %v2633 = vmul.f32 %v2627, %v2367
    %v2634 = vmul.f32 %v2623, %v2628
    %v2635 = vadd.f32 %v2633, %v2634
    %v2636 = vtanh.pop %v2635
    %v2637 = vmul.f32 %v2632, %v2636
    %s2638 = scalar_lea.vmem [#allocation3], 96
    %v2639 = vld [vmem:[%s2638] sm:$0xff]
    %v2640 = vld [vmem:[%s2638 + $0x8] sm:$0xff]
    %v2641 = vld [vmem:[%s2638 + $0x10] sm:$0xff]
    %v2642 = vld [vmem:[%s2638 + $0x18] sm:$0xff]
    %v2643 = vadd.f32 %v2639, %v2530
    %v2644 = vadd.f32 %v2640, %v2556
    %v2645 = vadd.f32 %v2641, %v2582
    %v2646 = vadd.f32 %v2642, %v2608
    %v2647 = vmul.f32 %v2643, 0.5
    %v2648 = vtanh.pop %v2647
    %v2649 = vmul.f32 %v2648, 0.5
    %v2650 = vadd.f32 %v2649, 0.5
    %v2651 = vmul.f32 %v2644, 0.5
    %v2652 = vtanh.pop %v2651
    %v2653 = vmul.f32 %v2652, 0.5
    %v2654 = vadd.f32 %v2653, 0.5
    %v2655 = vtanh.pop %v2645
    %v2656 = vmul.f32 %v2646, 0.5
    %v2657 = vtanh.pop %v2656
    %v2658 = vmul.f32 %v2657, 0.5
    %v2659 = vadd.f32 %v2658, 0.5
    %v2660 = vmul.f32 %v2654, %v2394
    %v2661 = vmul.f32 %v2650, %v2655
    %v2662 = vadd.f32 %v2660, %v2661
    %v2663 = vtanh.pop %v2662
    %v2664 = vmul.f32 %v2659, %v2663
    %s2665 = scalar_lea.vmem [#allocation4], 32
    %2666 = vst [vmem:[%s2665] sm:$0xff] %v2637
    %s2667 = scalar_lea.vmem [#allocation5], 24
    %2668 = vst [vmem:[%s2667] sm:$0xff] %v2664
    %v2669 = vpack.c.bf16 %v2637, %v2637
    %v2670 = vpack.c.bf16 %v2664, %v2664
    %2671 = vmatpush.bf16.msra.mxu0 %v1133
    %2672 = vmatpush.bf16.msra.mxu0 %v1125
    %2673 = vmatpush.bf16.msra.mxu0 %v1117
    %2674 = vmatpush.bf16.msra.mxu0 %v1109
    %2675 = vmatpush.bf16.msra.mxu0 %v1101
    %2676 = vmatpush.bf16.msra.mxu0 %v1093
    %2677 = vmatpush.bf16.msra.mxu0 %v1085
    %2678 = vmatpush.bf16.msra.mxu0 %v1077
    %2679 = vmatmul.bf16.gmra.mxu0 %v2669
    %v2680 = vpop.f32.mrf.mxu0
    %v2681 = vadd.f32 0.0, %v2680
    %v2682 = vpop.f32.mrf.mxu0
    %2683 = vdwg.mxu0
    %2684 = vmatpush.bf16.msra.mxu0 %v1197
    %2685 = vmatpush.bf16.msra.mxu0 %v1189
    %2686 = vmatpush.bf16.msra.mxu0 %v1181
    %2687 = vmatpush.bf16.msra.mxu0 %v1173
    %2688 = vmatpush.bf16.msra.mxu0 %v1165
    %2689 = vmatpush.bf16.msra.mxu0 %v1157
    %2690 = vmatpush.bf16.msra.mxu0 %v1149
    %2691 = vmatpush.bf16.msra.mxu0 %v1141
    %2692 = vmatmul.bf16.gmra.mxu0 %v2670
    %v2693 = vpop.f32.mrf.mxu0
    %v2694 = vadd.f32 %v2681, %v2693
    %v2695 = vpop.f32.mrf.mxu0
    %2696 = vdwg.mxu0
    %2697 = vmatpush.bf16.msra.mxu0 %v1134
    %2698 = vmatpush.bf16.msra.mxu0 %v1126
    %2699 = vmatpush.bf16.msra.mxu0 %v1118
    %2700 = vmatpush.bf16.msra.mxu0 %v1110
    %2701 = vmatpush.bf16.msra.mxu0 %v1102
    %2702 = vmatpush.bf16.msra.mxu0 %v1094
    %2703 = vmatpush.bf16.msra.mxu0 %v1086
    %2704 = vmatpush.bf16.msra.mxu0 %v1078
    %2705 = vmatmul.bf16.gmra.mxu0 %v2669
    %v2706 = vpop.f32.mrf.mxu0
    %v2707 = vadd.f32 0.0, %v2706
    %v2708 = vpop.f32.mrf.mxu0
    %2709 = vdwg.mxu0
    %2710 = vmatpush.bf16.msra.mxu0 %v1198
    %2711 = vmatpush.bf16.msra.mxu0 %v1190
    %2712 = vmatpush.bf16.msra.mxu0 %v1182
    %2713 = vmatpush.bf16.msra.mxu0 %v1174
    %2714 = vmatpush.bf16.msra.mxu0 %v1166
    %2715 = vmatpush.bf16.msra.mxu0 %v1158
    %2716 = vmatpush.bf16.msra.mxu0 %v1150
    %2717 = vmatpush.bf16.msra.mxu0 %v1142
    %2718 = vmatmul.bf16.gmra.mxu0 %v2670
    %v2719 = vpop.f32.mrf.mxu0
    %v2720 = vadd.f32 %v2707, %v2719
    %v2721 = vpop.f32.mrf.mxu0
    %2722 = vdwg.mxu0
    %2723 = vmatpush.bf16.msra.mxu0 %v1135
    %2724 = vmatpush.bf16.msra.mxu0 %v1127
    %2725 = vmatpush.bf16.msra.mxu0 %v1119
    %2726 = vmatpush.bf16.msra.mxu0 %v1111
    %2727 = vmatpush.bf16.msra.mxu0 %v1103
    %2728 = vmatpush.bf16.msra.mxu0 %v1095
    %2729 = vmatpush.bf16.msra.mxu0 %v1087
    %2730 = vmatpush.bf16.msra.mxu0 %v1079
    %2731 = vmatmul.bf16.gmra.mxu0 %v2669
    %v2732 = vpop.f32.mrf.mxu0
    %v2733 = vadd.f32 0.0, %v2732
    %v2734 = vpop.f32.mrf.mxu0
    %2735 = vdwg.mxu0
    %2736 = vmatpush.bf16.msra.mxu0 %v1199
    %2737 = vmatpush.bf16.msra.mxu0 %v1191
    %2738 = vmatpush.bf16.msra.mxu0 %v1183
    %2739 = vmatpush.bf16.msra.mxu0 %v1175
    %2740 = vmatpush.bf16.msra.mxu0 %v1167
    %2741 = vmatpush.bf16.msra.mxu0 %v1159
    %2742 = vmatpush.bf16.msra.mxu0 %v1151
    %2743 = vmatpush.bf16.msra.mxu0 %v1143
    %2744 = vmatmul.bf16.gmra.mxu0 %v2670
    %v2745 = vpop.f32.mrf.mxu0
    %v2746 = vadd.f32 %v2733, %v2745
    %v2747 = vpop.f32.mrf.mxu0
    %2748 = vdwg.mxu0
    %2749 = vmatpush.bf16.msra.mxu0 %v1136
    %2750 = vmatpush.bf16.msra.mxu0 %v1128
    %2751 = vmatpush.bf16.msra.mxu0 %v1120
    %2752 = vmatpush.bf16.msra.mxu0 %v1112
    %2753 = vmatpush.bf16.msra.mxu0 %v1104
    %2754 = vmatpush.bf16.msra.mxu0 %v1096
    %2755 = vmatpush.bf16.msra.mxu0 %v1088
    %2756 = vmatpush.bf16.msra.mxu0 %v1080
    %2757 = vmatmul.bf16.gmra.mxu0 %v2669
    %v2758 = vpop.f32.mrf.mxu0
    %v2759 = vadd.f32 0.0, %v2758
    %v2760 = vpop.f32.mrf.mxu0
    %2761 = vdwg.mxu0
    %2762 = vmatpush.bf16.msra.mxu0 %v1200
    %2763 = vmatpush.bf16.msra.mxu0 %v1192
    %2764 = vmatpush.bf16.msra.mxu0 %v1184
    %2765 = vmatpush.bf16.msra.mxu0 %v1176
    %2766 = vmatpush.bf16.msra.mxu0 %v1168
    %2767 = vmatpush.bf16.msra.mxu0 %v1160
    %2768 = vmatpush.bf16.msra.mxu0 %v1152
    %2769 = vmatpush.bf16.msra.mxu0 %v1144
    %2770 = vmatmul.bf16.gmra.mxu0 %v2670
    %v2771 = vpop.f32.mrf.mxu0
    %v2772 = vadd.f32 %v2759, %v2771
    %v2773 = vpop.f32.mrf.mxu0
    %2774 = vdwg.mxu0
    %2775 = vmatpush.bf16.msra.mxu0 %v1137
    %2776 = vmatpush.bf16.msra.mxu0 %v1129
    %2777 = vmatpush.bf16.msra.mxu0 %v1121
    %2778 = vmatpush.bf16.msra.mxu0 %v1113
    %2779 = vmatpush.bf16.msra.mxu0 %v1105
    %2780 = vmatpush.bf16.msra.mxu0 %v1097
    %2781 = vmatpush.bf16.msra.mxu0 %v1089
    %2782 = vmatpush.bf16.msra.mxu0 %v1081
    %2783 = vmatmul.bf16.gmra.mxu0 %v2669
    %v2784 = vpop.f32.mrf.mxu0
    %v2785 = vadd.f32 0.0, %v2784
    %v2786 = vpop.f32.mrf.mxu0
    %2787 = vdwg.mxu0
    %2788 = vmatpush.bf16.msra.mxu0 %v1201
    %2789 = vmatpush.bf16.msra.mxu0 %v1193
    %2790 = vmatpush.bf16.msra.mxu0 %v1185
    %2791 = vmatpush.bf16.msra.mxu0 %v1177
    %2792 = vmatpush.bf16.msra.mxu0 %v1169
    %2793 = vmatpush.bf16.msra.mxu0 %v1161
    %2794 = vmatpush.bf16.msra.mxu0 %v1153
    %2795 = vmatpush.bf16.msra.mxu0 %v1145
    %2796 = vmatmul.bf16.gmra.mxu0 %v2670
    %v2797 = vpop.f32.mrf.mxu0
    %v2798 = vadd.f32 %v2785, %v2797
    %v2799 = vpop.f32.mrf.mxu0
    %2800 = vdwg.mxu0
    %2801 = vmatpush.bf16.msra.mxu0 %v1138
    %2802 = vmatpush.bf16.msra.mxu0 %v1130
    %2803 = vmatpush.bf16.msra.mxu0 %v1122
    %2804 = vmatpush.bf16.msra.mxu0 %v1114
    %2805 = vmatpush.bf16.msra.mxu0 %v1106
    %2806 = vmatpush.bf16.msra.mxu0 %v1098
    %2807 = vmatpush.bf16.msra.mxu0 %v1090
    %2808 = vmatpush.bf16.msra.mxu0 %v1082
    %2809 = vmatmul.bf16.gmra.mxu0 %v2669
    %v2810 = vpop.f32.mrf.mxu0
    %v2811 = vadd.f32 0.0, %v2810
    %v2812 = vpop.f32.mrf.mxu0
    %2813 = vdwg.mxu0
    %2814 = vmatpush.bf16.msra.mxu0 %v1202
    %2815 = vmatpush.bf16.msra.mxu0 %v1194
    %2816 = vmatpush.bf16.msra.mxu0 %v1186
    %2817 = vmatpush.bf16.msra.mxu0 %v1178
    %2818 = vmatpush.bf16.msra.mxu0 %v1170
    %2819 = vmatpush.bf16.msra.mxu0 %v1162
    %2820 = vmatpush.bf16.msra.mxu0 %v1154
    %2821 = vmatpush.bf16.msra.mxu0 %v1146
    %2822 = vmatmul.bf16.gmra.mxu0 %v2670
    %v2823 = vpop.f32.mrf.mxu0
    %v2824 = vadd.f32 %v2811, %v2823
    %v2825 = vpop.f32.mrf.mxu0
    %2826 = vdwg.mxu0
    %2827 = vmatpush.bf16.msra.mxu0 %v1139
    %2828 = vmatpush.bf16.msra.mxu0 %v1131
    %2829 = vmatpush.bf16.msra.mxu0 %v1123
    %2830 = vmatpush.bf16.msra.mxu0 %v1115
    %2831 = vmatpush.bf16.msra.mxu0 %v1107
    %2832 = vmatpush.bf16.msra.mxu0 %v1099
    %2833 = vmatpush.bf16.msra.mxu0 %v1091
    %2834 = vmatpush.bf16.msra.mxu0 %v1083
    %2835 = vmatmul.bf16.gmra.mxu0 %v2669
    %v2836 = vpop.f32.mrf.mxu0
    %v2837 = vadd.f32 0.0, %v2836
    %v2838 = vpop.f32.mrf.mxu0
    %2839 = vdwg.mxu0
    %2840 = vmatpush.bf16.msra.mxu0 %v1203
    %2841 = vmatpush.bf16.msra.mxu0 %v1195
    %2842 = vmatpush.bf16.msra.mxu0 %v1187
    %2843 = vmatpush.bf16.msra.mxu0 %v1179
    %2844 = vmatpush.bf16.msra.mxu0 %v1171
    %2845 = vmatpush.bf16.msra.mxu0 %v1163
    %2846 = vmatpush.bf16.msra.mxu0 %v1155
    %2847 = vmatpush.bf16.msra.mxu0 %v1147
    %2848 = vmatmul.bf16.gmra.mxu0 %v2670
    %v2849 = vpop.f32.mrf.mxu0
    %v2850 = vadd.f32 %v2837, %v2849
    %v2851 = vpop.f32.mrf.mxu0
    %2852 = vdwg.mxu0
    %2853 = vmatpush.bf16.msra.mxu0 %v1140
    %2854 = vmatpush.bf16.msra.mxu0 %v1132
    %2855 = vmatpush.bf16.msra.mxu0 %v1124
    %2856 = vmatpush.bf16.msra.mxu0 %v1116
    %2857 = vmatpush.bf16.msra.mxu0 %v1108
    %2858 = vmatpush.bf16.msra.mxu0 %v1100
    %2859 = vmatpush.bf16.msra.mxu0 %v1092
    %2860 = vmatpush.bf16.msra.mxu0 %v1084
    %2861 = vmatmul.bf16.gmra.mxu0 %v2669
    %v2862 = vpop.f32.mrf.mxu0
    %v2863 = vadd.f32 0.0, %v2862
    %v2864 = vpop.f32.mrf.mxu0
    %2865 = vdwg.mxu0
    %2866 = vmatpush.bf16.msra.mxu0 %v1204
    %2867 = vmatpush.bf16.msra.mxu0 %v1196
    %2868 = vmatpush.bf16.msra.mxu0 %v1188
    %2869 = vmatpush.bf16.msra.mxu0 %v1180
    %2870 = vmatpush.bf16.msra.mxu0 %v1172
    %2871 = vmatpush.bf16.msra.mxu0 %v1164
    %2872 = vmatpush.bf16.msra.mxu0 %v1156
    %2873 = vmatpush.bf16.msra.mxu0 %v1148
    %2874 = vmatmul.bf16.gmra.mxu0 %v2670
    %v2875 = vpop.f32.mrf.mxu0
    %v2876 = vadd.f32 %v2863, %v2875
    %v2877 = vpop.f32.mrf.mxu0
    %2878 = vdwg.mxu0
    %s2879 = scalar_lea.vmem [#allocation2], 160
    %v2880 = vld [vmem:[%s2879] sm:$0xff]
    %v2881 = vld [vmem:[%s2879 + $0x8] sm:$0xff]
    %v2882 = vld [vmem:[%s2879 + $0x10] sm:$0xff]
    %v2883 = vld [vmem:[%s2879 + $0x18] sm:$0xff]
    %v2884 = vadd.f32 %v2880, %v2694
    %v2885 = vadd.f32 %v2881, %v2720
    %v2886 = vadd.f32 %v2882, %v2746
    %v2887 = vadd.f32 %v2883, %v2772
    %v2888 = vmul.f32 %v2884, 0.5
    %v2889 = vtanh.pop %v2888
    %v2890 = vmul.f32 %v2889, 0.5
    %v2891 = vadd.f32 %v2890, 0.5
    %v2892 = vmul.f32 %v2885, 0.5
    %v2893 = vtanh.pop %v2892
    %v2894 = vmul.f32 %v2893, 0.5
    %v2895 = vadd.f32 %v2894, 0.5
    %v2896 = vtanh.pop %v2886
    %v2897 = vmul.f32 %v2887, 0.5
    %v2898 = vtanh.pop %v2897
    %v2899 = vmul.f32 %v2898, 0.5
    %v2900 = vadd.f32 %v2899, 0.5
    %v2901 = vmul.f32 %v2895, %v2635
    %v2902 = vmul.f32 %v2891, %v2896
    %v2903 = vadd.f32 %v2901, %v2902
    %v2904 = vtanh.pop %v2903
    %v2905 = vmul.f32 %v2900, %v2904
    %s2906 = scalar_lea.vmem [#allocation3], 64
    %v2907 = vld [vmem:[%s2906] sm:$0xff]
    %v2908 = vld [vmem:[%s2906 + $0x8] sm:$0xff]
    %v2909 = vld [vmem:[%s2906 + $0x10] sm:$0xff]
    %v2910 = vld [vmem:[%s2906 + $0x18] sm:$0xff]
    %v2911 = vadd.f32 %v2907, %v2798
    %v2912 = vadd.f32 %v2908, %v2824
    %v2913 = vadd.f32 %v2909, %v2850
    %v2914 = vadd.f32 %v2910, %v2876
    %v2915 = vmul.f32 %v2911, 0.5
    %v2916 = vtanh.pop %v2915
    %v2917 = vmul.f32 %v2916, 0.5
    %v2918 = vadd.f32 %v2917, 0.5
    %v2919 = vmul.f32 %v2912, 0.5
    %v2920 = vtanh.pop %v2919
    %v2921 = vmul.f32 %v2920, 0.5
    %v2922 = vadd.f32 %v2921, 0.5
    %v2923 = vtanh.pop %v2913
    %v2924 = vmul.f32 %v2914, 0.5
    %v2925 = vtanh.pop %v2924
    %v2926 = vmul.f32 %v2925, 0.5
    %v2927 = vadd.f32 %v2926, 0.5
    %v2928 = vmul.f32 %v2922, %v2662
    %v2929 = vmul.f32 %v2918, %v2923
    %v2930 = vadd.f32 %v2928, %v2929
    %v2931 = vtanh.pop %v2930
    %v2932 = vmul.f32 %v2927, %v2931
    %s2933 = scalar_lea.vmem [#allocation4], 40
    %2934 = vst [vmem:[%s2933] sm:$0xff] %v2905
    %s2935 = scalar_lea.vmem [#allocation5], 16
    %2936 = vst [vmem:[%s2935] sm:$0xff] %v2932
    %v2937 = vpack.c.bf16 %v2905, %v2905
    %v2938 = vpack.c.bf16 %v2932, %v2932
    %2939 = vmatpush.bf16.msra.mxu0 %v1133
    %2940 = vmatpush.bf16.msra.mxu0 %v1125
    %2941 = vmatpush.bf16.msra.mxu0 %v1117
    %2942 = vmatpush.bf16.msra.mxu0 %v1109
    %2943 = vmatpush.bf16.msra.mxu0 %v1101
    %2944 = vmatpush.bf16.msra.mxu0 %v1093
    %2945 = vmatpush.bf16.msra.mxu0 %v1085
    %2946 = vmatpush.bf16.msra.mxu0 %v1077
    %2947 = vmatmul.bf16.gmra.mxu0 %v2937
    %v2948 = vpop.f32.mrf.mxu0
    %v2949 = vadd.f32 0.0, %v2948
    %v2950 = vpop.f32.mrf.mxu0
    %2951 = vdwg.mxu0
    %2952 = vmatpush.bf16.msra.mxu0 %v1197
    %2953 = vmatpush.bf16.msra.mxu0 %v1189
    %2954 = vmatpush.bf16.msra.mxu0 %v1181
    %2955 = vmatpush.bf16.msra.mxu0 %v1173
    %2956 = vmatpush.bf16.msra.mxu0 %v1165
    %2957 = vmatpush.bf16.msra.mxu0 %v1157
    %2958 = vmatpush.bf16.msra.mxu0 %v1149
    %2959 = vmatpush.bf16.msra.mxu0 %v1141
    %2960 = vmatmul.bf16.gmra.mxu0 %v2938
    %v2961 = vpop.f32.mrf.mxu0
    %v2962 = vadd.f32 %v2949, %v2961
    %v2963 = vpop.f32.mrf.mxu0
    %2964 = vdwg.mxu0
    %2965 = vmatpush.bf16.msra.mxu0 %v1134
    %2966 = vmatpush.bf16.msra.mxu0 %v1126
    %2967 = vmatpush.bf16.msra.mxu0 %v1118
    %2968 = vmatpush.bf16.msra.mxu0 %v1110
    %2969 = vmatpush.bf16.msra.mxu0 %v1102
    %2970 = vmatpush.bf16.msra.mxu0 %v1094
    %2971 = vmatpush.bf16.msra.mxu0 %v1086
    %2972 = vmatpush.bf16.msra.mxu0 %v1078
    %2973 = vmatmul.bf16.gmra.mxu0 %v2937
    %v2974 = vpop.f32.mrf.mxu0
    %v2975 = vadd.f32 0.0, %v2974
    %v2976 = vpop.f32.mrf.mxu0
    %2977 = vdwg.mxu0
    %2978 = vmatpush.bf16.msra.mxu0 %v1198
    %2979 = vmatpush.bf16.msra.mxu0 %v1190
    %2980 = vmatpush.bf16.msra.mxu0 %v1182
    %2981 = vmatpush.bf16.msra.mxu0 %v1174
    %2982 = vmatpush.bf16.msra.mxu0 %v1166
    %2983 = vmatpush.bf16.msra.mxu0 %v1158
    %2984 = vmatpush.bf16.msra.mxu0 %v1150
    %2985 = vmatpush.bf16.msra.mxu0 %v1142
    %2986 = vmatmul.bf16.gmra.mxu0 %v2938
    %v2987 = vpop.f32.mrf.mxu0
    %v2988 = vadd.f32 %v2975, %v2987
    %v2989 = vpop.f32.mrf.mxu0
    %2990 = vdwg.mxu0
    %2991 = vmatpush.bf16.msra.mxu0 %v1135
    %2992 = vmatpush.bf16.msra.mxu0 %v1127
    %2993 = vmatpush.bf16.msra.mxu0 %v1119
    %2994 = vmatpush.bf16.msra.mxu0 %v1111
    %2995 = vmatpush.bf16.msra.mxu0 %v1103
    %2996 = vmatpush.bf16.msra.mxu0 %v1095
    %2997 = vmatpush.bf16.msra.mxu0 %v1087
    %2998 = vmatpush.bf16.msra.mxu0 %v1079
    %2999 = vmatmul.bf16.gmra.mxu0 %v2937
    %v3000 = vpop.f32.mrf.mxu0
    %v3001 = vadd.f32 0.0, %v3000
    %v3002 = vpop.f32.mrf.mxu0
    %3003 = vdwg.mxu0
    %3004 = vmatpush.bf16.msra.mxu0 %v1199
    %3005 = vmatpush.bf16.msra.mxu0 %v1191
    %3006 = vmatpush.bf16.msra.mxu0 %v1183
    %3007 = vmatpush.bf16.msra.mxu0 %v1175
    %3008 = vmatpush.bf16.msra.mxu0 %v1167
    %3009 = vmatpush.bf16.msra.mxu0 %v1159
    %3010 = vmatpush.bf16.msra.mxu0 %v1151
    %3011 = vmatpush.bf16.msra.mxu0 %v1143
    %3012 = vmatmul.bf16.gmra.mxu0 %v2938
    %v3013 = vpop.f32.mrf.mxu0
    %v3014 = vadd.f32 %v3001, %v3013
    %v3015 = vpop.f32.mrf.mxu0
    %3016 = vdwg.mxu0
    %3017 = vmatpush.bf16.msra.mxu0 %v1136
    %3018 = vmatpush.bf16.msra.mxu0 %v1128
    %3019 = vmatpush.bf16.msra.mxu0 %v1120
    %3020 = vmatpush.bf16.msra.mxu0 %v1112
    %3021 = vmatpush.bf16.msra.mxu0 %v1104
    %3022 = vmatpush.bf16.msra.mxu0 %v1096
    %3023 = vmatpush.bf16.msra.mxu0 %v1088
    %3024 = vmatpush.bf16.msra.mxu0 %v1080
    %3025 = vmatmul.bf16.gmra.mxu0 %v2937
    %v3026 = vpop.f32.mrf.mxu0
    %v3027 = vadd.f32 0.0, %v3026
    %v3028 = vpop.f32.mrf.mxu0
    %3029 = vdwg.mxu0
    %3030 = vmatpush.bf16.msra.mxu0 %v1200
    %3031 = vmatpush.bf16.msra.mxu0 %v1192
    %3032 = vmatpush.bf16.msra.mxu0 %v1184
    %3033 = vmatpush.bf16.msra.mxu0 %v1176
    %3034 = vmatpush.bf16.msra.mxu0 %v1168
    %3035 = vmatpush.bf16.msra.mxu0 %v1160
    %3036 = vmatpush.bf16.msra.mxu0 %v1152
    %3037 = vmatpush.bf16.msra.mxu0 %v1144
    %3038 = vmatmul.bf16.gmra.mxu0 %v2938
    %v3039 = vpop.f32.mrf.mxu0
    %v3040 = vadd.f32 %v3027, %v3039
    %v3041 = vpop.f32.mrf.mxu0
    %3042 = vdwg.mxu0
    %3043 = vmatpush.bf16.msra.mxu0 %v1137
    %3044 = vmatpush.bf16.msra.mxu0 %v1129
    %3045 = vmatpush.bf16.msra.mxu0 %v1121
    %3046 = vmatpush.bf16.msra.mxu0 %v1113
    %3047 = vmatpush.bf16.msra.mxu0 %v1105
    %3048 = vmatpush.bf16.msra.mxu0 %v1097
    %3049 = vmatpush.bf16.msra.mxu0 %v1089
    %3050 = vmatpush.bf16.msra.mxu0 %v1081
    %3051 = vmatmul.bf16.gmra.mxu0 %v2937
    %v3052 = vpop.f32.mrf.mxu0
    %v3053 = vadd.f32 0.0, %v3052
    %v3054 = vpop.f32.mrf.mxu0
    %3055 = vdwg.mxu0
    %3056 = vmatpush.bf16.msra.mxu0 %v1201
    %3057 = vmatpush.bf16.msra.mxu0 %v1193
    %3058 = vmatpush.bf16.msra.mxu0 %v1185
    %3059 = vmatpush.bf16.msra.mxu0 %v1177
    %3060 = vmatpush.bf16.msra.mxu0 %v1169
    %3061 = vmatpush.bf16.msra.mxu0 %v1161
    %3062 = vmatpush.bf16.msra.mxu0 %v1153
    %3063 = vmatpush.bf16.msra.mxu0 %v1145
    %3064 = vmatmul.bf16.gmra.mxu0 %v2938
    %v3065 = vpop.f32.mrf.mxu0
    %v3066 = vadd.f32 %v3053, %v3065
    %v3067 = vpop.f32.mrf.mxu0
    %3068 = vdwg.mxu0
    %3069 = vmatpush.bf16.msra.mxu0 %v1138
    %3070 = vmatpush.bf16.msra.mxu0 %v1130
    %3071 = vmatpush.bf16.msra.mxu0 %v1122
    %3072 = vmatpush.bf16.msra.mxu0 %v1114
    %3073 = vmatpush.bf16.msra.mxu0 %v1106
    %3074 = vmatpush.bf16.msra.mxu0 %v1098
    %3075 = vmatpush.bf16.msra.mxu0 %v1090
    %3076 = vmatpush.bf16.msra.mxu0 %v1082
    %3077 = vmatmul.bf16.gmra.mxu0 %v2937
    %v3078 = vpop.f32.mrf.mxu0
    %v3079 = vadd.f32 0.0, %v3078
    %v3080 = vpop.f32.mrf.mxu0
    %3081 = vdwg.mxu0
    %3082 = vmatpush.bf16.msra.mxu0 %v1202
    %3083 = vmatpush.bf16.msra.mxu0 %v1194
    %3084 = vmatpush.bf16.msra.mxu0 %v1186
    %3085 = vmatpush.bf16.msra.mxu0 %v1178
    %3086 = vmatpush.bf16.msra.mxu0 %v1170
    %3087 = vmatpush.bf16.msra.mxu0 %v1162
    %3088 = vmatpush.bf16.msra.mxu0 %v1154
    %3089 = vmatpush.bf16.msra.mxu0 %v1146
    %3090 = vmatmul.bf16.gmra.mxu0 %v2938
    %v3091 = vpop.f32.mrf.mxu0
    %v3092 = vadd.f32 %v3079, %v3091
    %v3093 = vpop.f32.mrf.mxu0
    %3094 = vdwg.mxu0
    %3095 = vmatpush.bf16.msra.mxu0 %v1139
    %3096 = vmatpush.bf16.msra.mxu0 %v1131
    %3097 = vmatpush.bf16.msra.mxu0 %v1123
    %3098 = vmatpush.bf16.msra.mxu0 %v1115
    %3099 = vmatpush.bf16.msra.mxu0 %v1107
    %3100 = vmatpush.bf16.msra.mxu0 %v1099
    %3101 = vmatpush.bf16.msra.mxu0 %v1091
    %3102 = vmatpush.bf16.msra.mxu0 %v1083
    %3103 = vmatmul.bf16.gmra.mxu0 %v2937
    %v3104 = vpop.f32.mrf.mxu0
    %v3105 = vadd.f32 0.0, %v3104
    %v3106 = vpop.f32.mrf.mxu0
    %3107 = vdwg.mxu0
    %3108 = vmatpush.bf16.msra.mxu0 %v1203
    %3109 = vmatpush.bf16.msra.mxu0 %v1195
    %3110 = vmatpush.bf16.msra.mxu0 %v1187
    %3111 = vmatpush.bf16.msra.mxu0 %v1179
    %3112 = vmatpush.bf16.msra.mxu0 %v1171
    %3113 = vmatpush.bf16.msra.mxu0 %v1163
    %3114 = vmatpush.bf16.msra.mxu0 %v1155
    %3115 = vmatpush.bf16.msra.mxu0 %v1147
    %3116 = vmatmul.bf16.gmra.mxu0 %v2938
    %v3117 = vpop.f32.mrf.mxu0
    %v3118 = vadd.f32 %v3105, %v3117
    %v3119 = vpop.f32.mrf.mxu0
    %3120 = vdwg.mxu0
    %3121 = vmatpush.bf16.msra.mxu0 %v1140
    %3122 = vmatpush.bf16.msra.mxu0 %v1132
    %3123 = vmatpush.bf16.msra.mxu0 %v1124
    %3124 = vmatpush.bf16.msra.mxu0 %v1116
    %3125 = vmatpush.bf16.msra.mxu0 %v1108
    %3126 = vmatpush.bf16.msra.mxu0 %v1100
    %3127 = vmatpush.bf16.msra.mxu0 %v1092
    %3128 = vmatpush.bf16.msra.mxu0 %v1084
    %3129 = vmatmul.bf16.gmra.mxu0 %v2937
    %v3130 = vpop.f32.mrf.mxu0
    %v3131 = vadd.f32 0.0, %v3130
    %v3132 = vpop.f32.mrf.mxu0
    %3133 = vdwg.mxu0
    %3134 = vmatpush.bf16.msra.mxu0 %v1204
    %3135 = vmatpush.bf16.msra.mxu0 %v1196
    %3136 = vmatpush.bf16.msra.mxu0 %v1188
    %3137 = vmatpush.bf16.msra.mxu0 %v1180
    %3138 = vmatpush.bf16.msra.mxu0 %v1172
    %3139 = vmatpush.bf16.msra.mxu0 %v1164
    %3140 = vmatpush.bf16.msra.mxu0 %v1156
    %3141 = vmatpush.bf16.msra.mxu0 %v1148
    %3142 = vmatmul.bf16.gmra.mxu0 %v2938
    %v3143 = vpop.f32.mrf.mxu0
    %v3144 = vadd.f32 %v3131, %v3143
    %v3145 = vpop.f32.mrf.mxu0
    %3146 = vdwg.mxu0
    %s3147 = scalar_lea.vmem [#allocation2], 192
    %v3148 = vld [vmem:[%s3147] sm:$0xff]
    %v3149 = vld [vmem:[%s3147 + $0x8] sm:$0xff]
    %v3150 = vld [vmem:[%s3147 + $0x10] sm:$0xff]
    %v3151 = vld [vmem:[%s3147 + $0x18] sm:$0xff]
    %v3152 = vadd.f32 %v3148, %v2962
    %v3153 = vadd.f32 %v3149, %v2988
    %v3154 = vadd.f32 %v3150, %v3014
    %v3155 = vadd.f32 %v3151, %v3040
    %v3156 = vmul.f32 %v3152, 0.5
    %v3157 = vtanh.pop %v3156
    %v3158 = vmul.f32 %v3157, 0.5
    %v3159 = vadd.f32 %v3158, 0.5
    %v3160 = vmul.f32 %v3153, 0.5
    %v3161 = vtanh.pop %v3160
    %v3162 = vmul.f32 %v3161, 0.5
    %v3163 = vadd.f32 %v3162, 0.5
    %v3164 = vtanh.pop %v3154
    %v3165 = vmul.f32 %v3155, 0.5
    %v3166 = vtanh.pop %v3165
    %v3167 = vmul.f32 %v3166, 0.5
    %v3168 = vadd.f32 %v3167, 0.5
    %v3169 = vmul.f32 %v3163, %v2903
    %v3170 = vmul.f32 %v3159, %v3164
    %v3171 = vadd.f32 %v3169, %v3170
    %v3172 = vtanh.pop %v3171
    %v3173 = vmul.f32 %v3168, %v3172
    %s3174 = scalar_lea.vmem [#allocation3], 32
    %v3175 = vld [vmem:[%s3174] sm:$0xff]
    %v3176 = vld [vmem:[%s3174 + $0x8] sm:$0xff]
    %v3177 = vld [vmem:[%s3174 + $0x10] sm:$0xff]
    %v3178 = vld [vmem:[%s3174 + $0x18] sm:$0xff]
    %v3179 = vadd.f32 %v3175, %v3066
    %v3180 = vadd.f32 %v3176, %v3092
    %v3181 = vadd.f32 %v3177, %v3118
    %v3182 = vadd.f32 %v3178, %v3144
    %v3183 = vmul.f32 %v3179, 0.5
    %v3184 = vtanh.pop %v3183
    %v3185 = vmul.f32 %v3184, 0.5
    %v3186 = vadd.f32 %v3185, 0.5
    %v3187 = vmul.f32 %v3180, 0.5
    %v3188 = vtanh.pop %v3187
    %v3189 = vmul.f32 %v3188, 0.5
    %v3190 = vadd.f32 %v3189, 0.5
    %v3191 = vtanh.pop %v3181
    %v3192 = vmul.f32 %v3182, 0.5
    %v3193 = vtanh.pop %v3192
    %v3194 = vmul.f32 %v3193, 0.5
    %v3195 = vadd.f32 %v3194, 0.5
    %v3196 = vmul.f32 %v3190, %v2930
    %v3197 = vmul.f32 %v3186, %v3191
    %v3198 = vadd.f32 %v3196, %v3197
    %v3199 = vtanh.pop %v3198
    %v3200 = vmul.f32 %v3195, %v3199
    %s3201 = scalar_lea.vmem [#allocation4], 48
    %3202 = vst [vmem:[%s3201] sm:$0xff] %v3173
    %s3203 = scalar_lea.vmem [#allocation5], 8
    %3204 = vst [vmem:[%s3203] sm:$0xff] %v3200
    %v3205 = vpack.c.bf16 %v3173, %v3173
    %v3206 = vpack.c.bf16 %v3200, %v3200
    %3207 = vmatpush.bf16.msra.mxu0 %v1133
    %3208 = vmatpush.bf16.msra.mxu0 %v1125
    %3209 = vmatpush.bf16.msra.mxu0 %v1117
    %3210 = vmatpush.bf16.msra.mxu0 %v1109
    %3211 = vmatpush.bf16.msra.mxu0 %v1101
    %3212 = vmatpush.bf16.msra.mxu0 %v1093
    %3213 = vmatpush.bf16.msra.mxu0 %v1085
    %3214 = vmatpush.bf16.msra.mxu0 %v1077
    %3215 = vmatmul.bf16.gmra.mxu0 %v3205
    %v3216 = vpop.f32.mrf.mxu0
    %v3217 = vadd.f32 0.0, %v3216
    %v3218 = vpop.f32.mrf.mxu0
    %3219 = vdwg.mxu0
    %3220 = vmatpush.bf16.msra.mxu0 %v1197
    %3221 = vmatpush.bf16.msra.mxu0 %v1189
    %3222 = vmatpush.bf16.msra.mxu0 %v1181
    %3223 = vmatpush.bf16.msra.mxu0 %v1173
    %3224 = vmatpush.bf16.msra.mxu0 %v1165
    %3225 = vmatpush.bf16.msra.mxu0 %v1157
    %3226 = vmatpush.bf16.msra.mxu0 %v1149
    %3227 = vmatpush.bf16.msra.mxu0 %v1141
    %3228 = vmatmul.bf16.gmra.mxu0 %v3206
    %v3229 = vpop.f32.mrf.mxu0
    %v3230 = vadd.f32 %v3217, %v3229
    %v3231 = vpop.f32.mrf.mxu0
    %3232 = vdwg.mxu0
    %3233 = vmatpush.bf16.msra.mxu0 %v1134
    %3234 = vmatpush.bf16.msra.mxu0 %v1126
    %3235 = vmatpush.bf16.msra.mxu0 %v1118
    %3236 = vmatpush.bf16.msra.mxu0 %v1110
    %3237 = vmatpush.bf16.msra.mxu0 %v1102
    %3238 = vmatpush.bf16.msra.mxu0 %v1094
    %3239 = vmatpush.bf16.msra.mxu0 %v1086
    %3240 = vmatpush.bf16.msra.mxu0 %v1078
    %3241 = vmatmul.bf16.gmra.mxu0 %v3205
    %v3242 = vpop.f32.mrf.mxu0
    %v3243 = vadd.f32 0.0, %v3242
    %v3244 = vpop.f32.mrf.mxu0
    %3245 = vdwg.mxu0
    %3246 = vmatpush.bf16.msra.mxu0 %v1198
    %3247 = vmatpush.bf16.msra.mxu0 %v1190
    %3248 = vmatpush.bf16.msra.mxu0 %v1182
    %3249 = vmatpush.bf16.msra.mxu0 %v1174
    %3250 = vmatpush.bf16.msra.mxu0 %v1166
    %3251 = vmatpush.bf16.msra.mxu0 %v1158
    %3252 = vmatpush.bf16.msra.mxu0 %v1150
    %3253 = vmatpush.bf16.msra.mxu0 %v1142
    %3254 = vmatmul.bf16.gmra.mxu0 %v3206
    %v3255 = vpop.f32.mrf.mxu0
    %v3256 = vadd.f32 %v3243, %v3255
    %v3257 = vpop.f32.mrf.mxu0
    %3258 = vdwg.mxu0
    %3259 = vmatpush.bf16.msra.mxu0 %v1135
    %3260 = vmatpush.bf16.msra.mxu0 %v1127
    %3261 = vmatpush.bf16.msra.mxu0 %v1119
    %3262 = vmatpush.bf16.msra.mxu0 %v1111
    %3263 = vmatpush.bf16.msra.mxu0 %v1103
    %3264 = vmatpush.bf16.msra.mxu0 %v1095
    %3265 = vmatpush.bf16.msra.mxu0 %v1087
    %3266 = vmatpush.bf16.msra.mxu0 %v1079
    %3267 = vmatmul.bf16.gmra.mxu0 %v3205
    %v3268 = vpop.f32.mrf.mxu0
    %v3269 = vadd.f32 0.0, %v3268
    %v3270 = vpop.f32.mrf.mxu0
    %3271 = vdwg.mxu0
    %3272 = vmatpush.bf16.msra.mxu0 %v1199
    %3273 = vmatpush.bf16.msra.mxu0 %v1191
    %3274 = vmatpush.bf16.msra.mxu0 %v1183
    %3275 = vmatpush.bf16.msra.mxu0 %v1175
    %3276 = vmatpush.bf16.msra.mxu0 %v1167
    %3277 = vmatpush.bf16.msra.mxu0 %v1159
    %3278 = vmatpush.bf16.msra.mxu0 %v1151
    %3279 = vmatpush.bf16.msra.mxu0 %v1143
    %3280 = vmatmul.bf16.gmra.mxu0 %v3206
    %v3281 = vpop.f32.mrf.mxu0
    %v3282 = vadd.f32 %v3269, %v3281
    %v3283 = vpop.f32.mrf.mxu0
    %3284 = vdwg.mxu0
    %3285 = vmatpush.bf16.msra.mxu0 %v1136
    %3286 = vmatpush.bf16.msra.mxu0 %v1128
    %3287 = vmatpush.bf16.msra.mxu0 %v1120
    %3288 = vmatpush.bf16.msra.mxu0 %v1112
    %3289 = vmatpush.bf16.msra.mxu0 %v1104
    %3290 = vmatpush.bf16.msra.mxu0 %v1096
    %3291 = vmatpush.bf16.msra.mxu0 %v1088
    %3292 = vmatpush.bf16.msra.mxu0 %v1080
    %3293 = vmatmul.bf16.gmra.mxu0 %v3205
    %v3294 = vpop.f32.mrf.mxu0
    %v3295 = vadd.f32 0.0, %v3294
    %v3296 = vpop.f32.mrf.mxu0
    %3297 = vdwg.mxu0
    %3298 = vmatpush.bf16.msra.mxu0 %v1200
    %3299 = vmatpush.bf16.msra.mxu0 %v1192
    %3300 = vmatpush.bf16.msra.mxu0 %v1184
    %3301 = vmatpush.bf16.msra.mxu0 %v1176
    %3302 = vmatpush.bf16.msra.mxu0 %v1168
    %3303 = vmatpush.bf16.msra.mxu0 %v1160
    %3304 = vmatpush.bf16.msra.mxu0 %v1152
    %3305 = vmatpush.bf16.msra.mxu0 %v1144
    %3306 = vmatmul.bf16.gmra.mxu0 %v3206
    %v3307 = vpop.f32.mrf.mxu0
    %v3308 = vadd.f32 %v3295, %v3307
    %v3309 = vpop.f32.mrf.mxu0
    %3310 = vdwg.mxu0
    %3311 = vmatpush.bf16.msra.mxu0 %v1137
    %3312 = vmatpush.bf16.msra.mxu0 %v1129
    %3313 = vmatpush.bf16.msra.mxu0 %v1121
    %3314 = vmatpush.bf16.msra.mxu0 %v1113
    %3315 = vmatpush.bf16.msra.mxu0 %v1105
    %3316 = vmatpush.bf16.msra.mxu0 %v1097
    %3317 = vmatpush.bf16.msra.mxu0 %v1089
    %3318 = vmatpush.bf16.msra.mxu0 %v1081
    %3319 = vmatmul.bf16.gmra.mxu0 %v3205
    %v3320 = vpop.f32.mrf.mxu0
    %v3321 = vadd.f32 0.0, %v3320
    %v3322 = vpop.f32.mrf.mxu0
    %3323 = vdwg.mxu0
    %3324 = vmatpush.bf16.msra.mxu0 %v1201
    %3325 = vmatpush.bf16.msra.mxu0 %v1193
    %3326 = vmatpush.bf16.msra.mxu0 %v1185
    %3327 = vmatpush.bf16.msra.mxu0 %v1177
    %3328 = vmatpush.bf16.msra.mxu0 %v1169
    %3329 = vmatpush.bf16.msra.mxu0 %v1161
    %3330 = vmatpush.bf16.msra.mxu0 %v1153
    %3331 = vmatpush.bf16.msra.mxu0 %v1145
    %3332 = vmatmul.bf16.gmra.mxu0 %v3206
    %v3333 = vpop.f32.mrf.mxu0
    %v3334 = vadd.f32 %v3321, %v3333
    %v3335 = vpop.f32.mrf.mxu0
    %3336 = vdwg.mxu0
    %3337 = vmatpush.bf16.msra.mxu0 %v1138
    %3338 = vmatpush.bf16.msra.mxu0 %v1130
    %3339 = vmatpush.bf16.msra.mxu0 %v1122
    %3340 = vmatpush.bf16.msra.mxu0 %v1114
    %3341 = vmatpush.bf16.msra.mxu0 %v1106
    %3342 = vmatpush.bf16.msra.mxu0 %v1098
    %3343 = vmatpush.bf16.msra.mxu0 %v1090
    %3344 = vmatpush.bf16.msra.mxu0 %v1082
    %3345 = vmatmul.bf16.gmra.mxu0 %v3205
    %v3346 = vpop.f32.mrf.mxu0
    %v3347 = vadd.f32 0.0, %v3346
    %v3348 = vpop.f32.mrf.mxu0
    %3349 = vdwg.mxu0
    %3350 = vmatpush.bf16.msra.mxu0 %v1202
    %3351 = vmatpush.bf16.msra.mxu0 %v1194
    %3352 = vmatpush.bf16.msra.mxu0 %v1186
    %3353 = vmatpush.bf16.msra.mxu0 %v1178
    %3354 = vmatpush.bf16.msra.mxu0 %v1170
    %3355 = vmatpush.bf16.msra.mxu0 %v1162
    %3356 = vmatpush.bf16.msra.mxu0 %v1154
    %3357 = vmatpush.bf16.msra.mxu0 %v1146
    %3358 = vmatmul.bf16.gmra.mxu0 %v3206
    %v3359 = vpop.f32.mrf.mxu0
    %v3360 = vadd.f32 %v3347, %v3359
    %v3361 = vpop.f32.mrf.mxu0
    %3362 = vdwg.mxu0
    %3363 = vmatpush.bf16.msra.mxu0 %v1139
    %3364 = vmatpush.bf16.msra.mxu0 %v1131
    %3365 = vmatpush.bf16.msra.mxu0 %v1123
    %3366 = vmatpush.bf16.msra.mxu0 %v1115
    %3367 = vmatpush.bf16.msra.mxu0 %v1107
    %3368 = vmatpush.bf16.msra.mxu0 %v1099
    %3369 = vmatpush.bf16.msra.mxu0 %v1091
    %3370 = vmatpush.bf16.msra.mxu0 %v1083
    %3371 = vmatmul.bf16.gmra.mxu0 %v3205
    %v3372 = vpop.f32.mrf.mxu0
    %v3373 = vadd.f32 0.0, %v3372
    %v3374 = vpop.f32.mrf.mxu0
    %3375 = vdwg.mxu0
    %3376 = vmatpush.bf16.msra.mxu0 %v1203
    %3377 = vmatpush.bf16.msra.mxu0 %v1195
    %3378 = vmatpush.bf16.msra.mxu0 %v1187
    %3379 = vmatpush.bf16.msra.mxu0 %v1179
    %3380 = vmatpush.bf16.msra.mxu0 %v1171
    %3381 = vmatpush.bf16.msra.mxu0 %v1163
    %3382 = vmatpush.bf16.msra.mxu0 %v1155
    %3383 = vmatpush.bf16.msra.mxu0 %v1147
    %3384 = vmatmul.bf16.gmra.mxu0 %v3206
    %v3385 = vpop.f32.mrf.mxu0
    %v3386 = vadd.f32 %v3373, %v3385
    %v3387 = vpop.f32.mrf.mxu0
    %3388 = vdwg.mxu0
    %3389 = vmatpush.bf16.msra.mxu0 %v1140
    %3390 = vmatpush.bf16.msra.mxu0 %v1132
    %3391 = vmatpush.bf16.msra.mxu0 %v1124
    %3392 = vmatpush.bf16.msra.mxu0 %v1116
    %3393 = vmatpush.bf16.msra.mxu0 %v1108
    %3394 = vmatpush.bf16.msra.mxu0 %v1100
    %3395 = vmatpush.bf16.msra.mxu0 %v1092
    %3396 = vmatpush.bf16.msra.mxu0 %v1084
    %3397 = vmatmul.bf16.gmra.mxu0 %v3205
    %v3398 = vpop.f32.mrf.mxu0
    %v3399 = vadd.f32 0.0, %v3398
    %v3400 = vpop.f32.mrf.mxu0
    %3401 = vdwg.mxu0
    %3402 = vmatpush.bf16.msra.mxu0 %v1204
    %3403 = vmatpush.bf16.msra.mxu0 %v1196
    %3404 = vmatpush.bf16.msra.mxu0 %v1188
    %3405 = vmatpush.bf16.msra.mxu0 %v1180
    %3406 = vmatpush.bf16.msra.mxu0 %v1172
    %3407 = vmatpush.bf16.msra.mxu0 %v1164
    %3408 = vmatpush.bf16.msra.mxu0 %v1156
    %3409 = vmatpush.bf16.msra.mxu0 %v1148
    %3410 = vmatmul.bf16.gmra.mxu0 %v3206
    %v3411 = vpop.f32.mrf.mxu0
    %v3412 = vadd.f32 %v3399, %v3411
    %v3413 = vpop.f32.mrf.mxu0
    %3414 = vdwg.mxu0
    %s3415 = scalar_lea.vmem [#allocation2], 224
    %v3416 = vld [vmem:[%s3415] sm:$0xff]
    %v3417 = vld [vmem:[%s3415 + $0x8] sm:$0xff]
    %v3418 = vld [vmem:[%s3415 + $0x10] sm:$0xff]
    %v3419 = vld [vmem:[%s3415 + $0x18] sm:$0xff]
    %v3420 = vadd.f32 %v3416, %v3230
    %v3421 = vadd.f32 %v3417, %v3256
    %v3422 = vadd.f32 %v3418, %v3282
    %v3423 = vadd.f32 %v3419, %v3308
    %v3424 = vmul.f32 %v3420, 0.5
    %v3425 = vtanh.pop %v3424
    %v3426 = vmul.f32 %v3425, 0.5
    %v3427 = vadd.f32 %v3426, 0.5
    %v3428 = vmul.f32 %v3421, 0.5
    %v3429 = vtanh.pop %v3428
    %v3430 = vmul.f32 %v3429, 0.5
    %v3431 = vadd.f32 %v3430, 0.5
    %v3432 = vtanh.pop %v3422
    %v3433 = vmul.f32 %v3423, 0.5
    %v3434 = vtanh.pop %v3433
    %v3435 = vmul.f32 %v3434, 0.5
    %v3436 = vadd.f32 %v3435, 0.5
    %v3437 = vmul.f32 %v3431, %v3171
    %v3438 = vmul.f32 %v3427, %v3432
    %v3439 = vadd.f32 %v3437, %v3438
    %v3440 = vtanh.pop %v3439
    %v3441 = vmul.f32 %v3436, %v3440
    %v3442 = vld [vmem:[#allocation3] sm:$0xff]
    %v3443 = vld [vmem:[#allocation3 + $0x8] sm:$0xff]
    %v3444 = vld [vmem:[#allocation3 + $0x10] sm:$0xff]
    %v3445 = vld [vmem:[#allocation3 + $0x18] sm:$0xff]
    %v3446 = vadd.f32 %v3442, %v3334
    %v3447 = vadd.f32 %v3443, %v3360
    %v3448 = vadd.f32 %v3444, %v3386
    %v3449 = vadd.f32 %v3445, %v3412
    %v3450 = vmul.f32 %v3446, 0.5
    %v3451 = vtanh.pop %v3450
    %v3452 = vmul.f32 %v3451, 0.5
    %v3453 = vadd.f32 %v3452, 0.5
    %v3454 = vmul.f32 %v3447, 0.5
    %v3455 = vtanh.pop %v3454
    %v3456 = vmul.f32 %v3455, 0.5
    %v3457 = vadd.f32 %v3456, 0.5
    %v3458 = vtanh.pop %v3448
    %v3459 = vmul.f32 %v3449, 0.5
    %v3460 = vtanh.pop %v3459
    %v3461 = vmul.f32 %v3460, 0.5
    %v3462 = vadd.f32 %v3461, 0.5
    %v3463 = vmul.f32 %v3457, %v3198
    %v3464 = vmul.f32 %v3453, %v3458
    %v3465 = vadd.f32 %v3463, %v3464
    %v3466 = vtanh.pop %v3465
    %v3467 = vmul.f32 %v3462, %v3466
    %s3468 = scalar_lea.vmem [#allocation4], 56
    %3469 = vst [vmem:[%s3468] sm:$0xff] %v3441
    %3470 = vst [vmem:[#allocation5] sm:$0xff] %v3467
    %v3471 = vld [vmem:[#allocation4] sm:$0xff]
    %v3472 = vld [vmem:[#allocation4 + $0x8] sm:$0xff]
    %v3473 = vld [vmem:[#allocation4 + $0x10] sm:$0xff]
    %v3474 = vld [vmem:[#allocation4 + $0x18] sm:$0xff]
    %v3475 = vld [vmem:[#allocation4 + $0x20] sm:$0xff]
    %v3476 = vld [vmem:[#allocation4 + $0x28] sm:$0xff]
    %v3477 = vld [vmem:[#allocation4 + $0x30] sm:$0xff]
    %v3478 = vld [vmem:[#allocation4 + $0x38] sm:$0xff]
    %v3479 = vpack.c.bf16 %v3472, %v3471
    %v3480 = vpack.c.bf16 %v3474, %v3473
    %v3481 = vpack.c.bf16 %v3476, %v3475
    %v3482 = vpack.c.bf16 %v3478, %v3477
    %v3483 = vld [vmem:[#allocation5] sm:$0xff]
    %v3484 = vld [vmem:[#allocation5 + $0x8] sm:$0xff]
    %v3485 = vld [vmem:[#allocation5 + $0x10] sm:$0xff]
    %v3486 = vld [vmem:[#allocation5 + $0x18] sm:$0xff]
    %v3487 = vld [vmem:[#allocation5 + $0x20] sm:$0xff]
    %v3488 = vld [vmem:[#allocation5 + $0x28] sm:$0xff]
    %v3489 = vld [vmem:[#allocation5 + $0x30] sm:$0xff]
    %v3490 = vld [vmem:[#allocation5 + $0x38] sm:$0xff]
    %v3491 = vpack.c.bf16 %v3484, %v3483
    %v3492 = vpack.c.bf16 %v3486, %v3485
    %v3493 = vpack.c.bf16 %v3488, %v3487
    %v3494 = vpack.c.bf16 %v3490, %v3489
    %v3495 = vld [vmem:[#allocation17] sm:$0xf]
    %v3496 = vld [vmem:[#allocation17 + $0x4] sm:$0xf]
    %v3497 = vld [vmem:[#allocation17 + $0x8] sm:$0xf]
    %v3498 = vld [vmem:[#allocation17 + $0xc] sm:$0xf]
    %v3499 = vld [vmem:[#allocation17 + $0x10] sm:$0xf]
    %v3500 = vld [vmem:[#allocation17 + $0x14] sm:$0xf]
    %v3501 = vld [vmem:[#allocation17 + $0x18] sm:$0xf]
    %v3502 = vld [vmem:[#allocation17 + $0x1c] sm:$0xf]
    %v3503 = vld [vmem:[#allocation17 + $0x20] sm:$0xf]
    %v3504 = vld [vmem:[#allocation17 + $0x24] sm:$0xf]
    %v3505 = vld [vmem:[#allocation17 + $0x28] sm:$0xf]
    %v3506 = vld [vmem:[#allocation17 + $0x2c] sm:$0xf]
    %v3507 = vld [vmem:[#allocation17 + $0x30] sm:$0xf]
    %v3508 = vld [vmem:[#allocation17 + $0x34] sm:$0xf]
    %v3509 = vld [vmem:[#allocation17 + $0x38] sm:$0xf]
    %v3510 = vld [vmem:[#allocation17 + $0x3c] sm:$0xf]
    %v3511 = vld [vmem:[#allocation18] sm:$0xf]
    %v3512 = vld [vmem:[#allocation18 + $0x4] sm:$0xf]
    %v3513 = vld [vmem:[#allocation18 + $0x8] sm:$0xf]
    %v3514 = vld [vmem:[#allocation18 + $0xc] sm:$0xf]
    %v3515 = vld [vmem:[#allocation18 + $0x10] sm:$0xf]
    %v3516 = vld [vmem:[#allocation18 + $0x14] sm:$0xf]
    %v3517 = vld [vmem:[#allocation18 + $0x18] sm:$0xf]
    %v3518 = vld [vmem:[#allocation18 + $0x1c] sm:$0xf]
    %v3519 = vld [vmem:[#allocation18 + $0x20] sm:$0xf]
    %v3520 = vld [vmem:[#allocation18 + $0x24] sm:$0xf]
    %v3521 = vld [vmem:[#allocation18 + $0x28] sm:$0xf]
    %v3522 = vld [vmem:[#allocation18 + $0x2c] sm:$0xf]
    %v3523 = vld [vmem:[#allocation18 + $0x30] sm:$0xf]
    %v3524 = vld [vmem:[#allocation18 + $0x34] sm:$0xf]
    %v3525 = vld [vmem:[#allocation18 + $0x38] sm:$0xf]
    %v3526 = vld [vmem:[#allocation18 + $0x3c] sm:$0xf]
    %v3543 = vunpack.c.l.b16 %v3511
    %v3544 = vunpack.c.l.b16 %v3512
    %v3545 = vunpack.c.l.b16 %v3513
    %v3546 = vunpack.c.l.b16 %v3514
    %v3547 = vunpack.c.l.b16 %v3515
    %v3548 = vunpack.c.l.b16 %v3516
    %v3549 = vunpack.c.l.b16 %v3517
    %v3550 = vunpack.c.l.b16 %v3518
    %v3551 = vunpack.c.l.b16 %v3519
    %v3552 = vunpack.c.l.b16 %v3520
    %v3553 = vunpack.c.l.b16 %v3521
    %v3554 = vunpack.c.l.b16 %v3522
    %v3555 = vunpack.c.l.b16 %v3523
    %v3556 = vunpack.c.l.b16 %v3524
    %v3557 = vunpack.c.l.b16 %v3525
    %v3558 = vunpack.c.l.b16 %v3526
    %v3559 = vpack.c.b16 %v3544, %v3543
    %v3560 = vpack.c.b16 %v3546, %v3545
    %v3561 = vpack.c.b16 %v3548, %v3547
    %v3562 = vpack.c.b16 %v3550, %v3549
    %v3563 = vpack.c.b16 %v3552, %v3551
    %v3564 = vpack.c.b16 %v3554, %v3553
    %v3565 = vpack.c.b16 %v3556, %v3555
    %v3566 = vpack.c.b16 %v3558, %v3557
    %3575 = vmatpush.bf16.msra.mxu0 %v3566
    %3576 = vmatpush.bf16.msra.mxu0 %v3565
    %3577 = vmatpush.bf16.msra.mxu0 %v3564
    %3578 = vmatpush.bf16.msra.mxu0 %v3563
    %3579 = vmatpush.bf16.msra.mxu0 %v3562
    %3580 = vmatpush.bf16.msra.mxu0 %v3561
    %3581 = vmatpush.bf16.msra.mxu0 %v3560
    %3582 = vmatpush.bf16.msra.mxu0 %v3559
    %3583 = vmatmul.bf16.gmra.mxu0 %v3491
    %v3584 = vpop.f32.mrf.mxu0
    %v3585 = vadd.f32 0.0, %v3584
    %v3586 = vpop.f32.mrf.mxu0
    %v3587 = vadd.f32 0.0, %v3586
    %3588 = vmatmul.bf16.gmra.mxu0 %v3492
    %v3589 = vpop.f32.mrf.mxu0
    %v3590 = vadd.f32 0.0, %v3589
    %v3591 = vpop.f32.mrf.mxu0
    %v3592 = vadd.f32 0.0, %v3591
    %3593 = vmatmul.bf16.gmra.mxu0 %v3493
    %v3594 = vpop.f32.mrf.mxu0
    %v3595 = vadd.f32 0.0, %v3594
    %v3596 = vpop.f32.mrf.mxu0
    %v3597 = vadd.f32 0.0, %v3596
    %3598 = vmatmul.bf16.gmra.mxu0 %v3494
    %v3599 = vpop.f32.mrf.mxu0
    %v3600 = vadd.f32 0.0, %v3599
    %v3601 = vpop.f32.mrf.mxu0
    %v3602 = vadd.f32 0.0, %v3601
    %3603 = vdwg.mxu0
    %v3620 = vunpack.c.l.b16 %v3495
    %v3621 = vunpack.c.l.b16 %v3496
    %v3622 = vunpack.c.l.b16 %v3497
    %v3623 = vunpack.c.l.b16 %v3498
    %v3624 = vunpack.c.l.b16 %v3499
    %v3625 = vunpack.c.l.b16 %v3500
    %v3626 = vunpack.c.l.b16 %v3501
    %v3627 = vunpack.c.l.b16 %v3502
    %v3628 = vunpack.c.l.b16 %v3503
    %v3629 = vunpack.c.l.b16 %v3504
    %v3630 = vunpack.c.l.b16 %v3505
    %v3631 = vunpack.c.l.b16 %v3506
    %v3632 = vunpack.c.l.b16 %v3507
    %v3633 = vunpack.c.l.b16 %v3508
    %v3634 = vunpack.c.l.b16 %v3509
    %v3635 = vunpack.c.l.b16 %v3510
    %v3636 = vpack.c.b16 %v3621, %v3620
    %v3637 = vpack.c.b16 %v3623, %v3622
    %v3638 = vpack.c.b16 %v3625, %v3624
    %v3639 = vpack.c.b16 %v3627, %v3626
    %v3640 = vpack.c.b16 %v3629, %v3628
    %v3641 = vpack.c.b16 %v3631, %v3630
    %v3642 = vpack.c.b16 %v3633, %v3632
    %v3643 = vpack.c.b16 %v3635, %v3634
    %3652 = vmatpush.bf16.msra.mxu0 %v3643
    %3653 = vmatpush.bf16.msra.mxu0 %v3642
    %3654 = vmatpush.bf16.msra.mxu0 %v3641
    %3655 = vmatpush.bf16.msra.mxu0 %v3640
    %3656 = vmatpush.bf16.msra.mxu0 %v3639
    %3657 = vmatpush.bf16.msra.mxu0 %v3638
    %3658 = vmatpush.bf16.msra.mxu0 %v3637
    %3659 = vmatpush.bf16.msra.mxu0 %v3636
    %3660 = vmatmul.bf16.gmra.mxu0 %v3479
    %v3661 = vpop.f32.mrf.mxu0
    %v3662 = vadd.f32 %v3585, %v3661
    %v3663 = vpop.f32.mrf.mxu0
    %v3664 = vadd.f32 %v3587, %v3663
    %3665 = vmatmul.bf16.gmra.mxu0 %v3480
    %v3666 = vpop.f32.mrf.mxu0
    %v3667 = vadd.f32 %v3590, %v3666
    %v3668 = vpop.f32.mrf.mxu0
    %v3669 = vadd.f32 %v3592, %v3668
    %3670 = vmatmul.bf16.gmra.mxu0 %v3481
    %v3671 = vpop.f32.mrf.mxu0
    %v3672 = vadd.f32 %v3595, %v3671
    %v3673 = vpop.f32.mrf.mxu0
    %v3674 = vadd.f32 %v3597, %v3673
    %3675 = vmatmul.bf16.gmra.mxu0 %v3482
    %v3676 = vpop.f32.mrf.mxu0
    %v3677 = vadd.f32 %v3600, %v3676
    %v3678 = vpop.f32.mrf.mxu0
    %v3679 = vadd.f32 %v3602, %v3678
    %3680 = vdwg.mxu0
    %v3681 = vld [vmem:[%s8] sm:$0x1]
    %v3683 = vperm.slane %v3681, 0
    %v3685 = vadd.f32 %v3662, %v3683
    %v3686 = vadd.f32 %v3664, %v3683
    %v3687 = vadd.f32 %v3667, %v3683
    %v3688 = vadd.f32 %v3669, %v3683
    %v3689 = vadd.f32 %v3672, %v3683
    %v3690 = vadd.f32 %v3674, %v3683
    %v3691 = vadd.f32 %v3677, %v3683
    %v3692 = vadd.f32 %v3679, %v3683
    %v3693 = vmax.f32 %v3685, 0.0
    %v3694 = vmax.f32 %v3686, 0.0
    %v3695 = vmax.f32 %v3687, 0.0
    %v3696 = vmax.f32 %v3688, 0.0
    %v3697 = vmax.f32 %v3689, 0.0
    %v3698 = vmax.f32 %v3690, 0.0
    %v3699 = vmax.f32 %v3691, 0.0
    %v3700 = vmax.f32 %v3692, 0.0
    %v3701 = vpack.c.bf16 %v3694, %v3693
    %v3702 = vpack.c.bf16 %v3696, %v3695
    %v3703 = vpack.c.bf16 %v3698, %v3697
    %v3704 = vpack.c.bf16 %v3700, %v3699
    %v3705 = vld [vmem:[#allocation20] sm:$0xf]
    %v3706 = vld [vmem:[#allocation20 + $0x4] sm:$0xf]
    %v3707 = vld [vmem:[#allocation20 + $0x8] sm:$0xf]
    %v3708 = vld [vmem:[#allocation20 + $0xc] sm:$0xf]
    %v3709 = vld [vmem:[#allocation20 + $0x10] sm:$0xf]
    %v3710 = vld [vmem:[#allocation20 + $0x14] sm:$0xf]
    %v3711 = vld [vmem:[#allocation20 + $0x18] sm:$0xf]
    %v3712 = vld [vmem:[#allocation20 + $0x1c] sm:$0xf]
    %v3713 = vld [vmem:[#allocation20 + $0x20] sm:$0xf]
    %v3714 = vld [vmem:[#allocation20 + $0x24] sm:$0xf]
    %v3715 = vld [vmem:[#allocation20 + $0x28] sm:$0xf]
    %v3716 = vld [vmem:[#allocation20 + $0x2c] sm:$0xf]
    %v3717 = vld [vmem:[#allocation20 + $0x30] sm:$0xf]
    %v3718 = vld [vmem:[#allocation20 + $0x34] sm:$0xf]
    %v3719 = vld [vmem:[#allocation20 + $0x38] sm:$0xf]
    %v3720 = vld [vmem:[#allocation20 + $0x3c] sm:$0xf]
    %v3721 = vld [vmem:[%s10] sm:$0x1]
    %v3723 = vperm.slane %v3721, 0
    %v3741 = vunpack.c.l.b16 %v3705
    %v3742 = vunpack.c.l.b16 %v3706
    %v3743 = vunpack.c.l.b16 %v3707
    %v3744 = vunpack.c.l.b16 %v3708
    %v3745 = vunpack.c.l.b16 %v3709
    %v3746 = vunpack.c.l.b16 %v3710
    %v3747 = vunpack.c.l.b16 %v3711
    %v3748 = vunpack.c.l.b16 %v3712
    %v3749 = vunpack.c.l.b16 %v3713
    %v3750 = vunpack.c.l.b16 %v3714
    %v3751 = vunpack.c.l.b16 %v3715
    %v3752 = vunpack.c.l.b16 %v3716
    %v3753 = vunpack.c.l.b16 %v3717
    %v3754 = vunpack.c.l.b16 %v3718
    %v3755 = vunpack.c.l.b16 %v3719
    %v3756 = vunpack.c.l.b16 %v3720
    %v3757 = vpack.c.b16 %v3742, %v3741
    %v3758 = vpack.c.b16 %v3744, %v3743
    %v3759 = vpack.c.b16 %v3746, %v3745
    %v3760 = vpack.c.b16 %v3748, %v3747
    %v3761 = vpack.c.b16 %v3750, %v3749
    %v3762 = vpack.c.b16 %v3752, %v3751
    %v3763 = vpack.c.b16 %v3754, %v3753
    %v3764 = vpack.c.b16 %v3756, %v3755
    %3773 = vmatpush.bf16.msra.mxu0 %v3764
    %3774 = vmatpush.bf16.msra.mxu0 %v3763
    %3775 = vmatpush.bf16.msra.mxu0 %v3762
    %3776 = vmatpush.bf16.msra.mxu0 %v3761
    %3777 = vmatpush.bf16.msra.mxu0 %v3760
    %3778 = vmatpush.bf16.msra.mxu0 %v3759
    %3779 = vmatpush.bf16.msra.mxu0 %v3758
    %3780 = vmatpush.bf16.msra.mxu0 %v3757
    %3781 = vmatmul.bf16.gmra.mxu0 %v3701
    %v3782 = vpop.f32.mrf.mxu0
    %v3783 = vadd.f32 %v3723, %v3782
    %v3784 = vpop.f32.mrf.mxu0
    %v3785 = vadd.f32 %v3723, %v3784
    %3786 = vmatmul.bf16.gmra.mxu0 %v3702
    %v3787 = vpop.f32.mrf.mxu0
    %v3788 = vadd.f32 %v3723, %v3787
    %v3789 = vpop.f32.mrf.mxu0
    %v3790 = vadd.f32 %v3723, %v3789
    %3791 = vmatmul.bf16.gmra.mxu0 %v3703
    %v3792 = vpop.f32.mrf.mxu0
    %v3793 = vadd.f32 %v3723, %v3792
    %v3794 = vpop.f32.mrf.mxu0
    %v3795 = vadd.f32 %v3723, %v3794
    %3796 = vmatmul.bf16.gmra.mxu0 %v3704
    %v3797 = vpop.f32.mrf.mxu0
    %v3798 = vadd.f32 %v3723, %v3797
    %v3799 = vpop.f32.mrf.mxu0
    %v3800 = vadd.f32 %v3723, %v3799
    %3801 = vdwg.mxu0
    %3802 = vst [vmem:[#allocation21] sm:$0xff] %v3783
    %3803 = vst [vmem:[#allocation21 + $0x8] sm:$0xff] %v3785
    %3804 = vst [vmem:[#allocation21 + $0x10] sm:$0xff] %v3788
    %3805 = vst [vmem:[#allocation21 + $0x18] sm:$0xff] %v3790
    %3806 = vst [vmem:[#allocation21 + $0x20] sm:$0xff] %v3793
    %3807 = vst [vmem:[#allocation21 + $0x28] sm:$0xff] %v3795
    %3808 = vst [vmem:[#allocation21 + $0x30] sm:$0xff] %v3798
    %3809 = vst [vmem:[#allocation21 + $0x38] sm:$0xff] %v3800
    // Predicated region
    $region82: #{tpu_custom_call.1} parent=1 // pred_check
      _
    $region83: #{tpu_custom_call.1} parent=1 // pred_check_branch
      %3811 = sbr.rel (0) target = $region85
    $region84: #{tpu_custom_call.1} parent=1 // pred_region
      %3813 = vsyncadd [#allocation8], 0
      %s3815 = sshll.u32 [#allocation21], 4
      %s3816 = int_to_ptr.vmem [resolvable:$true] %s3815
      %s3817 = sshll.u32 %s11, 4
      %s3818 = int_to_ptr.hbm [resolvable:$true] %s3817
      %3820 = dma.vmem_to_hbm [thread:$0]  %s3816, 1024, %s3818, [#allocation8]
    $region85: #{tpu_custom_call.1} parent=1 // pred_fallthru
      _
    // Predicated region
    $region86: #{tpu_custom_call.1} parent=1 // pred_check
      _
    $region87: #{tpu_custom_call.1} parent=1 // pred_check_branch
      %3822 = sbr.rel (0) target = $region89
    $region88: #{tpu_custom_call.1} parent=1 // pred_region
      %3824 = dma.done [#allocation8], 1024
    $region89: #{tpu_custom_call.1} parent=1 // pred_fallthru
      _
    %3825 = vsyncpa [#allocation7], 1
    %3826 = vsyncpa [#allocation10], 1
    %3827 = vsyncpa [#allocation13], 1
    %3828 = vsyncpa [#allocation16], 1
    %3829 = vsyncpa [#allocation19], 1
    %3830 = vsyncpa [#allocation8], 1

</llo_original>
